<compile_context>
chip_gen: v7x
topology: tpu7x:2x2x1
jax: 0.10.0
libtpu: 0.0.40
codegen_flags: <defaults>
</compile_context>

<pallas_src>
import functools

import jax
import jax.numpy as jnp
from jax.experimental import pallas as pl
from jax.experimental.pallas import tpu as pltpu

LANE = 128
SUBLANE_BF16 = 16   # bf16 native sublane tile; keep batch tiles a multiple of it


def _round_up(n, m):
    return ((n + m - 1) // m) * m


def mlp_kernel(x_ref,
               w1_ref, b1_ref,
               w2_ref, b2_ref,
               w3_ref, b3_ref,
               w4_ref, b4_ref,
               o_ref):
    """One batch tile per grid step: four fused Linear(+ReLU) layers.

    Matmuls run on the MXU with bf16 operands / f32 accumulation; bias-add and
    ReLU stay in f32 on the VPU (right choice on all of v5e/v6e/v7x). The final
    store downcasts to bf16 so the padded output writeback — the largest HBM
    stream of this kernel — is halved.
    """
    h = x_ref[...].astype(jnp.bfloat16)

    h = jnp.dot(h, w1_ref[...], preferred_element_type=jnp.float32) + b1_ref[...]
    h = jnp.maximum(h, 0.0).astype(jnp.bfloat16)

    h = jnp.dot(h, w2_ref[...], preferred_element_type=jnp.float32) + b2_ref[...]
    h = jnp.maximum(h, 0.0).astype(jnp.bfloat16)

    h = jnp.dot(h, w3_ref[...], preferred_element_type=jnp.float32) + b3_ref[...]
    h = jnp.maximum(h, 0.0).astype(jnp.bfloat16)

    out = jnp.dot(h, w4_ref[...], preferred_element_type=jnp.float32) + b4_ref[...]
    o_ref[...] = out.astype(o_ref.dtype)   # lane-dense (tb, 128) bf16 store


def init_params(key, state_n, action_n, mid_n):
    """f32 params mirroring nn.Linear default init U(-1/sqrt(fan_in), 1/sqrt(fan_in)).

    Weights are stored as (in_features, out_features) so y = x @ W + b matches
    PyTorch's x @ W.T + b with its (out, in) storage.
    """
    dims = [(state_n, mid_n), (mid_n, mid_n), (mid_n, mid_n), (mid_n, action_n)]
    params = {}
    for i, (fan_in, fan_out) in enumerate(dims, start=1):
        key, kw, kb = jax.random.split(key, 3)
        bound = 1.0 / (fan_in ** 0.5)
        params[f"w{i}"] = jax.random.uniform(
            kw, (fan_in, fan_out), jnp.float32, -bound, bound)
        params[f"b{i}"] = jax.random.uniform(
            kb, (1, fan_out), jnp.float32, -bound, bound)
    return params


def prepare_params(params):
    """Kernel-ready params: bf16 weights, f32 biases, last layer padded to 128 lanes."""
    action_n = params["w4"].shape[1]
    n_pad = _round_up(action_n, LANE)
    pad = n_pad - action_n
    kparams = {
        "w1": params["w1"].astype(jnp.bfloat16), "b1": params["b1"].astype(jnp.float32),
        "w2": params["w2"].astype(jnp.bfloat16), "b2": params["b2"].astype(jnp.float32),
        "w3": params["w3"].astype(jnp.bfloat16), "b3": params["b3"].astype(jnp.float32),
        "w4": jnp.pad(params["w4"], ((0, 0), (0, pad))).astype(jnp.bfloat16),
        "b4": jnp.pad(params["b4"], ((0, 0), (0, pad))).astype(jnp.float32),
    }
    return kparams, action_n


def _default_num_steps(batch):
    """Two balanced 'parallel' batch tiles on dual-TensorCore chips (v7x megacore
    shards them across cores); a single grid step on single-TC chips (v5e/v6e)
    so the ~0.35 us per-grid-step overhead is paid exactly once."""
    if batch < 2 * SUBLANE_BF16:
        return 1
    try:
        kind = jax.devices()[0].device_kind.lower()
    except Exception:
        kind = ""
    return 2 if "v7" in kind else 1


@functools.partial(jax.jit, static_argnames=("action_n", "num_steps"))
def _mlp_forward_impl(x, kparams, action_n, num_steps):
    B, state_n = x.shape
    w1, b1 = kparams["w1"], kparams["b1"]
    w2, b2 = kparams["w2"], kparams["b2"]
    w3, b3 = kparams["w3"], kparams["b3"]
    w4, b4 = kparams["w4"], kparams["b4"]
    mid_n = w1.shape[1]
    n_pad = w4.shape[1]

    # One batch tile per grid step; tile rows are a multiple of 16 sublanes
    # (bf16-output friendly). num_steps==1 -> single DMA-in / compute / DMA-out;
    # num_steps==2 -> two balanced parallel steps for v7x megacore.
    b_pad = _round_up(B, SUBLANE_BF16 * num_steps)
    if b_pad != B:
        x = jnp.pad(x, ((0, b_pad - B), (0, 0)))
    tb = b_pad // num_steps

    # Weights/biases: constant (0,0) block index -> VMEM-resident across steps.
    const = lambda a: pl.BlockSpec(a.shape, lambda i: (0,) * a.ndim)

    flops = 2 * b_pad * mid_n * (state_n + 2 * mid_n + n_pad)
    bytes_accessed = (
        b_pad * state_n * 4                                              # f32 input
        + sum(int(kparams[k].size) * kparams[k].dtype.itemsize for k in kparams)
        + b_pad * n_pad * 2)                                             # bf16 output

    out = pl.pallas_call(
        mlp_kernel,
        out_shape=jax.ShapeDtypeStruct((b_pad, n_pad), jnp.bfloat16),
        grid=(num_steps,),
        in_specs=[
            pl.BlockSpec((tb, state_n), lambda i: (i, 0)),   # batch-tiled input
            const(w1), const(b1),
            const(w2), const(b2),
            const(w3), const(b3),
            const(w4), const(b4),
        ],
        out_specs=pl.BlockSpec((tb, n_pad), lambda i: (i, 0)),  # lane-dense bf16 out
        compiler_params=pltpu.CompilerParams(
            dimension_semantics=("parallel",)),   # megacore batch sharding on v7x
        cost_estimate=pl.CostEstimate(
            flops=flops, transcendentals=0, bytes_accessed=bytes_accessed),
    )(x, w1, b1, w2, b2, w3, b3, w4, b4)

    # Slice + upcast fuse inside this jit: only the (B, action_n) sub-block of
    # the padded bf16 output is read back — no full-width HBM re-read pass.
    return out[:B, :action_n].astype(jnp.float32)


def mlp_forward(x, kparams, action_n, num_steps=None):
    """x: (B, state_n) float32. Returns (B, action_n) float32 logits."""
    if num_steps is None:
        num_steps = _default_num_steps(x.shape[0])
    return _mlp_forward_impl(x, kparams, action_n, num_steps)


def mlp_reference_bf16(x, kparams, action_n):
    """JAX reference matching the kernel's bf16-operand / f32-accumulate /
    bf16-output math exactly."""
    h = x.astype(jnp.bfloat16)
    h = jnp.maximum(
        jnp.dot(h, kparams["w1"], preferred_element_type=jnp.float32) + kparams["b1"], 0.0
    ).astype(jnp.bfloat16)
    h = jnp.maximum(
        jnp.dot(h, kparams["w2"], preferred_element_type=jnp.float32) + kparams["b2"], 0.0
    ).astype(jnp.bfloat16)
    h = jnp.maximum(
        jnp.dot(h, kparams["w3"], preferred_element_type=jnp.float32) + kparams["b3"], 0.0
    ).astype(jnp.bfloat16)
    out = jnp.dot(h, kparams["w4"], preferred_element_type=jnp.float32) + kparams["b4"]
    return out[:, :action_n].astype(jnp.bfloat16).astype(jnp.float32)


def mlp_reference_f32(x, params):
    h = jnp.maximum(x @ params["w1"] + params["b1"], 0.0)
    h = jnp.maximum(h @ params["w2"] + params["b2"], 0.0)
    h = jnp.maximum(h @ params["w3"] + params["b3"], 0.0)
    return h @ params["w4"] + params["b4"]


if __name__ == "__main__":
    # LunarLander-v2: observation dim 8, action dim 4; mid_n = 128 (lane-width
    # multiple). Full rollout-sized batch so the tiled / megacore path engages.
    state_n, action_n, mid_n = 8, 4, 128
    batch = 1024

    key = jax.random.PRNGKey(0)
    key, kx = jax.random.split(key)
    x = jax.random.normal(kx, (batch, state_n), jnp.float32)
    params = init_params(key, state_n, action_n, mid_n)
    kparams, action_n = prepare_params(params)

    out = mlp_forward(x, kparams, action_n)
    out = jax.block_until_ready(out)
    assert out.shape == (batch, action_n)

    # Tight check vs. a reference using the identical mixed-precision path
    # (bf16 operands, f32 accumulate, bf16 output rounding).
    ref_bf16 = mlp_reference_bf16(x, kparams, action_n)
    assert jnp.allclose(out, ref_bf16, atol=1e-2, rtol=1e-2), "mismatch vs bf16 reference"

    # Sanity check vs. the pure-f32 PyTorch-equivalent forward (bf16 rounding tol).
    ref_f32 = mlp_reference_f32(x, params)
    assert jnp.allclose(out, ref_f32, atol=5e-2, rtol=5e-2), "mismatch vs f32 reference"

    # Ragged batch exercises the batch-padding / slice-back path.
    x_small = jax.random.normal(jax.random.PRNGKey(1), (37, state_n), jnp.float32)
    out_small = jax.block_until_ready(mlp_forward(x_small, kparams, action_n))
    assert out_small.shape == (37, action_n)
    assert jnp.allclose(out_small, mlp_reference_f32(x_small, params),
                        atol=5e-2, rtol=5e-2), "mismatch on ragged batch"

    print("KERNEL_OK")
</pallas_src>

<mosaic_0001>
module attributes {stable_mosaic.version = 11 : i64} {
  func.func @mlp_kernel(%arg0: i32, %arg1: memref<1024x8xf32, #tpu.memory_space<vmem>>, %arg2: memref<8x128xbf16, #tpu.memory_space<vmem>>, %arg3: memref<1x128xf32, #tpu.memory_space<vmem>>, %arg4: memref<128x128xbf16, #tpu.memory_space<vmem>>, %arg5: memref<1x128xf32, #tpu.memory_space<vmem>>, %arg6: memref<128x128xbf16, #tpu.memory_space<vmem>>, %arg7: memref<1x128xf32, #tpu.memory_space<vmem>>, %arg8: memref<128x128xbf16, #tpu.memory_space<vmem>>, %arg9: memref<1x128xf32, #tpu.memory_space<vmem>>, %arg10: memref<1024x128xbf16, #tpu.memory_space<vmem>>) attributes {dimension_semantics = [#tpu.dimension_semantics<parallel>], iteration_bounds = array<i64: 1>, scalar_prefetch = 0 : i64, scratch_operands = 0 : i64, tpu.core_type = #tpu.core_type<tc>, window_params = [{transform_indices = @transform_0, window_bounds = array<i64: 1024, 8>}, {pipeline_mode = #tpu.pipeline_mode<synchronous>, transform_indices = @transform_1, window_bounds = array<i64: 8, 128>}, {pipeline_mode = #tpu.pipeline_mode<synchronous>, transform_indices = @transform_2, window_bounds = array<i64: 1, 128>}, {pipeline_mode = #tpu.pipeline_mode<synchronous>, transform_indices = @transform_3, window_bounds = array<i64: 128, 128>}, {pipeline_mode = #tpu.pipeline_mode<synchronous>, transform_indices = @transform_4, window_bounds = array<i64: 1, 128>}, {pipeline_mode = #tpu.pipeline_mode<synchronous>, transform_indices = @transform_5, window_bounds = array<i64: 128, 128>}, {pipeline_mode = #tpu.pipeline_mode<synchronous>, transform_indices = @transform_6, window_bounds = array<i64: 1, 128>}, {pipeline_mode = #tpu.pipeline_mode<synchronous>, transform_indices = @transform_7, window_bounds = array<i64: 128, 128>}, {pipeline_mode = #tpu.pipeline_mode<synchronous>, transform_indices = @transform_8, window_bounds = array<i64: 1, 128>}, {transform_indices = @transform_9, window_bounds = array<i64: 1024, 128>}]} {
    %c0 = arith.constant 0 : index
    %c0_0 = arith.constant 0 : index
    %0 = vector.load %arg1[%c0, %c0_0] : memref<1024x8xf32, #tpu.memory_space<vmem>>, vector<1024x8xf32>
    %1 = arith.truncf %0 : vector<1024x8xf32> to vector<1024x8xbf16>
    %c0_1 = arith.constant 0 : index
    %c0_2 = arith.constant 0 : index
    %2 = vector.load %arg2[%c0_1, %c0_2] : memref<8x128xbf16, #tpu.memory_space<vmem>>, vector<8x128xbf16>
    %cst = arith.constant dense<0.000000e+00> : vector<1024x128xf32>
    %3 = tpu.matmul %1, %2, %cst {dimension_numbers = #tpu.dot_dimension_numbers<[1], [0], [0], [1], [0, 0, 1, 1], [], []>} : vector<1024x8xbf16>, vector<8x128xbf16>, vector<1024x128xf32> -> vector<1024x128xf32>
    %c0_3 = arith.constant 0 : index
    %c0_4 = arith.constant 0 : index
    %4 = vector.load %arg3[%c0_3, %c0_4] : memref<1x128xf32, #tpu.memory_space<vmem>>, vector<1x128xf32>
    %5 = vector.broadcast %4 : vector<1x128xf32> to vector<1024x128xf32>
    %6 = arith.addf %3, %5 : vector<1024x128xf32>
    %cst_5 = arith.constant 0.000000e+00 : f32
    %7 = vector.broadcast %cst_5 : f32 to vector<1024x128xf32>
    %8 = arith.maximumf %6, %7 : vector<1024x128xf32>
    %9 = arith.truncf %8 : vector<1024x128xf32> to vector<1024x128xbf16>
    %c0_6 = arith.constant 0 : index
    %c0_7 = arith.constant 0 : index
    %10 = vector.load %arg4[%c0_6, %c0_7] : memref<128x128xbf16, #tpu.memory_space<vmem>>, vector<128x128xbf16>
    %cst_8 = arith.constant dense<0.000000e+00> : vector<1024x128xf32>
    %11 = tpu.matmul %9, %10, %cst_8 {dimension_numbers = #tpu.dot_dimension_numbers<[1], [0], [0], [1], [0, 0, 1, 1], [], []>} : vector<1024x128xbf16>, vector<128x128xbf16>, vector<1024x128xf32> -> vector<1024x128xf32>
    %c0_9 = arith.constant 0 : index
    %c0_10 = arith.constant 0 : index
    %12 = vector.load %arg5[%c0_9, %c0_10] : memref<1x128xf32, #tpu.memory_space<vmem>>, vector<1x128xf32>
    %13 = vector.broadcast %12 : vector<1x128xf32> to vector<1024x128xf32>
    %14 = arith.addf %11, %13 : vector<1024x128xf32>
    %cst_11 = arith.constant 0.000000e+00 : f32
    %15 = vector.broadcast %cst_11 : f32 to vector<1024x128xf32>
    %16 = arith.maximumf %14, %15 : vector<1024x128xf32>
    %17 = arith.truncf %16 : vector<1024x128xf32> to vector<1024x128xbf16>
    %c0_12 = arith.constant 0 : index
    %c0_13 = arith.constant 0 : index
    %18 = vector.load %arg6[%c0_12, %c0_13] : memref<128x128xbf16, #tpu.memory_space<vmem>>, vector<128x128xbf16>
    %cst_14 = arith.constant dense<0.000000e+00> : vector<1024x128xf32>
    %19 = tpu.matmul %17, %18, %cst_14 {dimension_numbers = #tpu.dot_dimension_numbers<[1], [0], [0], [1], [0, 0, 1, 1], [], []>} : vector<1024x128xbf16>, vector<128x128xbf16>, vector<1024x128xf32> -> vector<1024x128xf32>
    %c0_15 = arith.constant 0 : index
    %c0_16 = arith.constant 0 : index
    %20 = vector.load %arg7[%c0_15, %c0_16] : memref<1x128xf32, #tpu.memory_space<vmem>>, vector<1x128xf32>
    %21 = vector.broadcast %20 : vector<1x128xf32> to vector<1024x128xf32>
    %22 = arith.addf %19, %21 : vector<1024x128xf32>
    %cst_17 = arith.constant 0.000000e+00 : f32
    %23 = vector.broadcast %cst_17 : f32 to vector<1024x128xf32>
    %24 = arith.maximumf %22, %23 : vector<1024x128xf32>
    %25 = arith.truncf %24 : vector<1024x128xf32> to vector<1024x128xbf16>
    %c0_18 = arith.constant 0 : index
    %c0_19 = arith.constant 0 : index
    %26 = vector.load %arg8[%c0_18, %c0_19] : memref<128x128xbf16, #tpu.memory_space<vmem>>, vector<128x128xbf16>
    %cst_20 = arith.constant dense<0.000000e+00> : vector<1024x128xf32>
    %27 = tpu.matmul %25, %26, %cst_20 {dimension_numbers = #tpu.dot_dimension_numbers<[1], [0], [0], [1], [0, 0, 1, 1], [], []>} : vector<1024x128xbf16>, vector<128x128xbf16>, vector<1024x128xf32> -> vector<1024x128xf32>
    %c0_21 = arith.constant 0 : index
    %c0_22 = arith.constant 0 : index
    %28 = vector.load %arg9[%c0_21, %c0_22] : memref<1x128xf32, #tpu.memory_space<vmem>>, vector<1x128xf32>
    %29 = vector.broadcast %28 : vector<1x128xf32> to vector<1024x128xf32>
    %30 = arith.addf %27, %29 : vector<1024x128xf32>
    %31 = arith.truncf %30 : vector<1024x128xf32> to vector<1024x128xbf16>
    %c0_23 = arith.constant 0 : index
    %c0_24 = arith.constant 0 : index
    %32 = vector.load %arg10[%c0_23, %c0_24] : memref<1024x128xbf16, #tpu.memory_space<vmem>>, vector<1024x128xbf16>
    tpu.vector_store %arg10[%c0_23, %c0_24], %31 {strides = array<i32>} : memref<1024x128xbf16, #tpu.memory_space<vmem>>, vector<1024x128xbf16>,
    return
  }
  func.func @transform_0(%arg0: i32) -> (i32, i32) {
    %c0_i32 = arith.constant 0 : i32
    %c0_i32_0 = arith.constant 0 : i32
    return %arg0, %c0_i32 : i32, i32
  }
  func.func @transform_1(%arg0: i32) -> (i32, i32) {
    %c0_i32 = arith.constant 0 : i32
    %c0_i32_0 = arith.constant 0 : i32
    %c0_i32_1 = arith.constant 0 : i32
    return %c0_i32, %c0_i32_0 : i32, i32
  }
  func.func @transform_2(%arg0: i32) -> (i32, i32) {
    %c0_i32 = arith.constant 0 : i32
    %c0_i32_0 = arith.constant 0 : i32
    %c0_i32_1 = arith.constant 0 : i32
    return %c0_i32, %c0_i32_0 : i32, i32
  }
  func.func @transform_3(%arg0: i32) -> (i32, i32) {
    %c0_i32 = arith.constant 0 : i32
    %c0_i32_0 = arith.constant 0 : i32
    %c0_i32_1 = arith.constant 0 : i32
    return %c0_i32, %c0_i32_0 : i32, i32
  }
  func.func @transform_4(%arg0: i32) -> (i32, i32) {
    %c0_i32 = arith.constant 0 : i32
    %c0_i32_0 = arith.constant 0 : i32
    %c0_i32_1 = arith.constant 0 : i32
    return %c0_i32, %c0_i32_0 : i32, i32
  }
  func.func @transform_5(%arg0: i32) -> (i32, i32) {
    %c0_i32 = arith.constant 0 : i32
    %c0_i32_0 = arith.constant 0 : i32
    %c0_i32_1 = arith.constant 0 : i32
    return %c0_i32, %c0_i32_0 : i32, i32
  }
  func.func @transform_6(%arg0: i32) -> (i32, i32) {
    %c0_i32 = arith.constant 0 : i32
    %c0_i32_0 = arith.constant 0 : i32
    %c0_i32_1 = arith.constant 0 : i32
    return %c0_i32, %c0_i32_0 : i32, i32
  }
  func.func @transform_7(%arg0: i32) -> (i32, i32) {
    %c0_i32 = arith.constant 0 : i32
    %c0_i32_0 = arith.constant 0 : i32
    %c0_i32_1 = arith.constant 0 : i32
    return %c0_i32, %c0_i32_0 : i32, i32
  }
  func.func @transform_8(%arg0: i32) -> (i32, i32) {
    %c0_i32 = arith.constant 0 : i32
    %c0_i32_0 = arith.constant 0 : i32
    %c0_i32_1 = arith.constant 0 : i32
    return %c0_i32, %c0_i32_0 : i32, i32
  }
  func.func @transform_9(%arg0: i32) -> (i32, i32) {
    %c0_i32 = arith.constant 0 : i32
    %c0_i32_0 = arith.constant 0 : i32
    return %arg0, %c0_i32 : i32, i32
  }
}

</mosaic_0001>

<llo_original>
// kernel: _mlp_forward_impl.1
$region0: #{_mlp_forward_impl.1}
  #allocation0 [shape = 'u32[]', space=smem, size = 0x4, offset = 0x4, fixed_abs, tag = 'smem constant byte address 0x4 - core index']
  #allocation1 [shape = 'u32[144,128]{1,0:T(1,128)}', space=vmem, size = 0x12000, scoped, tag = 'internal scratch']
  %s0 = inlined_call_operand.vmem [shape: f32[1024,8], index: 0, kind: input, shape index: {}]
  %s1 = inlined_call_operand.vmem [shape: bf16[8,128], index: 1, kind: input, shape index: {}]
  %s2 = inlined_call_operand.vmem [shape: f32[1,128], index: 2, kind: input, shape index: {}]
  %s3 = inlined_call_operand.vmem [shape: bf16[128,128], index: 3, kind: input, shape index: {}]
  %s4 = inlined_call_operand.vmem [shape: f32[1,128], index: 4, kind: input, shape index: {}]
  %s5 = inlined_call_operand.vmem [shape: bf16[128,128], index: 5, kind: input, shape index: {}]
  %s6 = inlined_call_operand.vmem [shape: f32[1,128], index: 6, kind: input, shape index: {}]
  %s7 = inlined_call_operand.vmem [shape: bf16[128,128], index: 7, kind: input, shape index: {}]
  %s8 = inlined_call_operand.vmem [shape: f32[1,128], index: 8, kind: input, shape index: {}]
  %s9 = inlined_call_operand.vmem [shape: bf16[1024,128], index: 9, kind: output, shape index: {}]
  %s10 = sld [smem:[#allocation0]]
  $region46: #{_mlp_forward_impl.1} parent=0
    _
  %s12 = ssub.s32 1, %s10
  %s13 = scalar_select 0, %s12, %s10
  // Predicated region
  $region2: #{_mlp_forward_impl.1} parent=0 // pred_check
    _
  $region3: #{_mlp_forward_impl.1} parent=0 // pred_check_branch
    %15 = sbr.rel (0) target = $region5
  $region4: #{_mlp_forward_impl.1} parent=0 // pred_region
    _
  $region5: #{_mlp_forward_impl.1} parent=0 // pred_fallthru
    _
  // Predicated region
  $region6: #{_mlp_forward_impl.1} parent=0 // pred_check
    _
  $region7: #{_mlp_forward_impl.1} parent=0 // pred_check_branch
    %17 = sbr.rel (0) target = $region9
  $region8: #{_mlp_forward_impl.1} parent=0 // pred_region
    _
  $region9: #{_mlp_forward_impl.1} parent=0 // pred_fallthru
    _
  // Predicated region
  $region10: #{_mlp_forward_impl.1} parent=0 // pred_check
    _
  $region11: #{_mlp_forward_impl.1} parent=0 // pred_check_branch
    %19 = sbr.rel (0) target = $region13
  $region12: #{_mlp_forward_impl.1} parent=0 // pred_region
    _
  $region13: #{_mlp_forward_impl.1} parent=0 // pred_fallthru
    _
  // Predicated region
  $region14: #{_mlp_forward_impl.1} parent=0 // pred_check
    _
  $region15: #{_mlp_forward_impl.1} parent=0 // pred_check_branch
    %21 = sbr.rel (0) target = $region17
  $region16: #{_mlp_forward_impl.1} parent=0 // pred_region
    _
  $region17: #{_mlp_forward_impl.1} parent=0 // pred_fallthru
    _
  // Predicated region
  $region18: #{_mlp_forward_impl.1} parent=0 // pred_check
    _
  $region19: #{_mlp_forward_impl.1} parent=0 // pred_check_branch
    %23 = sbr.rel (0) target = $region21
  $region20: #{_mlp_forward_impl.1} parent=0 // pred_region
    _
  $region21: #{_mlp_forward_impl.1} parent=0 // pred_fallthru
    _
  // Predicated region
  $region22: #{_mlp_forward_impl.1} parent=0 // pred_check
    _
  $region23: #{_mlp_forward_impl.1} parent=0 // pred_check_branch
    %25 = sbr.rel (0) target = $region25
  $region24: #{_mlp_forward_impl.1} parent=0 // pred_region
    _
  $region25: #{_mlp_forward_impl.1} parent=0 // pred_fallthru
    _
  // Predicated region
  $region26: #{_mlp_forward_impl.1} parent=0 // pred_check
    _
  $region27: #{_mlp_forward_impl.1} parent=0 // pred_check_branch
    %27 = sbr.rel (0) target = $region29
  $region28: #{_mlp_forward_impl.1} parent=0 // pred_region
    _
  $region29: #{_mlp_forward_impl.1} parent=0 // pred_fallthru
    _
  // Predicated region
  $region30: #{_mlp_forward_impl.1} parent=0 // pred_check
    _
  $region31: #{_mlp_forward_impl.1} parent=0 // pred_check_branch
    %29 = sbr.rel (0) target = $region33
  $region32: #{_mlp_forward_impl.1} parent=0 // pred_region
    _
  $region33: #{_mlp_forward_impl.1} parent=0 // pred_fallthru
    _
  // Predicated region
  $region34: #{_mlp_forward_impl.1} parent=0 // pred_check
    _
  $region35: #{_mlp_forward_impl.1} parent=0 // pred_check_branch
    %31 = sbr.rel (0) target = $region37
  $region36: #{_mlp_forward_impl.1} parent=0 // pred_region
    _
  $region37: #{_mlp_forward_impl.1} parent=0 // pred_fallthru
    _
  %v33 = vld [vmem:[%s0] sm:$0xff]
  %v34 = vld [vmem:[%s0 + $0x8] sm:$0xff]
  %v35 = vld [vmem:[%s0 + $0x10] sm:$0xff]
  %v36 = vld [vmem:[%s0 + $0x18] sm:$0xff]
  %v37 = vld [vmem:[%s0 + $0x20] sm:$0xff]
  %v38 = vld [vmem:[%s0 + $0x28] sm:$0xff]
  %v39 = vld [vmem:[%s0 + $0x30] sm:$0xff]
  %v40 = vld [vmem:[%s0 + $0x38] sm:$0xff]
  %v41 = vld [vmem:[%s0 + $0x40] sm:$0xff]
  %v42 = vld [vmem:[%s0 + $0x48] sm:$0xff]
  %v43 = vld [vmem:[%s0 + $0x50] sm:$0xff]
  %v44 = vld [vmem:[%s0 + $0x58] sm:$0xff]
  %v45 = vld [vmem:[%s0 + $0x60] sm:$0xff]
  %v46 = vld [vmem:[%s0 + $0x68] sm:$0xff]
  %v47 = vld [vmem:[%s0 + $0x70] sm:$0xff]
  %v48 = vld [vmem:[%s0 + $0x78] sm:$0xff]
  %v49 = vld [vmem:[%s0 + $0x80] sm:$0xff]
  %v50 = vld [vmem:[%s0 + $0x88] sm:$0xff]
  %v51 = vld [vmem:[%s0 + $0x90] sm:$0xff]
  %v52 = vld [vmem:[%s0 + $0x98] sm:$0xff]
  %v53 = vld [vmem:[%s0 + $0xa0] sm:$0xff]
  %v54 = vld [vmem:[%s0 + $0xa8] sm:$0xff]
  %v55 = vld [vmem:[%s0 + $0xb0] sm:$0xff]
  %v56 = vld [vmem:[%s0 + $0xb8] sm:$0xff]
  %v57 = vld [vmem:[%s0 + $0xc0] sm:$0xff]
  %v58 = vld [vmem:[%s0 + $0xc8] sm:$0xff]
  %v59 = vld [vmem:[%s0 + $0xd0] sm:$0xff]
  %v60 = vld [vmem:[%s0 + $0xd8] sm:$0xff]
  %v61 = vld [vmem:[%s0 + $0xe0] sm:$0xff]
  %v62 = vld [vmem:[%s0 + $0xe8] sm:$0xff]
  %v63 = vld [vmem:[%s0 + $0xf0] sm:$0xff]
  %v64 = vld [vmem:[%s0 + $0xf8] sm:$0xff]
  %v65 = vld [vmem:[%s0 + $0x100] sm:$0xff]
  %v66 = vld [vmem:[%s0 + $0x108] sm:$0xff]
  %v67 = vld [vmem:[%s0 + $0x110] sm:$0xff]
  %v68 = vld [vmem:[%s0 + $0x118] sm:$0xff]
  %v69 = vld [vmem:[%s0 + $0x120] sm:$0xff]
  %v70 = vld [vmem:[%s0 + $0x128] sm:$0xff]
  %v71 = vld [vmem:[%s0 + $0x130] sm:$0xff]
  %v72 = vld [vmem:[%s0 + $0x138] sm:$0xff]
  %v73 = vld [vmem:[%s0 + $0x140] sm:$0xff]
  %v74 = vld [vmem:[%s0 + $0x148] sm:$0xff]
  %v75 = vld [vmem:[%s0 + $0x150] sm:$0xff]
  %v76 = vld [vmem:[%s0 + $0x158] sm:$0xff]
  %v77 = vld [vmem:[%s0 + $0x160] sm:$0xff]
  %v78 = vld [vmem:[%s0 + $0x168] sm:$0xff]
  %v79 = vld [vmem:[%s0 + $0x170] sm:$0xff]
  %v80 = vld [vmem:[%s0 + $0x178] sm:$0xff]
  %v81 = vld [vmem:[%s0 + $0x180] sm:$0xff]
  %v82 = vld [vmem:[%s0 + $0x188] sm:$0xff]
  %v83 = vld [vmem:[%s0 + $0x190] sm:$0xff]
  %v84 = vld [vmem:[%s0 + $0x198] sm:$0xff]
  %v85 = vld [vmem:[%s0 + $0x1a0] sm:$0xff]
  %v86 = vld [vmem:[%s0 + $0x1a8] sm:$0xff]
  %v87 = vld [vmem:[%s0 + $0x1b0] sm:$0xff]
  %v88 = vld [vmem:[%s0 + $0x1b8] sm:$0xff]
  %v89 = vld [vmem:[%s0 + $0x1c0] sm:$0xff]
  %v90 = vld [vmem:[%s0 + $0x1c8] sm:$0xff]
  %v91 = vld [vmem:[%s0 + $0x1d0] sm:$0xff]
  %v92 = vld [vmem:[%s0 + $0x1d8] sm:$0xff]
  %v93 = vld [vmem:[%s0 + $0x1e0] sm:$0xff]
  %v94 = vld [vmem:[%s0 + $0x1e8] sm:$0xff]
  %v95 = vld [vmem:[%s0 + $0x1f0] sm:$0xff]
  %v96 = vld [vmem:[%s0 + $0x1f8] sm:$0xff]
  %v97 = vld [vmem:[%s0 + $0x200] sm:$0xff]
  %v98 = vld [vmem:[%s0 + $0x208] sm:$0xff]
  %v99 = vld [vmem:[%s0 + $0x210] sm:$0xff]
  %v100 = vld [vmem:[%s0 + $0x218] sm:$0xff]
  %v101 = vld [vmem:[%s0 + $0x220] sm:$0xff]
  %v102 = vld [vmem:[%s0 + $0x228] sm:$0xff]
  %v103 = vld [vmem:[%s0 + $0x230] sm:$0xff]
  %v104 = vld [vmem:[%s0 + $0x238] sm:$0xff]
  %v105 = vld [vmem:[%s0 + $0x240] sm:$0xff]
  %v106 = vld [vmem:[%s0 + $0x248] sm:$0xff]
  %v107 = vld [vmem:[%s0 + $0x250] sm:$0xff]
  %v108 = vld [vmem:[%s0 + $0x258] sm:$0xff]
  %v109 = vld [vmem:[%s0 + $0x260] sm:$0xff]
  %v110 = vld [vmem:[%s0 + $0x268] sm:$0xff]
  %v111 = vld [vmem:[%s0 + $0x270] sm:$0xff]
  %v112 = vld [vmem:[%s0 + $0x278] sm:$0xff]
  %v113 = vld [vmem:[%s0 + $0x280] sm:$0xff]
  %v114 = vld [vmem:[%s0 + $0x288] sm:$0xff]
  %v115 = vld [vmem:[%s0 + $0x290] sm:$0xff]
  %v116 = vld [vmem:[%s0 + $0x298] sm:$0xff]
  %v117 = vld [vmem:[%s0 + $0x2a0] sm:$0xff]
  %v118 = vld [vmem:[%s0 + $0x2a8] sm:$0xff]
  %v119 = vld [vmem:[%s0 + $0x2b0] sm:$0xff]
  %v120 = vld [vmem:[%s0 + $0x2b8] sm:$0xff]
  %v121 = vld [vmem:[%s0 + $0x2c0] sm:$0xff]
  %v122 = vld [vmem:[%s0 + $0x2c8] sm:$0xff]
  %v123 = vld [vmem:[%s0 + $0x2d0] sm:$0xff]
  %v124 = vld [vmem:[%s0 + $0x2d8] sm:$0xff]
  %v125 = vld [vmem:[%s0 + $0x2e0] sm:$0xff]
  %v126 = vld [vmem:[%s0 + $0x2e8] sm:$0xff]
  %v127 = vld [vmem:[%s0 + $0x2f0] sm:$0xff]
  %v128 = vld [vmem:[%s0 + $0x2f8] sm:$0xff]
  %v129 = vld [vmem:[%s0 + $0x300] sm:$0xff]
  %v130 = vld [vmem:[%s0 + $0x308] sm:$0xff]
  %v131 = vld [vmem:[%s0 + $0x310] sm:$0xff]
  %v132 = vld [vmem:[%s0 + $0x318] sm:$0xff]
  %v133 = vld [vmem:[%s0 + $0x320] sm:$0xff]
  %v134 = vld [vmem:[%s0 + $0x328] sm:$0xff]
  %v135 = vld [vmem:[%s0 + $0x330] sm:$0xff]
  %v136 = vld [vmem:[%s0 + $0x338] sm:$0xff]
  %v137 = vld [vmem:[%s0 + $0x340] sm:$0xff]
  %v138 = vld [vmem:[%s0 + $0x348] sm:$0xff]
  %v139 = vld [vmem:[%s0 + $0x350] sm:$0xff]
  %v140 = vld [vmem:[%s0 + $0x358] sm:$0xff]
  %v141 = vld [vmem:[%s0 + $0x360] sm:$0xff]
  %v142 = vld [vmem:[%s0 + $0x368] sm:$0xff]
  %v143 = vld [vmem:[%s0 + $0x370] sm:$0xff]
  %v144 = vld [vmem:[%s0 + $0x378] sm:$0xff]
  %v145 = vld [vmem:[%s0 + $0x380] sm:$0xff]
  %v146 = vld [vmem:[%s0 + $0x388] sm:$0xff]
  %v147 = vld [vmem:[%s0 + $0x390] sm:$0xff]
  %v148 = vld [vmem:[%s0 + $0x398] sm:$0xff]
  %v149 = vld [vmem:[%s0 + $0x3a0] sm:$0xff]
  %v150 = vld [vmem:[%s0 + $0x3a8] sm:$0xff]
  %v151 = vld [vmem:[%s0 + $0x3b0] sm:$0xff]
  %v152 = vld [vmem:[%s0 + $0x3b8] sm:$0xff]
  %v153 = vld [vmem:[%s0 + $0x3c0] sm:$0xff]
  %v154 = vld [vmem:[%s0 + $0x3c8] sm:$0xff]
  %v155 = vld [vmem:[%s0 + $0x3d0] sm:$0xff]
  %v156 = vld [vmem:[%s0 + $0x3d8] sm:$0xff]
  %v157 = vld [vmem:[%s0 + $0x3e0] sm:$0xff]
  %v158 = vld [vmem:[%s0 + $0x3e8] sm:$0xff]
  %v159 = vld [vmem:[%s0 + $0x3f0] sm:$0xff]
  %v160 = vld [vmem:[%s0 + $0x3f8] sm:$0xff]
  %v161 = vpack.c.bf16 %v34, %v33
  %v162 = vpack.c.bf16 %v36, %v35
  %v163 = vpack.c.bf16 %v38, %v37
  %v164 = vpack.c.bf16 %v40, %v39
  %v165 = vpack.c.bf16 %v42, %v41
  %v166 = vpack.c.bf16 %v44, %v43
  %v167 = vpack.c.bf16 %v46, %v45
  %v168 = vpack.c.bf16 %v48, %v47
  %v169 = vpack.c.bf16 %v50, %v49
  %v170 = vpack.c.bf16 %v52, %v51
  %v171 = vpack.c.bf16 %v54, %v53
  %v172 = vpack.c.bf16 %v56, %v55
  %v173 = vpack.c.bf16 %v58, %v57
  %v174 = vpack.c.bf16 %v60, %v59
  %v175 = vpack.c.bf16 %v62, %v61
  %v176 = vpack.c.bf16 %v64, %v63
  %v177 = vpack.c.bf16 %v66, %v65
  %v178 = vpack.c.bf16 %v68, %v67
  %v179 = vpack.c.bf16 %v70, %v69
  %v180 = vpack.c.bf16 %v72, %v71
  %v181 = vpack.c.bf16 %v74, %v73
  %v182 = vpack.c.bf16 %v76, %v75
  %v183 = vpack.c.bf16 %v78, %v77
  %v184 = vpack.c.bf16 %v80, %v79
  %v185 = vpack.c.bf16 %v82, %v81
  %v186 = vpack.c.bf16 %v84, %v83
  %v187 = vpack.c.bf16 %v86, %v85
  %v188 = vpack.c.bf16 %v88, %v87
  %v189 = vpack.c.bf16 %v90, %v89
  %v190 = vpack.c.bf16 %v92, %v91
  %v191 = vpack.c.bf16 %v94, %v93
  %v192 = vpack.c.bf16 %v96, %v95
  %v193 = vpack.c.bf16 %v98, %v97
  %v194 = vpack.c.bf16 %v100, %v99
  %v195 = vpack.c.bf16 %v102, %v101
  %v196 = vpack.c.bf16 %v104, %v103
  %v197 = vpack.c.bf16 %v106, %v105
  %v198 = vpack.c.bf16 %v108, %v107
  %v199 = vpack.c.bf16 %v110, %v109
  %v200 = vpack.c.bf16 %v112, %v111
  %v201 = vpack.c.bf16 %v114, %v113
  %v202 = vpack.c.bf16 %v116, %v115
  %v203 = vpack.c.bf16 %v118, %v117
  %v204 = vpack.c.bf16 %v120, %v119
  %v205 = vpack.c.bf16 %v122, %v121
  %v206 = vpack.c.bf16 %v124, %v123
  %v207 = vpack.c.bf16 %v126, %v125
  %v208 = vpack.c.bf16 %v128, %v127
  %v209 = vpack.c.bf16 %v130, %v129
  %v210 = vpack.c.bf16 %v132, %v131
  %v211 = vpack.c.bf16 %v134, %v133
  %v212 = vpack.c.bf16 %v136, %v135
  %v213 = vpack.c.bf16 %v138, %v137
  %v214 = vpack.c.bf16 %v140, %v139
  %v215 = vpack.c.bf16 %v142, %v141
  %v216 = vpack.c.bf16 %v144, %v143
  %v217 = vpack.c.bf16 %v146, %v145
  %v218 = vpack.c.bf16 %v148, %v147
  %v219 = vpack.c.bf16 %v150, %v149
  %v220 = vpack.c.bf16 %v152, %v151
  %v221 = vpack.c.bf16 %v154, %v153
  %v222 = vpack.c.bf16 %v156, %v155
  %v223 = vpack.c.bf16 %v158, %v157
  %v224 = vpack.c.bf16 %v160, %v159
  %v225 = vld [vmem:[%s1] sm:$0xf]
  %v226 = vld [vmem:[%s2] sm:$0x1]
  %v228 = vlaneseq
  %v229 = vshrl.u32 %v228, 7
  %v230 = vsub.s32 0, %v229
  %v231 = vrot.slane %v226, %v230
  %vm233 = vcmask 64512
  %v235 = vsel %vm233, %v161, 0
  %v238 = vsel %vm233, %v162, 0
  %v241 = vsel %vm233, %v163, 0
  %v244 = vsel %vm233, %v164, 0
  %v247 = vsel %vm233, %v165, 0
  %v250 = vsel %vm233, %v166, 0
  %v253 = vsel %vm233, %v167, 0
  %v256 = vsel %vm233, %v168, 0
  %v259 = vsel %vm233, %v169, 0
  %v262 = vsel %vm233, %v170, 0
  %v265 = vsel %vm233, %v171, 0
  %v268 = vsel %vm233, %v172, 0
  %v271 = vsel %vm233, %v173, 0
  %v274 = vsel %vm233, %v174, 0
  %v277 = vsel %vm233, %v175, 0
  %v280 = vsel %vm233, %v176, 0
  %v283 = vsel %vm233, %v177, 0
  %v286 = vsel %vm233, %v178, 0
  %v289 = vsel %vm233, %v179, 0
  %v292 = vsel %vm233, %v180, 0
  %v295 = vsel %vm233, %v181, 0
  %v298 = vsel %vm233, %v182, 0
  %v301 = vsel %vm233, %v183, 0
  %v304 = vsel %vm233, %v184, 0
  %v307 = vsel %vm233, %v185, 0
  %v310 = vsel %vm233, %v186, 0
  %v313 = vsel %vm233, %v187, 0
  %v316 = vsel %vm233, %v188, 0
  %v319 = vsel %vm233, %v189, 0
  %v322 = vsel %vm233, %v190, 0
  %v325 = vsel %vm233, %v191, 0
  %v328 = vsel %vm233, %v192, 0
  %v331 = vsel %vm233, %v193, 0
  %v334 = vsel %vm233, %v194, 0
  %v337 = vsel %vm233, %v195, 0
  %v340 = vsel %vm233, %v196, 0
  %v343 = vsel %vm233, %v197, 0
  %v346 = vsel %vm233, %v198, 0
  %v349 = vsel %vm233, %v199, 0
  %v352 = vsel %vm233, %v200, 0
  %v355 = vsel %vm233, %v201, 0
  %v358 = vsel %vm233, %v202, 0
  %v361 = vsel %vm233, %v203, 0
  %v364 = vsel %vm233, %v204, 0
  %v367 = vsel %vm233, %v205, 0
  %v370 = vsel %vm233, %v206, 0
  %v373 = vsel %vm233, %v207, 0
  %v376 = vsel %vm233, %v208, 0
  %v379 = vsel %vm233, %v209, 0
  %v382 = vsel %vm233, %v210, 0
  %v385 = vsel %vm233, %v211, 0
  %v388 = vsel %vm233, %v212, 0
  %v391 = vsel %vm233, %v213, 0
  %v394 = vsel %vm233, %v214, 0
  %v397 = vsel %vm233, %v215, 0
  %v400 = vsel %vm233, %v216, 0
  %v403 = vsel %vm233, %v217, 0
  %v406 = vsel %vm233, %v218, 0
  %v409 = vsel %vm233, %v219, 0
  %v412 = vsel %vm233, %v220, 0
  %v415 = vsel %vm233, %v221, 0
  %v418 = vsel %vm233, %v222, 0
  %v421 = vsel %vm233, %v223, 0
  %v424 = vsel %vm233, %v224, 0
  %vm426 = vcmask 1043456
  %v428 = vsel %vm426, %v225, 0
  %430 = vmatprep.subr.bf16.mxu0 0
  %431 = vmatpush1.bf16.msra.mxu0 %v428
  %432 = vmatprep.subr.bf16.mxu0 0
  %433 = vmatpush1.bf16.msra.mxu0 0
  %434 = vmatprep.subr.bf16.mxu0 0
  %435 = vmatpush1.bf16.msra.mxu0 0
  %436 = vmatprep.subr.bf16.mxu0 0
  %437 = vmatpush1.bf16.msra.mxu0 0
  %438 = vmatprep.subr.bf16.mxu0 0
  %439 = vmatpush1.bf16.msra.mxu0 0
  %440 = vmatprep.subr.bf16.mxu0 0
  %441 = vmatpush1.bf16.msra.mxu0 0
  %442 = vmatprep.subr.bf16.mxu0 0
  %443 = vmatpush1.bf16.msra.mxu0 0
  %444 = vmatprep.subr.bf16.mxu0 0
  %445 = vmatpush1.bf16.msra.mxu0 0
  %446 = vmatprep.subr.bf16.mxu0 0
  %447 = vmatpush1.bf16.msra.mxu0 0
  %448 = vmatprep.subr.bf16.mxu0 0
  %449 = vmatpush1.bf16.msra.mxu0 0
  %450 = vmatprep.subr.bf16.mxu0 0
  %451 = vmatpush1.bf16.msra.mxu0 0
  %452 = vmatprep.subr.bf16.mxu0 0
  %453 = vmatpush1.bf16.msra.mxu0 0
  %454 = vmatprep.subr.bf16.mxu0 0
  %455 = vmatpush1.bf16.msra.mxu0 0
  %456 = vmatprep.subr.bf16.mxu0 0
  %457 = vmatpush1.bf16.msra.mxu0 0
  %458 = vmatprep.subr.bf16.mxu0 0
  %459 = vmatpush1.bf16.msra.mxu0 0
  %460 = vmatprep.subr.bf16.mxu0 0
  %461 = vmatpush1.bf16.msra.mxu0 0
  %462 = vmatprep.mubr.bf16.mxu0 0
  %463 = vmatmul.mubr.bf16.gmra.mrb[0].mxu0 %v235
  %v464 = vpop.f32.mrb[0].mxu0
  %v465 = vadd.f32 %v231, %v464
  %v466 = vpop.f32.mrb[0].mxu0
  %v467 = vpop.f32.mrb[0].mxu0
  %v468 = vadd.f32 %v231, %v467
  %v469 = vpop.f32.mrb[0].mxu0
  %470 = vmatprep.mubr.bf16.mxu0 0
  %471 = vmatmul.mubr.bf16.gmra.mrb[0].mxu0 %v238
  %v472 = vpop.f32.mrb[0].mxu0
  %v473 = vadd.f32 %v231, %v472
  %v474 = vpop.f32.mrb[0].mxu0
  %v475 = vpop.f32.mrb[0].mxu0
  %v476 = vadd.f32 %v231, %v475
  %v477 = vpop.f32.mrb[0].mxu0
  %478 = vmatprep.mubr.bf16.mxu0 0
  %479 = vmatmul.mubr.bf16.gmra.mrb[0].mxu0 %v241
  %v480 = vpop.f32.mrb[0].mxu0
  %v481 = vadd.f32 %v231, %v480
  %v482 = vpop.f32.mrb[0].mxu0
  %v483 = vpop.f32.mrb[0].mxu0
  %v484 = vadd.f32 %v231, %v483
  %v485 = vpop.f32.mrb[0].mxu0
  %486 = vmatprep.mubr.bf16.mxu0 0
  %487 = vmatmul.mubr.bf16.gmra.mrb[0].mxu0 %v244
  %v488 = vpop.f32.mrb[0].mxu0
  %v489 = vadd.f32 %v231, %v488
  %v490 = vpop.f32.mrb[0].mxu0
  %v491 = vpop.f32.mrb[0].mxu0
  %v492 = vadd.f32 %v231, %v491
  %v493 = vpop.f32.mrb[0].mxu0
  %494 = vmatprep.mubr.bf16.mxu0 0
  %495 = vmatmul.mubr.bf16.gmra.mrb[0].mxu0 %v247
  %v496 = vpop.f32.mrb[0].mxu0
  %v497 = vadd.f32 %v231, %v496
  %v498 = vpop.f32.mrb[0].mxu0
  %v499 = vpop.f32.mrb[0].mxu0
  %v500 = vadd.f32 %v231, %v499
  %v501 = vpop.f32.mrb[0].mxu0
  %502 = vmatprep.mubr.bf16.mxu0 0
  %503 = vmatmul.mubr.bf16.gmra.mrb[0].mxu0 %v250
  %v504 = vpop.f32.mrb[0].mxu0
  %v505 = vadd.f32 %v231, %v504
  %v506 = vpop.f32.mrb[0].mxu0
  %v507 = vpop.f32.mrb[0].mxu0
  %v508 = vadd.f32 %v231, %v507
  %v509 = vpop.f32.mrb[0].mxu0
  %510 = vmatprep.mubr.bf16.mxu0 0
  %511 = vmatmul.mubr.bf16.gmra.mrb[0].mxu0 %v253
  %v512 = vpop.f32.mrb[0].mxu0
  %v513 = vadd.f32 %v231, %v512
  %v514 = vpop.f32.mrb[0].mxu0
  %v515 = vpop.f32.mrb[0].mxu0
  %v516 = vadd.f32 %v231, %v515
  %v517 = vpop.f32.mrb[0].mxu0
  %518 = vmatprep.mubr.bf16.mxu0 0
  %519 = vmatmul.mubr.bf16.gmra.mrb[0].mxu0 %v256
  %v520 = vpop.f32.mrb[0].mxu0
  %v521 = vadd.f32 %v231, %v520
  %v522 = vpop.f32.mrb[0].mxu0
  %v523 = vpop.f32.mrb[0].mxu0
  %v524 = vadd.f32 %v231, %v523
  %v525 = vpop.f32.mrb[0].mxu0
  %526 = vmatprep.mubr.bf16.mxu0 0
  %527 = vmatmul.mubr.bf16.gmra.mrb[0].mxu0 %v259
  %v528 = vpop.f32.mrb[0].mxu0
  %v529 = vadd.f32 %v231, %v528
  %v530 = vpop.f32.mrb[0].mxu0
  %v531 = vpop.f32.mrb[0].mxu0
  %v532 = vadd.f32 %v231, %v531
  %v533 = vpop.f32.mrb[0].mxu0
  %534 = vmatprep.mubr.bf16.mxu0 0
  %535 = vmatmul.mubr.bf16.gmra.mrb[0].mxu0 %v262
  %v536 = vpop.f32.mrb[0].mxu0
  %v537 = vadd.f32 %v231, %v536
  %v538 = vpop.f32.mrb[0].mxu0
  %v539 = vpop.f32.mrb[0].mxu0
  %v540 = vadd.f32 %v231, %v539
  %v541 = vpop.f32.mrb[0].mxu0
  %542 = vmatprep.mubr.bf16.mxu0 0
  %543 = vmatmul.mubr.bf16.gmra.mrb[0].mxu0 %v265
  %v544 = vpop.f32.mrb[0].mxu0
  %v545 = vadd.f32 %v231, %v544
  %v546 = vpop.f32.mrb[0].mxu0
  %v547 = vpop.f32.mrb[0].mxu0
  %v548 = vadd.f32 %v231, %v547
  %v549 = vpop.f32.mrb[0].mxu0
  %550 = vmatprep.mubr.bf16.mxu0 0
  %551 = vmatmul.mubr.bf16.gmra.mrb[0].mxu0 %v268
  %v552 = vpop.f32.mrb[0].mxu0
  %v553 = vadd.f32 %v231, %v552
  %v554 = vpop.f32.mrb[0].mxu0
  %v555 = vpop.f32.mrb[0].mxu0
  %v556 = vadd.f32 %v231, %v555
  %v557 = vpop.f32.mrb[0].mxu0
  %558 = vmatprep.mubr.bf16.mxu0 0
  %559 = vmatmul.mubr.bf16.gmra.mrb[0].mxu0 %v271
  %v560 = vpop.f32.mrb[0].mxu0
  %v561 = vadd.f32 %v231, %v560
  %v562 = vpop.f32.mrb[0].mxu0
  %v563 = vpop.f32.mrb[0].mxu0
  %v564 = vadd.f32 %v231, %v563
  %v565 = vpop.f32.mrb[0].mxu0
  %566 = vmatprep.mubr.bf16.mxu0 0
  %567 = vmatmul.mubr.bf16.gmra.mrb[0].mxu0 %v274
  %v568 = vpop.f32.mrb[0].mxu0
  %v569 = vadd.f32 %v231, %v568
  %v570 = vpop.f32.mrb[0].mxu0
  %v571 = vpop.f32.mrb[0].mxu0
  %v572 = vadd.f32 %v231, %v571
  %v573 = vpop.f32.mrb[0].mxu0
  %574 = vmatprep.mubr.bf16.mxu0 0
  %575 = vmatmul.mubr.bf16.gmra.mrb[0].mxu0 %v277
  %v576 = vpop.f32.mrb[0].mxu0
  %v577 = vadd.f32 %v231, %v576
  %v578 = vpop.f32.mrb[0].mxu0
  %v579 = vpop.f32.mrb[0].mxu0
  %v580 = vadd.f32 %v231, %v579
  %v581 = vpop.f32.mrb[0].mxu0
  %582 = vmatprep.mubr.bf16.mxu0 0
  %583 = vmatmul.mubr.bf16.gmra.mrb[0].mxu0 %v280
  %v584 = vpop.f32.mrb[0].mxu0
  %v585 = vadd.f32 %v231, %v584
  %v586 = vpop.f32.mrb[0].mxu0
  %v587 = vpop.f32.mrb[0].mxu0
  %v588 = vadd.f32 %v231, %v587
  %v589 = vpop.f32.mrb[0].mxu0
  %590 = vmatprep.mubr.bf16.mxu0 0
  %591 = vmatmul.mubr.bf16.gmra.mrb[0].mxu0 %v283
  %v592 = vpop.f32.mrb[0].mxu0
  %v593 = vadd.f32 %v231, %v592
  %v594 = vpop.f32.mrb[0].mxu0
  %v595 = vpop.f32.mrb[0].mxu0
  %v596 = vadd.f32 %v231, %v595
  %v597 = vpop.f32.mrb[0].mxu0
  %598 = vmatprep.mubr.bf16.mxu0 0
  %599 = vmatmul.mubr.bf16.gmra.mrb[0].mxu0 %v286
  %v600 = vpop.f32.mrb[0].mxu0
  %v601 = vadd.f32 %v231, %v600
  %v602 = vpop.f32.mrb[0].mxu0
  %v603 = vpop.f32.mrb[0].mxu0
  %v604 = vadd.f32 %v231, %v603
  %v605 = vpop.f32.mrb[0].mxu0
  %606 = vmatprep.mubr.bf16.mxu0 0
  %607 = vmatmul.mubr.bf16.gmra.mrb[0].mxu0 %v289
  %v608 = vpop.f32.mrb[0].mxu0
  %v609 = vadd.f32 %v231, %v608
  %v610 = vpop.f32.mrb[0].mxu0
  %v611 = vpop.f32.mrb[0].mxu0
  %v612 = vadd.f32 %v231, %v611
  %v613 = vpop.f32.mrb[0].mxu0
  %614 = vmatprep.mubr.bf16.mxu0 0
  %615 = vmatmul.mubr.bf16.gmra.mrb[0].mxu0 %v292
  %v616 = vpop.f32.mrb[0].mxu0
  %v617 = vadd.f32 %v231, %v616
  %v618 = vpop.f32.mrb[0].mxu0
  %v619 = vpop.f32.mrb[0].mxu0
  %v620 = vadd.f32 %v231, %v619
  %v621 = vpop.f32.mrb[0].mxu0
  %622 = vmatprep.mubr.bf16.mxu0 0
  %623 = vmatmul.mubr.bf16.gmra.mrb[0].mxu0 %v295
  %v624 = vpop.f32.mrb[0].mxu0
  %v625 = vadd.f32 %v231, %v624
  %v626 = vpop.f32.mrb[0].mxu0
  %v627 = vpop.f32.mrb[0].mxu0
  %v628 = vadd.f32 %v231, %v627
  %v629 = vpop.f32.mrb[0].mxu0
  %630 = vmatprep.mubr.bf16.mxu0 0
  %631 = vmatmul.mubr.bf16.gmra.mrb[0].mxu0 %v298
  %v632 = vpop.f32.mrb[0].mxu0
  %v633 = vadd.f32 %v231, %v632
  %v634 = vpop.f32.mrb[0].mxu0
  %v635 = vpop.f32.mrb[0].mxu0
  %v636 = vadd.f32 %v231, %v635
  %v637 = vpop.f32.mrb[0].mxu0
  %638 = vmatprep.mubr.bf16.mxu0 0
  %639 = vmatmul.mubr.bf16.gmra.mrb[0].mxu0 %v301
  %v640 = vpop.f32.mrb[0].mxu0
  %v641 = vadd.f32 %v231, %v640
  %v642 = vpop.f32.mrb[0].mxu0
  %v643 = vpop.f32.mrb[0].mxu0
  %v644 = vadd.f32 %v231, %v643
  %v645 = vpop.f32.mrb[0].mxu0
  %646 = vmatprep.mubr.bf16.mxu0 0
  %647 = vmatmul.mubr.bf16.gmra.mrb[0].mxu0 %v304
  %v648 = vpop.f32.mrb[0].mxu0
  %v649 = vadd.f32 %v231, %v648
  %v650 = vpop.f32.mrb[0].mxu0
  %v651 = vpop.f32.mrb[0].mxu0
  %v652 = vadd.f32 %v231, %v651
  %v653 = vpop.f32.mrb[0].mxu0
  %654 = vmatprep.mubr.bf16.mxu0 0
  %655 = vmatmul.mubr.bf16.gmra.mrb[0].mxu0 %v307
  %v656 = vpop.f32.mrb[0].mxu0
  %v657 = vadd.f32 %v231, %v656
  %v658 = vpop.f32.mrb[0].mxu0
  %v659 = vpop.f32.mrb[0].mxu0
  %v660 = vadd.f32 %v231, %v659
  %v661 = vpop.f32.mrb[0].mxu0
  %662 = vmatprep.mubr.bf16.mxu0 0
  %663 = vmatmul.mubr.bf16.gmra.mrb[0].mxu0 %v310
  %v664 = vpop.f32.mrb[0].mxu0
  %v665 = vadd.f32 %v231, %v664
  %v666 = vpop.f32.mrb[0].mxu0
  %v667 = vpop.f32.mrb[0].mxu0
  %v668 = vadd.f32 %v231, %v667
  %v669 = vpop.f32.mrb[0].mxu0
  %670 = vmatprep.mubr.bf16.mxu0 0
  %671 = vmatmul.mubr.bf16.gmra.mrb[0].mxu0 %v313
  %v672 = vpop.f32.mrb[0].mxu0
  %v673 = vadd.f32 %v231, %v672
  %v674 = vpop.f32.mrb[0].mxu0
  %v675 = vpop.f32.mrb[0].mxu0
  %v676 = vadd.f32 %v231, %v675
  %v677 = vpop.f32.mrb[0].mxu0
  %678 = vmatprep.mubr.bf16.mxu0 0
  %679 = vmatmul.mubr.bf16.gmra.mrb[0].mxu0 %v316
  %v680 = vpop.f32.mrb[0].mxu0
  %v681 = vadd.f32 %v231, %v680
  %v682 = vpop.f32.mrb[0].mxu0
  %v683 = vpop.f32.mrb[0].mxu0
  %v684 = vadd.f32 %v231, %v683
  %v685 = vpop.f32.mrb[0].mxu0
  %686 = vmatprep.mubr.bf16.mxu0 0
  %687 = vmatmul.mubr.bf16.gmra.mrb[0].mxu0 %v319
  %v688 = vpop.f32.mrb[0].mxu0
  %v689 = vadd.f32 %v231, %v688
  %v690 = vpop.f32.mrb[0].mxu0
  %v691 = vpop.f32.mrb[0].mxu0
  %v692 = vadd.f32 %v231, %v691
  %v693 = vpop.f32.mrb[0].mxu0
  %694 = vmatprep.mubr.bf16.mxu0 0
  %695 = vmatmul.mubr.bf16.gmra.mrb[0].mxu0 %v322
  %v696 = vpop.f32.mrb[0].mxu0
  %v697 = vadd.f32 %v231, %v696
  %v698 = vpop.f32.mrb[0].mxu0
  %v699 = vpop.f32.mrb[0].mxu0
  %v700 = vadd.f32 %v231, %v699
  %v701 = vpop.f32.mrb[0].mxu0
  %702 = vmatprep.mubr.bf16.mxu0 0
  %703 = vmatmul.mubr.bf16.gmra.mrb[0].mxu0 %v325
  %v704 = vpop.f32.mrb[0].mxu0
  %v705 = vadd.f32 %v231, %v704
  %v706 = vpop.f32.mrb[0].mxu0
  %v707 = vpop.f32.mrb[0].mxu0
  %v708 = vadd.f32 %v231, %v707
  %v709 = vpop.f32.mrb[0].mxu0
  %710 = vmatprep.mubr.bf16.mxu0 0
  %711 = vmatmul.mubr.bf16.gmra.mrb[0].mxu0 %v328
  %v712 = vpop.f32.mrb[0].mxu0
  %v713 = vadd.f32 %v231, %v712
  %v714 = vpop.f32.mrb[0].mxu0
  %v715 = vpop.f32.mrb[0].mxu0
  %v716 = vadd.f32 %v231, %v715
  %v717 = vpop.f32.mrb[0].mxu0
  %718 = vmatprep.mubr.bf16.mxu0 0
  %719 = vmatmul.mubr.bf16.gmra.mrb[0].mxu0 %v331
  %v720 = vpop.f32.mrb[0].mxu0
  %v721 = vadd.f32 %v231, %v720
  %v722 = vpop.f32.mrb[0].mxu0
  %v723 = vpop.f32.mrb[0].mxu0
  %v724 = vadd.f32 %v231, %v723
  %v725 = vpop.f32.mrb[0].mxu0
  %726 = vmatprep.mubr.bf16.mxu0 0
  %727 = vmatmul.mubr.bf16.gmra.mrb[0].mxu0 %v334
  %v728 = vpop.f32.mrb[0].mxu0
  %v729 = vadd.f32 %v231, %v728
  %v730 = vpop.f32.mrb[0].mxu0
  %v731 = vpop.f32.mrb[0].mxu0
  %v732 = vadd.f32 %v231, %v731
  %v733 = vpop.f32.mrb[0].mxu0
  %734 = vmatprep.mubr.bf16.mxu0 0
  %735 = vmatmul.mubr.bf16.gmra.mrb[0].mxu0 %v337
  %v736 = vpop.f32.mrb[0].mxu0
  %v737 = vadd.f32 %v231, %v736
  %v738 = vpop.f32.mrb[0].mxu0
  %v739 = vpop.f32.mrb[0].mxu0
  %v740 = vadd.f32 %v231, %v739
  %v741 = vpop.f32.mrb[0].mxu0
  %742 = vmatprep.mubr.bf16.mxu0 0
  %743 = vmatmul.mubr.bf16.gmra.mrb[0].mxu0 %v340
  %v744 = vpop.f32.mrb[0].mxu0
  %v745 = vadd.f32 %v231, %v744
  %v746 = vpop.f32.mrb[0].mxu0
  %v747 = vpop.f32.mrb[0].mxu0
  %v748 = vadd.f32 %v231, %v747
  %v749 = vpop.f32.mrb[0].mxu0
  %750 = vmatprep.mubr.bf16.mxu0 0
  %751 = vmatmul.mubr.bf16.gmra.mrb[0].mxu0 %v343
  %v752 = vpop.f32.mrb[0].mxu0
  %v753 = vadd.f32 %v231, %v752
  %v754 = vpop.f32.mrb[0].mxu0
  %v755 = vpop.f32.mrb[0].mxu0
  %v756 = vadd.f32 %v231, %v755
  %v757 = vpop.f32.mrb[0].mxu0
  %758 = vmatprep.mubr.bf16.mxu0 0
  %759 = vmatmul.mubr.bf16.gmra.mrb[0].mxu0 %v346
  %v760 = vpop.f32.mrb[0].mxu0
  %v761 = vadd.f32 %v231, %v760
  %v762 = vpop.f32.mrb[0].mxu0
  %v763 = vpop.f32.mrb[0].mxu0
  %v764 = vadd.f32 %v231, %v763
  %v765 = vpop.f32.mrb[0].mxu0
  %766 = vmatprep.mubr.bf16.mxu0 0
  %767 = vmatmul.mubr.bf16.gmra.mrb[0].mxu0 %v349
  %v768 = vpop.f32.mrb[0].mxu0
  %v769 = vadd.f32 %v231, %v768
  %v770 = vpop.f32.mrb[0].mxu0
  %v771 = vpop.f32.mrb[0].mxu0
  %v772 = vadd.f32 %v231, %v771
  %v773 = vpop.f32.mrb[0].mxu0
  %774 = vmatprep.mubr.bf16.mxu0 0
  %775 = vmatmul.mubr.bf16.gmra.mrb[0].mxu0 %v352
  %v776 = vpop.f32.mrb[0].mxu0
  %v777 = vadd.f32 %v231, %v776
  %v778 = vpop.f32.mrb[0].mxu0
  %v779 = vpop.f32.mrb[0].mxu0
  %v780 = vadd.f32 %v231, %v779
  %v781 = vpop.f32.mrb[0].mxu0
  %782 = vmatprep.mubr.bf16.mxu0 0
  %783 = vmatmul.mubr.bf16.gmra.mrb[0].mxu0 %v355
  %v784 = vpop.f32.mrb[0].mxu0
  %v785 = vadd.f32 %v231, %v784
  %v786 = vpop.f32.mrb[0].mxu0
  %v787 = vpop.f32.mrb[0].mxu0
  %v788 = vadd.f32 %v231, %v787
  %v789 = vpop.f32.mrb[0].mxu0
  %790 = vmatprep.mubr.bf16.mxu0 0
  %791 = vmatmul.mubr.bf16.gmra.mrb[0].mxu0 %v358
  %v792 = vpop.f32.mrb[0].mxu0
  %v793 = vadd.f32 %v231, %v792
  %v794 = vpop.f32.mrb[0].mxu0
  %v795 = vpop.f32.mrb[0].mxu0
  %v796 = vadd.f32 %v231, %v795
  %v797 = vpop.f32.mrb[0].mxu0
  %798 = vmatprep.mubr.bf16.mxu0 0
  %799 = vmatmul.mubr.bf16.gmra.mrb[0].mxu0 %v361
  %v800 = vpop.f32.mrb[0].mxu0
  %v801 = vadd.f32 %v231, %v800
  %v802 = vpop.f32.mrb[0].mxu0
  %v803 = vpop.f32.mrb[0].mxu0
  %v804 = vadd.f32 %v231, %v803
  %v805 = vpop.f32.mrb[0].mxu0
  %806 = vmatprep.mubr.bf16.mxu0 0
  %807 = vmatmul.mubr.bf16.gmra.mrb[0].mxu0 %v364
  %v808 = vpop.f32.mrb[0].mxu0
  %v809 = vadd.f32 %v231, %v808
  %v810 = vpop.f32.mrb[0].mxu0
  %v811 = vpop.f32.mrb[0].mxu0
  %v812 = vadd.f32 %v231, %v811
  %v813 = vpop.f32.mrb[0].mxu0
  %814 = vmatprep.mubr.bf16.mxu0 0
  %815 = vmatmul.mubr.bf16.gmra.mrb[0].mxu0 %v367
  %v816 = vpop.f32.mrb[0].mxu0
  %v817 = vadd.f32 %v231, %v816
  %v818 = vpop.f32.mrb[0].mxu0
  %v819 = vpop.f32.mrb[0].mxu0
  %v820 = vadd.f32 %v231, %v819
  %v821 = vpop.f32.mrb[0].mxu0
  %822 = vmatprep.mubr.bf16.mxu0 0
  %823 = vmatmul.mubr.bf16.gmra.mrb[0].mxu0 %v370
  %v824 = vpop.f32.mrb[0].mxu0
  %v825 = vadd.f32 %v231, %v824
  %v826 = vpop.f32.mrb[0].mxu0
  %v827 = vpop.f32.mrb[0].mxu0
  %v828 = vadd.f32 %v231, %v827
  %v829 = vpop.f32.mrb[0].mxu0
  %830 = vmatprep.mubr.bf16.mxu0 0
  %831 = vmatmul.mubr.bf16.gmra.mrb[0].mxu0 %v373
  %v832 = vpop.f32.mrb[0].mxu0
  %v833 = vadd.f32 %v231, %v832
  %v834 = vpop.f32.mrb[0].mxu0
  %v835 = vpop.f32.mrb[0].mxu0
  %v836 = vadd.f32 %v231, %v835
  %v837 = vpop.f32.mrb[0].mxu0
  %838 = vmatprep.mubr.bf16.mxu0 0
  %839 = vmatmul.mubr.bf16.gmra.mrb[0].mxu0 %v376
  %v840 = vpop.f32.mrb[0].mxu0
  %v841 = vadd.f32 %v231, %v840
  %v842 = vpop.f32.mrb[0].mxu0
  %v843 = vpop.f32.mrb[0].mxu0
  %v844 = vadd.f32 %v231, %v843
  %v845 = vpop.f32.mrb[0].mxu0
  %846 = vmatprep.mubr.bf16.mxu0 0
  %847 = vmatmul.mubr.bf16.gmra.mrb[0].mxu0 %v379
  %v848 = vpop.f32.mrb[0].mxu0
  %v849 = vadd.f32 %v231, %v848
  %v850 = vpop.f32.mrb[0].mxu0
  %v851 = vpop.f32.mrb[0].mxu0
  %v852 = vadd.f32 %v231, %v851
  %v853 = vpop.f32.mrb[0].mxu0
  %854 = vmatprep.mubr.bf16.mxu0 0
  %855 = vmatmul.mubr.bf16.gmra.mrb[0].mxu0 %v382
  %v856 = vpop.f32.mrb[0].mxu0
  %v857 = vadd.f32 %v231, %v856
  %v858 = vpop.f32.mrb[0].mxu0
  %v859 = vpop.f32.mrb[0].mxu0
  %v860 = vadd.f32 %v231, %v859
  %v861 = vpop.f32.mrb[0].mxu0
  %862 = vmatprep.mubr.bf16.mxu0 0
  %863 = vmatmul.mubr.bf16.gmra.mrb[0].mxu0 %v385
  %v864 = vpop.f32.mrb[0].mxu0
  %v865 = vadd.f32 %v231, %v864
  %v866 = vpop.f32.mrb[0].mxu0
  %v867 = vpop.f32.mrb[0].mxu0
  %v868 = vadd.f32 %v231, %v867
  %v869 = vpop.f32.mrb[0].mxu0
  %870 = vmatprep.mubr.bf16.mxu0 0
  %871 = vmatmul.mubr.bf16.gmra.mrb[0].mxu0 %v388
  %v872 = vpop.f32.mrb[0].mxu0
  %v873 = vadd.f32 %v231, %v872
  %v874 = vpop.f32.mrb[0].mxu0
  %v875 = vpop.f32.mrb[0].mxu0
  %v876 = vadd.f32 %v231, %v875
  %v877 = vpop.f32.mrb[0].mxu0
  %878 = vmatprep.mubr.bf16.mxu0 0
  %879 = vmatmul.mubr.bf16.gmra.mrb[0].mxu0 %v391
  %v880 = vpop.f32.mrb[0].mxu0
  %v881 = vadd.f32 %v231, %v880
  %v882 = vpop.f32.mrb[0].mxu0
  %v883 = vpop.f32.mrb[0].mxu0
  %v884 = vadd.f32 %v231, %v883
  %v885 = vpop.f32.mrb[0].mxu0
  %886 = vmatprep.mubr.bf16.mxu0 0
  %887 = vmatmul.mubr.bf16.gmra.mrb[0].mxu0 %v394
  %v888 = vpop.f32.mrb[0].mxu0
  %v889 = vadd.f32 %v231, %v888
  %v890 = vpop.f32.mrb[0].mxu0
  %v891 = vpop.f32.mrb[0].mxu0
  %v892 = vadd.f32 %v231, %v891
  %v893 = vpop.f32.mrb[0].mxu0
  %894 = vmatprep.mubr.bf16.mxu0 0
  %895 = vmatmul.mubr.bf16.gmra.mrb[0].mxu0 %v397
  %v896 = vpop.f32.mrb[0].mxu0
  %v897 = vadd.f32 %v231, %v896
  %v898 = vpop.f32.mrb[0].mxu0
  %v899 = vpop.f32.mrb[0].mxu0
  %v900 = vadd.f32 %v231, %v899
  %v901 = vpop.f32.mrb[0].mxu0
  %902 = vmatprep.mubr.bf16.mxu0 0
  %903 = vmatmul.mubr.bf16.gmra.mrb[0].mxu0 %v400
  %v904 = vpop.f32.mrb[0].mxu0
  %v905 = vadd.f32 %v231, %v904
  %v906 = vpop.f32.mrb[0].mxu0
  %v907 = vpop.f32.mrb[0].mxu0
  %v908 = vadd.f32 %v231, %v907
  %v909 = vpop.f32.mrb[0].mxu0
  %910 = vmatprep.mubr.bf16.mxu0 0
  %911 = vmatmul.mubr.bf16.gmra.mrb[0].mxu0 %v403
  %v912 = vpop.f32.mrb[0].mxu0
  %v913 = vadd.f32 %v231, %v912
  %v914 = vpop.f32.mrb[0].mxu0
  %v915 = vpop.f32.mrb[0].mxu0
  %v916 = vadd.f32 %v231, %v915
  %v917 = vpop.f32.mrb[0].mxu0
  %918 = vmatprep.mubr.bf16.mxu0 0
  %919 = vmatmul.mubr.bf16.gmra.mrb[0].mxu0 %v406
  %v920 = vpop.f32.mrb[0].mxu0
  %v921 = vadd.f32 %v231, %v920
  %v922 = vpop.f32.mrb[0].mxu0
  %v923 = vpop.f32.mrb[0].mxu0
  %v924 = vadd.f32 %v231, %v923
  %v925 = vpop.f32.mrb[0].mxu0
  %926 = vmatprep.mubr.bf16.mxu0 0
  %927 = vmatmul.mubr.bf16.gmra.mrb[0].mxu0 %v409
  %v928 = vpop.f32.mrb[0].mxu0
  %v929 = vadd.f32 %v231, %v928
  %v930 = vpop.f32.mrb[0].mxu0
  %v931 = vpop.f32.mrb[0].mxu0
  %v932 = vadd.f32 %v231, %v931
  %v933 = vpop.f32.mrb[0].mxu0
  %934 = vmatprep.mubr.bf16.mxu0 0
  %935 = vmatmul.mubr.bf16.gmra.mrb[0].mxu0 %v412
  %v936 = vpop.f32.mrb[0].mxu0
  %v937 = vadd.f32 %v231, %v936
  %v938 = vpop.f32.mrb[0].mxu0
  %v939 = vpop.f32.mrb[0].mxu0
  %v940 = vadd.f32 %v231, %v939
  %v941 = vpop.f32.mrb[0].mxu0
  %942 = vmatprep.mubr.bf16.mxu0 0
  %943 = vmatmul.mubr.bf16.gmra.mrb[0].mxu0 %v415
  %v944 = vpop.f32.mrb[0].mxu0
  %v945 = vadd.f32 %v231, %v944
  %v946 = vpop.f32.mrb[0].mxu0
  %v947 = vpop.f32.mrb[0].mxu0
  %v948 = vadd.f32 %v231, %v947
  %v949 = vpop.f32.mrb[0].mxu0
  %950 = vmatprep.mubr.bf16.mxu0 0
  %951 = vmatmul.mubr.bf16.gmra.mrb[0].mxu0 %v418
  %v952 = vpop.f32.mrb[0].mxu0
  %v953 = vadd.f32 %v231, %v952
  %v954 = vpop.f32.mrb[0].mxu0
  %v955 = vpop.f32.mrb[0].mxu0
  %v956 = vadd.f32 %v231, %v955
  %v957 = vpop.f32.mrb[0].mxu0
  %958 = vmatprep.mubr.bf16.mxu0 0
  %959 = vmatmul.mubr.bf16.gmra.mrb[0].mxu0 %v421
  %v960 = vpop.f32.mrb[0].mxu0
  %v961 = vadd.f32 %v231, %v960
  %v962 = vpop.f32.mrb[0].mxu0
  %v963 = vpop.f32.mrb[0].mxu0
  %v964 = vadd.f32 %v231, %v963
  %v965 = vpop.f32.mrb[0].mxu0
  %966 = vmatprep.mubr.bf16.mxu0 0
  %967 = vmatmul.mubr.bf16.gmra.mrb[0].mxu0 %v424
  %v968 = vpop.f32.mrb[0].mxu0
  %v969 = vadd.f32 %v231, %v968
  %v970 = vpop.f32.mrb[0].mxu0
  %v971 = vpop.f32.mrb[0].mxu0
  %v972 = vadd.f32 %v231, %v971
  %v973 = vpop.f32.mrb[0].mxu0
  %974 = vdwg.mxu0
  %v975 = vmax.f32 %v465, 0.0
  %v976 = vmax.f32 %v468, 0.0
  %v977 = vmax.f32 %v473, 0.0
  %v978 = vmax.f32 %v476, 0.0
  %v979 = vmax.f32 %v481, 0.0
  %v980 = vmax.f32 %v484, 0.0
  %v981 = vmax.f32 %v489, 0.0
  %v982 = vmax.f32 %v492, 0.0
  %v983 = vmax.f32 %v497, 0.0
  %v984 = vmax.f32 %v500, 0.0
  %v985 = vmax.f32 %v505, 0.0
  %v986 = vmax.f32 %v508, 0.0
  %v987 = vmax.f32 %v513, 0.0
  %v988 = vmax.f32 %v516, 0.0
  %v989 = vmax.f32 %v521, 0.0
  %v990 = vmax.f32 %v524, 0.0
  %v991 = vmax.f32 %v529, 0.0
  %v992 = vmax.f32 %v532, 0.0
  %v993 = vmax.f32 %v537, 0.0
  %v994 = vmax.f32 %v540, 0.0
  %v995 = vmax.f32 %v545, 0.0
  %v996 = vmax.f32 %v548, 0.0
  %v997 = vmax.f32 %v553, 0.0
  %v998 = vmax.f32 %v556, 0.0
  %v999 = vmax.f32 %v561, 0.0
  %v1000 = vmax.f32 %v564, 0.0
  %v1001 = vmax.f32 %v569, 0.0
  %v1002 = vmax.f32 %v572, 0.0
  %v1003 = vmax.f32 %v577, 0.0
  %v1004 = vmax.f32 %v580, 0.0
  %v1005 = vmax.f32 %v585, 0.0
  %v1006 = vmax.f32 %v588, 0.0
  %v1007 = vmax.f32 %v593, 0.0
  %v1008 = vmax.f32 %v596, 0.0
  %v1009 = vmax.f32 %v601, 0.0
  %v1010 = vmax.f32 %v604, 0.0
  %v1011 = vmax.f32 %v609, 0.0
  %v1012 = vmax.f32 %v612, 0.0
  %v1013 = vmax.f32 %v617, 0.0
  %v1014 = vmax.f32 %v620, 0.0
  %v1015 = vmax.f32 %v625, 0.0
  %v1016 = vmax.f32 %v628, 0.0
  %v1017 = vmax.f32 %v633, 0.0
  %v1018 = vmax.f32 %v636, 0.0
  %v1019 = vmax.f32 %v641, 0.0
  %v1020 = vmax.f32 %v644, 0.0
  %v1021 = vmax.f32 %v649, 0.0
  %v1022 = vmax.f32 %v652, 0.0
  %v1023 = vmax.f32 %v657, 0.0
  %v1024 = vmax.f32 %v660, 0.0
  %v1025 = vmax.f32 %v665, 0.0
  %v1026 = vmax.f32 %v668, 0.0
  %v1027 = vmax.f32 %v673, 0.0
  %v1028 = vmax.f32 %v676, 0.0
  %v1029 = vmax.f32 %v681, 0.0
  %v1030 = vmax.f32 %v684, 0.0
  %v1031 = vmax.f32 %v689, 0.0
  %v1032 = vmax.f32 %v692, 0.0
  %v1033 = vmax.f32 %v697, 0.0
  %v1034 = vmax.f32 %v700, 0.0
  %v1035 = vmax.f32 %v705, 0.0
  %v1036 = vmax.f32 %v708, 0.0
  %v1037 = vmax.f32 %v713, 0.0
  %v1038 = vmax.f32 %v716, 0.0
  %v1039 = vmax.f32 %v721, 0.0
  %v1040 = vmax.f32 %v724, 0.0
  %v1041 = vmax.f32 %v729, 0.0
  %v1042 = vmax.f32 %v732, 0.0
  %v1043 = vmax.f32 %v737, 0.0
  %v1044 = vmax.f32 %v740, 0.0
  %v1045 = vmax.f32 %v745, 0.0
  %v1046 = vmax.f32 %v748, 0.0
  %v1047 = vmax.f32 %v753, 0.0
  %v1048 = vmax.f32 %v756, 0.0
  %v1049 = vmax.f32 %v761, 0.0
  %v1050 = vmax.f32 %v764, 0.0
  %v1051 = vmax.f32 %v769, 0.0
  %v1052 = vmax.f32 %v772, 0.0
  %v1053 = vmax.f32 %v777, 0.0
  %v1054 = vmax.f32 %v780, 0.0
  %v1055 = vmax.f32 %v785, 0.0
  %v1056 = vmax.f32 %v788, 0.0
  %v1057 = vmax.f32 %v793, 0.0
  %v1058 = vmax.f32 %v796, 0.0
  %v1059 = vmax.f32 %v801, 0.0
  %v1060 = vmax.f32 %v804, 0.0
  %v1061 = vmax.f32 %v809, 0.0
  %v1062 = vmax.f32 %v812, 0.0
  %v1063 = vmax.f32 %v817, 0.0
  %v1064 = vmax.f32 %v820, 0.0
  %v1065 = vmax.f32 %v825, 0.0
  %v1066 = vmax.f32 %v828, 0.0
  %v1067 = vmax.f32 %v833, 0.0
  %v1068 = vmax.f32 %v836, 0.0
  %v1069 = vmax.f32 %v841, 0.0
  %v1070 = vmax.f32 %v844, 0.0
  %v1071 = vmax.f32 %v849, 0.0
  %v1072 = vmax.f32 %v852, 0.0
  %v1073 = vmax.f32 %v857, 0.0
  %v1074 = vmax.f32 %v860, 0.0
  %v1075 = vmax.f32 %v865, 0.0
  %v1076 = vmax.f32 %v868, 0.0
  %v1077 = vmax.f32 %v873, 0.0
  %v1078 = vmax.f32 %v876, 0.0
  %v1079 = vmax.f32 %v881, 0.0
  %v1080 = vmax.f32 %v884, 0.0
  %v1081 = vmax.f32 %v889, 0.0
  %v1082 = vmax.f32 %v892, 0.0
  %v1083 = vmax.f32 %v897, 0.0
  %v1084 = vmax.f32 %v900, 0.0
  %v1085 = vmax.f32 %v905, 0.0
  %v1086 = vmax.f32 %v908, 0.0
  %v1087 = vmax.f32 %v913, 0.0
  %v1088 = vmax.f32 %v916, 0.0
  %v1089 = vmax.f32 %v921, 0.0
  %v1090 = vmax.f32 %v924, 0.0
  %v1091 = vmax.f32 %v929, 0.0
  %v1092 = vmax.f32 %v932, 0.0
  %v1093 = vmax.f32 %v937, 0.0
  %v1094 = vmax.f32 %v940, 0.0
  %v1095 = vmax.f32 %v945, 0.0
  %v1096 = vmax.f32 %v948, 0.0
  %v1097 = vmax.f32 %v953, 0.0
  %v1098 = vmax.f32 %v956, 0.0
  %v1099 = vmax.f32 %v961, 0.0
  %v1100 = vmax.f32 %v964, 0.0
  %v1101 = vmax.f32 %v969, 0.0
  %v1102 = vmax.f32 %v972, 0.0
  %v1103 = vpack.c.bf16 %v976, %v975
  %v1104 = vpack.c.bf16 %v978, %v977
  %v1105 = vpack.c.bf16 %v980, %v979
  %v1106 = vpack.c.bf16 %v982, %v981
  %v1107 = vpack.c.bf16 %v984, %v983
  %v1108 = vpack.c.bf16 %v986, %v985
  %v1109 = vpack.c.bf16 %v988, %v987
  %v1110 = vpack.c.bf16 %v990, %v989
  %v1111 = vpack.c.bf16 %v992, %v991
  %v1112 = vpack.c.bf16 %v994, %v993
  %v1113 = vpack.c.bf16 %v996, %v995
  %v1114 = vpack.c.bf16 %v998, %v997
  %v1115 = vpack.c.bf16 %v1000, %v999
  %v1116 = vpack.c.bf16 %v1002, %v1001
  %v1117 = vpack.c.bf16 %v1004, %v1003
  %v1118 = vpack.c.bf16 %v1006, %v1005
  %v1119 = vpack.c.bf16 %v1008, %v1007
  %v1120 = vpack.c.bf16 %v1010, %v1009
  %v1121 = vpack.c.bf16 %v1012, %v1011
  %v1122 = vpack.c.bf16 %v1014, %v1013
  %v1123 = vpack.c.bf16 %v1016, %v1015
  %v1124 = vpack.c.bf16 %v1018, %v1017
  %v1125 = vpack.c.bf16 %v1020, %v1019
  %v1126 = vpack.c.bf16 %v1022, %v1021
  %v1127 = vpack.c.bf16 %v1024, %v1023
  %v1128 = vpack.c.bf16 %v1026, %v1025
  %v1129 = vpack.c.bf16 %v1028, %v1027
  %v1130 = vpack.c.bf16 %v1030, %v1029
  %v1131 = vpack.c.bf16 %v1032, %v1031
  %v1132 = vpack.c.bf16 %v1034, %v1033
  %v1133 = vpack.c.bf16 %v1036, %v1035
  %v1134 = vpack.c.bf16 %v1038, %v1037
  %v1135 = vpack.c.bf16 %v1040, %v1039
  %v1136 = vpack.c.bf16 %v1042, %v1041
  %v1137 = vpack.c.bf16 %v1044, %v1043
  %v1138 = vpack.c.bf16 %v1046, %v1045
  %v1139 = vpack.c.bf16 %v1048, %v1047
  %v1140 = vpack.c.bf16 %v1050, %v1049
  %v1141 = vpack.c.bf16 %v1052, %v1051
  %v1142 = vpack.c.bf16 %v1054, %v1053
  %v1143 = vpack.c.bf16 %v1056, %v1055
  %v1144 = vpack.c.bf16 %v1058, %v1057
  %v1145 = vpack.c.bf16 %v1060, %v1059
  %v1146 = vpack.c.bf16 %v1062, %v1061
  %v1147 = vpack.c.bf16 %v1064, %v1063
  %v1148 = vpack.c.bf16 %v1066, %v1065
  %v1149 = vpack.c.bf16 %v1068, %v1067
  %v1150 = vpack.c.bf16 %v1070, %v1069
  %v1151 = vpack.c.bf16 %v1072, %v1071
  %v1152 = vpack.c.bf16 %v1074, %v1073
  %v1153 = vpack.c.bf16 %v1076, %v1075
  %v1154 = vpack.c.bf16 %v1078, %v1077
  %v1155 = vpack.c.bf16 %v1080, %v1079
  %v1156 = vpack.c.bf16 %v1082, %v1081
  %v1157 = vpack.c.bf16 %v1084, %v1083
  %v1158 = vpack.c.bf16 %v1086, %v1085
  %v1159 = vpack.c.bf16 %v1088, %v1087
  %v1160 = vpack.c.bf16 %v1090, %v1089
  %v1161 = vpack.c.bf16 %v1092, %v1091
  %v1162 = vpack.c.bf16 %v1094, %v1093
  %v1163 = vpack.c.bf16 %v1096, %v1095
  %v1164 = vpack.c.bf16 %v1098, %v1097
  %v1165 = vpack.c.bf16 %v1100, %v1099
  %v1166 = vpack.c.bf16 %v1102, %v1101
  %v1167 = vld [vmem:[%s3] sm:$0xf]
  %v1168 = vld [vmem:[%s3 + $0x4] sm:$0xf]
  %v1169 = vld [vmem:[%s3 + $0x8] sm:$0xf]
  %v1170 = vld [vmem:[%s3 + $0xc] sm:$0xf]
  %v1171 = vld [vmem:[%s3 + $0x10] sm:$0xf]
  %v1172 = vld [vmem:[%s3 + $0x14] sm:$0xf]
  %v1173 = vld [vmem:[%s3 + $0x18] sm:$0xf]
  %v1174 = vld [vmem:[%s3 + $0x1c] sm:$0xf]
  %v1175 = vld [vmem:[%s3 + $0x20] sm:$0xf]
  %v1176 = vld [vmem:[%s3 + $0x24] sm:$0xf]
  %v1177 = vld [vmem:[%s3 + $0x28] sm:$0xf]
  %v1178 = vld [vmem:[%s3 + $0x2c] sm:$0xf]
  %v1179 = vld [vmem:[%s3 + $0x30] sm:$0xf]
  %v1180 = vld [vmem:[%s3 + $0x34] sm:$0xf]
  %v1181 = vld [vmem:[%s3 + $0x38] sm:$0xf]
  %v1182 = vld [vmem:[%s3 + $0x3c] sm:$0xf]
  %v1183 = vld [vmem:[%s4] sm:$0x1]
  %v1185 = vlaneseq
  %v1186 = vshrl.u32 %v1185, 7
  %v1187 = vsub.s32 0, %v1186
  %v1188 = vrot.slane %v1183, %v1187
  %v1206 = vunpack.c.l.b16 %v1167
  %v1207 = vunpack.c.l.b16 %v1168
  %v1208 = vunpack.c.l.b16 %v1169
  %v1209 = vunpack.c.l.b16 %v1170
  %v1210 = vunpack.c.l.b16 %v1171
  %v1211 = vunpack.c.l.b16 %v1172
  %v1212 = vunpack.c.l.b16 %v1173
  %v1213 = vunpack.c.l.b16 %v1174
  %v1214 = vunpack.c.l.b16 %v1175
  %v1215 = vunpack.c.l.b16 %v1176
  %v1216 = vunpack.c.l.b16 %v1177
  %v1217 = vunpack.c.l.b16 %v1178
  %v1218 = vunpack.c.l.b16 %v1179
  %v1219 = vunpack.c.l.b16 %v1180
  %v1220 = vunpack.c.l.b16 %v1181
  %v1221 = vunpack.c.l.b16 %v1182
  %v1222 = vpack.c.b16 %v1207, %v1206
  %v1223 = vpack.c.b16 %v1209, %v1208
  %v1224 = vpack.c.b16 %v1211, %v1210
  %v1225 = vpack.c.b16 %v1213, %v1212
  %v1226 = vpack.c.b16 %v1215, %v1214
  %v1227 = vpack.c.b16 %v1217, %v1216
  %v1228 = vpack.c.b16 %v1219, %v1218
  %v1229 = vpack.c.b16 %v1221, %v1220
  %1238 = vmatprep.subr.bf16.mxu0 0
  %1239 = vmatpush1.bf16.msra.mxu0 %v1222
  %1240 = vmatprep.subr.bf16.mxu0 0
  %1241 = vmatpush1.bf16.msra.mxu0 %v1223
  %1242 = vmatprep.subr.bf16.mxu0 0
  %1243 = vmatpush1.bf16.msra.mxu0 %v1224
  %1244 = vmatprep.subr.bf16.mxu0 0
  %1245 = vmatpush1.bf16.msra.mxu0 %v1225
  %1246 = vmatprep.subr.bf16.mxu0 0
  %1247 = vmatpush1.bf16.msra.mxu0 %v1226
  %1248 = vmatprep.subr.bf16.mxu0 0
  %1249 = vmatpush1.bf16.msra.mxu0 %v1227
  %1250 = vmatprep.subr.bf16.mxu0 0
  %1251 = vmatpush1.bf16.msra.mxu0 %v1228
  %1252 = vmatprep.subr.bf16.mxu0 0
  %1253 = vmatpush1.bf16.msra.mxu0 %v1229
  %1254 = vmatprep.subr.bf16.mxu0 0
  %1255 = vmatpush1.bf16.msra.mxu0 0
  %1256 = vmatprep.subr.bf16.mxu0 0
  %1257 = vmatpush1.bf16.msra.mxu0 0
  %1258 = vmatprep.subr.bf16.mxu0 0
  %1259 = vmatpush1.bf16.msra.mxu0 0
  %1260 = vmatprep.subr.bf16.mxu0 0
  %1261 = vmatpush1.bf16.msra.mxu0 0
  %1262 = vmatprep.subr.bf16.mxu0 0
  %1263 = vmatpush1.bf16.msra.mxu0 0
  %1264 = vmatprep.subr.bf16.mxu0 0
  %1265 = vmatpush1.bf16.msra.mxu0 0
  %1266 = vmatprep.subr.bf16.mxu0 0
  %1267 = vmatpush1.bf16.msra.mxu0 0
  %1268 = vmatprep.subr.bf16.mxu0 0
  %1269 = vmatpush1.bf16.msra.mxu0 0
  %1270 = vmatprep.mubr.bf16.mxu0 0
  %1271 = vmatmul.mubr.bf16.gmra.mrb[0].mxu0 %v1103
  %v1272 = vpop.f32.mrb[0].mxu0
  %v1273 = vadd.f32 %v1188, %v1272
  %v1274 = vpop.f32.mrb[0].mxu0
  %v1275 = vpop.f32.mrb[0].mxu0
  %v1276 = vadd.f32 %v1188, %v1275
  %v1277 = vpop.f32.mrb[0].mxu0
  %1278 = vmatprep.mubr.bf16.mxu0 0
  %1279 = vmatmul.mubr.bf16.gmra.mrb[0].mxu0 %v1104
  %v1280 = vpop.f32.mrb[0].mxu0
  %v1281 = vadd.f32 %v1188, %v1280
  %v1282 = vpop.f32.mrb[0].mxu0
  %v1283 = vpop.f32.mrb[0].mxu0
  %v1284 = vadd.f32 %v1188, %v1283
  %v1285 = vpop.f32.mrb[0].mxu0
  %1286 = vmatprep.mubr.bf16.mxu0 0
  %1287 = vmatmul.mubr.bf16.gmra.mrb[0].mxu0 %v1105
  %v1288 = vpop.f32.mrb[0].mxu0
  %v1289 = vadd.f32 %v1188, %v1288
  %v1290 = vpop.f32.mrb[0].mxu0
  %v1291 = vpop.f32.mrb[0].mxu0
  %v1292 = vadd.f32 %v1188, %v1291
  %v1293 = vpop.f32.mrb[0].mxu0
  %1294 = vmatprep.mubr.bf16.mxu0 0
  %1295 = vmatmul.mubr.bf16.gmra.mrb[0].mxu0 %v1106
  %v1296 = vpop.f32.mrb[0].mxu0
  %v1297 = vadd.f32 %v1188, %v1296
  %v1298 = vpop.f32.mrb[0].mxu0
  %v1299 = vpop.f32.mrb[0].mxu0
  %v1300 = vadd.f32 %v1188, %v1299
  %v1301 = vpop.f32.mrb[0].mxu0
  %1302 = vmatprep.mubr.bf16.mxu0 0
  %1303 = vmatmul.mubr.bf16.gmra.mrb[0].mxu0 %v1107
  %v1304 = vpop.f32.mrb[0].mxu0
  %v1305 = vadd.f32 %v1188, %v1304
  %v1306 = vpop.f32.mrb[0].mxu0
  %v1307 = vpop.f32.mrb[0].mxu0
  %v1308 = vadd.f32 %v1188, %v1307
  %v1309 = vpop.f32.mrb[0].mxu0
  %1310 = vmatprep.mubr.bf16.mxu0 0
  %1311 = vmatmul.mubr.bf16.gmra.mrb[0].mxu0 %v1108
  %v1312 = vpop.f32.mrb[0].mxu0
  %v1313 = vadd.f32 %v1188, %v1312
  %v1314 = vpop.f32.mrb[0].mxu0
  %v1315 = vpop.f32.mrb[0].mxu0
  %v1316 = vadd.f32 %v1188, %v1315
  %v1317 = vpop.f32.mrb[0].mxu0
  %1318 = vmatprep.mubr.bf16.mxu0 0
  %1319 = vmatmul.mubr.bf16.gmra.mrb[0].mxu0 %v1109
  %v1320 = vpop.f32.mrb[0].mxu0
  %v1321 = vadd.f32 %v1188, %v1320
  %v1322 = vpop.f32.mrb[0].mxu0
  %v1323 = vpop.f32.mrb[0].mxu0
  %v1324 = vadd.f32 %v1188, %v1323
  %v1325 = vpop.f32.mrb[0].mxu0
  %1326 = vmatprep.mubr.bf16.mxu0 0
  %1327 = vmatmul.mubr.bf16.gmra.mrb[0].mxu0 %v1110
  %v1328 = vpop.f32.mrb[0].mxu0
  %v1329 = vadd.f32 %v1188, %v1328
  %v1330 = vpop.f32.mrb[0].mxu0
  %v1331 = vpop.f32.mrb[0].mxu0
  %v1332 = vadd.f32 %v1188, %v1331
  %v1333 = vpop.f32.mrb[0].mxu0
  %1334 = vmatprep.mubr.bf16.mxu0 0
  %1335 = vmatmul.mubr.bf16.gmra.mrb[0].mxu0 %v1111
  %v1336 = vpop.f32.mrb[0].mxu0
  %v1337 = vadd.f32 %v1188, %v1336
  %v1338 = vpop.f32.mrb[0].mxu0
  %v1339 = vpop.f32.mrb[0].mxu0
  %v1340 = vadd.f32 %v1188, %v1339
  %v1341 = vpop.f32.mrb[0].mxu0
  %1342 = vmatprep.mubr.bf16.mxu0 0
  %1343 = vmatmul.mubr.bf16.gmra.mrb[0].mxu0 %v1112
  %v1344 = vpop.f32.mrb[0].mxu0
  %v1345 = vadd.f32 %v1188, %v1344
  %v1346 = vpop.f32.mrb[0].mxu0
  %v1347 = vpop.f32.mrb[0].mxu0
  %v1348 = vadd.f32 %v1188, %v1347
  %v1349 = vpop.f32.mrb[0].mxu0
  %1350 = vmatprep.mubr.bf16.mxu0 0
  %1351 = vmatmul.mubr.bf16.gmra.mrb[0].mxu0 %v1113
  %v1352 = vpop.f32.mrb[0].mxu0
  %v1353 = vadd.f32 %v1188, %v1352
  %v1354 = vpop.f32.mrb[0].mxu0
  %v1355 = vpop.f32.mrb[0].mxu0
  %v1356 = vadd.f32 %v1188, %v1355
  %v1357 = vpop.f32.mrb[0].mxu0
  %1358 = vmatprep.mubr.bf16.mxu0 0
  %1359 = vmatmul.mubr.bf16.gmra.mrb[0].mxu0 %v1114
  %v1360 = vpop.f32.mrb[0].mxu0
  %v1361 = vadd.f32 %v1188, %v1360
  %v1362 = vpop.f32.mrb[0].mxu0
  %v1363 = vpop.f32.mrb[0].mxu0
  %v1364 = vadd.f32 %v1188, %v1363
  %v1365 = vpop.f32.mrb[0].mxu0
  %1366 = vmatprep.mubr.bf16.mxu0 0
  %1367 = vmatmul.mubr.bf16.gmra.mrb[0].mxu0 %v1115
  %v1368 = vpop.f32.mrb[0].mxu0
  %v1369 = vadd.f32 %v1188, %v1368
  %v1370 = vpop.f32.mrb[0].mxu0
  %v1371 = vpop.f32.mrb[0].mxu0
  %v1372 = vadd.f32 %v1188, %v1371
  %v1373 = vpop.f32.mrb[0].mxu0
  %1374 = vmatprep.mubr.bf16.mxu0 0
  %1375 = vmatmul.mubr.bf16.gmra.mrb[0].mxu0 %v1116
  %v1376 = vpop.f32.mrb[0].mxu0
  %v1377 = vadd.f32 %v1188, %v1376
  %v1378 = vpop.f32.mrb[0].mxu0
  %v1379 = vpop.f32.mrb[0].mxu0
  %v1380 = vadd.f32 %v1188, %v1379
  %v1381 = vpop.f32.mrb[0].mxu0
  %1382 = vmatprep.mubr.bf16.mxu0 0
  %1383 = vmatmul.mubr.bf16.gmra.mrb[0].mxu0 %v1117
  %v1384 = vpop.f32.mrb[0].mxu0
  %v1385 = vadd.f32 %v1188, %v1384
  %v1386 = vpop.f32.mrb[0].mxu0
  %v1387 = vpop.f32.mrb[0].mxu0
  %v1388 = vadd.f32 %v1188, %v1387
  %v1389 = vpop.f32.mrb[0].mxu0
  %1390 = vmatprep.mubr.bf16.mxu0 0
  %1391 = vmatmul.mubr.bf16.gmra.mrb[0].mxu0 %v1118
  %v1392 = vpop.f32.mrb[0].mxu0
  %v1393 = vadd.f32 %v1188, %v1392
  %v1394 = vpop.f32.mrb[0].mxu0
  %v1395 = vpop.f32.mrb[0].mxu0
  %v1396 = vadd.f32 %v1188, %v1395
  %v1397 = vpop.f32.mrb[0].mxu0
  %1398 = vmatprep.mubr.bf16.mxu0 0
  %1399 = vmatmul.mubr.bf16.gmra.mrb[0].mxu0 %v1119
  %v1400 = vpop.f32.mrb[0].mxu0
  %v1401 = vadd.f32 %v1188, %v1400
  %v1402 = vpop.f32.mrb[0].mxu0
  %v1403 = vpop.f32.mrb[0].mxu0
  %v1404 = vadd.f32 %v1188, %v1403
  %v1405 = vpop.f32.mrb[0].mxu0
  %1406 = vmatprep.mubr.bf16.mxu0 0
  %1407 = vmatmul.mubr.bf16.gmra.mrb[0].mxu0 %v1120
  %v1408 = vpop.f32.mrb[0].mxu0
  %v1409 = vadd.f32 %v1188, %v1408
  %v1410 = vpop.f32.mrb[0].mxu0
  %v1411 = vpop.f32.mrb[0].mxu0
  %v1412 = vadd.f32 %v1188, %v1411
  %v1413 = vpop.f32.mrb[0].mxu0
  %1414 = vmatprep.mubr.bf16.mxu0 0
  %1415 = vmatmul.mubr.bf16.gmra.mrb[0].mxu0 %v1121
  %v1416 = vpop.f32.mrb[0].mxu0
  %v1417 = vadd.f32 %v1188, %v1416
  %v1418 = vpop.f32.mrb[0].mxu0
  %v1419 = vpop.f32.mrb[0].mxu0
  %v1420 = vadd.f32 %v1188, %v1419
  %v1421 = vpop.f32.mrb[0].mxu0
  %1422 = vmatprep.mubr.bf16.mxu0 0
  %1423 = vmatmul.mubr.bf16.gmra.mrb[0].mxu0 %v1122
  %v1424 = vpop.f32.mrb[0].mxu0
  %v1425 = vadd.f32 %v1188, %v1424
  %v1426 = vpop.f32.mrb[0].mxu0
  %v1427 = vpop.f32.mrb[0].mxu0
  %v1428 = vadd.f32 %v1188, %v1427
  %v1429 = vpop.f32.mrb[0].mxu0
  %1430 = vmatprep.mubr.bf16.mxu0 0
  %1431 = vmatmul.mubr.bf16.gmra.mrb[0].mxu0 %v1123
  %v1432 = vpop.f32.mrb[0].mxu0
  %v1433 = vadd.f32 %v1188, %v1432
  %v1434 = vpop.f32.mrb[0].mxu0
  %v1435 = vpop.f32.mrb[0].mxu0
  %v1436 = vadd.f32 %v1188, %v1435
  %v1437 = vpop.f32.mrb[0].mxu0
  %1438 = vmatprep.mubr.bf16.mxu0 0
  %1439 = vmatmul.mubr.bf16.gmra.mrb[0].mxu0 %v1124
  %v1440 = vpop.f32.mrb[0].mxu0
  %v1441 = vadd.f32 %v1188, %v1440
  %v1442 = vpop.f32.mrb[0].mxu0
  %v1443 = vpop.f32.mrb[0].mxu0
  %v1444 = vadd.f32 %v1188, %v1443
  %v1445 = vpop.f32.mrb[0].mxu0
  %1446 = vmatprep.mubr.bf16.mxu0 0
  %1447 = vmatmul.mubr.bf16.gmra.mrb[0].mxu0 %v1125
  %v1448 = vpop.f32.mrb[0].mxu0
  %v1449 = vadd.f32 %v1188, %v1448
  %v1450 = vpop.f32.mrb[0].mxu0
  %v1451 = vpop.f32.mrb[0].mxu0
  %v1452 = vadd.f32 %v1188, %v1451
  %v1453 = vpop.f32.mrb[0].mxu0
  %1454 = vmatprep.mubr.bf16.mxu0 0
  %1455 = vmatmul.mubr.bf16.gmra.mrb[0].mxu0 %v1126
  %v1456 = vpop.f32.mrb[0].mxu0
  %v1457 = vadd.f32 %v1188, %v1456
  %v1458 = vpop.f32.mrb[0].mxu0
  %v1459 = vpop.f32.mrb[0].mxu0
  %v1460 = vadd.f32 %v1188, %v1459
  %v1461 = vpop.f32.mrb[0].mxu0
  %1462 = vmatprep.mubr.bf16.mxu0 0
  %1463 = vmatmul.mubr.bf16.gmra.mrb[0].mxu0 %v1127
  %v1464 = vpop.f32.mrb[0].mxu0
  %v1465 = vadd.f32 %v1188, %v1464
  %v1466 = vpop.f32.mrb[0].mxu0
  %v1467 = vpop.f32.mrb[0].mxu0
  %v1468 = vadd.f32 %v1188, %v1467
  %v1469 = vpop.f32.mrb[0].mxu0
  %1470 = vmatprep.mubr.bf16.mxu0 0
  %1471 = vmatmul.mubr.bf16.gmra.mrb[0].mxu0 %v1128
  %v1472 = vpop.f32.mrb[0].mxu0
  %v1473 = vadd.f32 %v1188, %v1472
  %v1474 = vpop.f32.mrb[0].mxu0
  %v1475 = vpop.f32.mrb[0].mxu0
  %v1476 = vadd.f32 %v1188, %v1475
  %v1477 = vpop.f32.mrb[0].mxu0
  %1478 = vmatprep.mubr.bf16.mxu0 0
  %1479 = vmatmul.mubr.bf16.gmra.mrb[0].mxu0 %v1129
  %v1480 = vpop.f32.mrb[0].mxu0
  %v1481 = vadd.f32 %v1188, %v1480
  %v1482 = vpop.f32.mrb[0].mxu0
  %v1483 = vpop.f32.mrb[0].mxu0
  %v1484 = vadd.f32 %v1188, %v1483
  %v1485 = vpop.f32.mrb[0].mxu0
  %1486 = vmatprep.mubr.bf16.mxu0 0
  %1487 = vmatmul.mubr.bf16.gmra.mrb[0].mxu0 %v1130
  %v1488 = vpop.f32.mrb[0].mxu0
  %v1489 = vadd.f32 %v1188, %v1488
  %v1490 = vpop.f32.mrb[0].mxu0
  %v1491 = vpop.f32.mrb[0].mxu0
  %v1492 = vadd.f32 %v1188, %v1491
  %v1493 = vpop.f32.mrb[0].mxu0
  %1494 = vmatprep.mubr.bf16.mxu0 0
  %1495 = vmatmul.mubr.bf16.gmra.mrb[0].mxu0 %v1131
  %v1496 = vpop.f32.mrb[0].mxu0
  %v1497 = vadd.f32 %v1188, %v1496
  %v1498 = vpop.f32.mrb[0].mxu0
  %v1499 = vpop.f32.mrb[0].mxu0
  %v1500 = vadd.f32 %v1188, %v1499
  %v1501 = vpop.f32.mrb[0].mxu0
  %1502 = vmatprep.mubr.bf16.mxu0 0
  %1503 = vmatmul.mubr.bf16.gmra.mrb[0].mxu0 %v1132
  %v1504 = vpop.f32.mrb[0].mxu0
  %v1505 = vadd.f32 %v1188, %v1504
  %v1506 = vpop.f32.mrb[0].mxu0
  %v1507 = vpop.f32.mrb[0].mxu0
  %v1508 = vadd.f32 %v1188, %v1507
  %v1509 = vpop.f32.mrb[0].mxu0
  %1510 = vmatprep.mubr.bf16.mxu0 0
  %1511 = vmatmul.mubr.bf16.gmra.mrb[0].mxu0 %v1133
  %v1512 = vpop.f32.mrb[0].mxu0
  %v1513 = vadd.f32 %v1188, %v1512
  %v1514 = vpop.f32.mrb[0].mxu0
  %v1515 = vpop.f32.mrb[0].mxu0
  %v1516 = vadd.f32 %v1188, %v1515
  %v1517 = vpop.f32.mrb[0].mxu0
  %1518 = vmatprep.mubr.bf16.mxu0 0
  %1519 = vmatmul.mubr.bf16.gmra.mrb[0].mxu0 %v1134
  %v1520 = vpop.f32.mrb[0].mxu0
  %v1521 = vadd.f32 %v1188, %v1520
  %v1522 = vpop.f32.mrb[0].mxu0
  %v1523 = vpop.f32.mrb[0].mxu0
  %v1524 = vadd.f32 %v1188, %v1523
  %v1525 = vpop.f32.mrb[0].mxu0
  %1526 = vmatprep.mubr.bf16.mxu0 0
  %1527 = vmatmul.mubr.bf16.gmra.mrb[0].mxu0 %v1135
  %v1528 = vpop.f32.mrb[0].mxu0
  %v1529 = vadd.f32 %v1188, %v1528
  %v1530 = vpop.f32.mrb[0].mxu0
  %v1531 = vpop.f32.mrb[0].mxu0
  %v1532 = vadd.f32 %v1188, %v1531
  %v1533 = vpop.f32.mrb[0].mxu0
  %1534 = vmatprep.mubr.bf16.mxu0 0
  %1535 = vmatmul.mubr.bf16.gmra.mrb[0].mxu0 %v1136
  %v1536 = vpop.f32.mrb[0].mxu0
  %v1537 = vadd.f32 %v1188, %v1536
  %v1538 = vpop.f32.mrb[0].mxu0
  %v1539 = vpop.f32.mrb[0].mxu0
  %v1540 = vadd.f32 %v1188, %v1539
  %v1541 = vpop.f32.mrb[0].mxu0
  %1542 = vmatprep.mubr.bf16.mxu0 0
  %1543 = vmatmul.mubr.bf16.gmra.mrb[0].mxu0 %v1137
  %v1544 = vpop.f32.mrb[0].mxu0
  %v1545 = vadd.f32 %v1188, %v1544
  %v1546 = vpop.f32.mrb[0].mxu0
  %v1547 = vpop.f32.mrb[0].mxu0
  %v1548 = vadd.f32 %v1188, %v1547
  %v1549 = vpop.f32.mrb[0].mxu0
  %1550 = vmatprep.mubr.bf16.mxu0 0
  %1551 = vmatmul.mubr.bf16.gmra.mrb[0].mxu0 %v1138
  %v1552 = vpop.f32.mrb[0].mxu0
  %v1553 = vadd.f32 %v1188, %v1552
  %v1554 = vpop.f32.mrb[0].mxu0
  %v1555 = vpop.f32.mrb[0].mxu0
  %v1556 = vadd.f32 %v1188, %v1555
  %v1557 = vpop.f32.mrb[0].mxu0
  %1558 = vmatprep.mubr.bf16.mxu0 0
  %1559 = vmatmul.mubr.bf16.gmra.mrb[0].mxu0 %v1139
  %v1560 = vpop.f32.mrb[0].mxu0
  %v1561 = vadd.f32 %v1188, %v1560
  %v1562 = vpop.f32.mrb[0].mxu0
  %v1563 = vpop.f32.mrb[0].mxu0
  %v1564 = vadd.f32 %v1188, %v1563
  %v1565 = vpop.f32.mrb[0].mxu0
  %1566 = vmatprep.mubr.bf16.mxu0 0
  %1567 = vmatmul.mubr.bf16.gmra.mrb[0].mxu0 %v1140
  %v1568 = vpop.f32.mrb[0].mxu0
  %v1569 = vadd.f32 %v1188, %v1568
  %v1570 = vpop.f32.mrb[0].mxu0
  %v1571 = vpop.f32.mrb[0].mxu0
  %v1572 = vadd.f32 %v1188, %v1571
  %v1573 = vpop.f32.mrb[0].mxu0
  %1574 = vmatprep.mubr.bf16.mxu0 0
  %1575 = vmatmul.mubr.bf16.gmra.mrb[0].mxu0 %v1141
  %v1576 = vpop.f32.mrb[0].mxu0
  %v1577 = vadd.f32 %v1188, %v1576
  %v1578 = vpop.f32.mrb[0].mxu0
  %v1579 = vpop.f32.mrb[0].mxu0
  %v1580 = vadd.f32 %v1188, %v1579
  %v1581 = vpop.f32.mrb[0].mxu0
  %1582 = vmatprep.mubr.bf16.mxu0 0
  %1583 = vmatmul.mubr.bf16.gmra.mrb[0].mxu0 %v1142
  %v1584 = vpop.f32.mrb[0].mxu0
  %v1585 = vadd.f32 %v1188, %v1584
  %v1586 = vpop.f32.mrb[0].mxu0
  %v1587 = vpop.f32.mrb[0].mxu0
  %v1588 = vadd.f32 %v1188, %v1587
  %v1589 = vpop.f32.mrb[0].mxu0
  %1590 = vmatprep.mubr.bf16.mxu0 0
  %1591 = vmatmul.mubr.bf16.gmra.mrb[0].mxu0 %v1143
  %v1592 = vpop.f32.mrb[0].mxu0
  %v1593 = vadd.f32 %v1188, %v1592
  %v1594 = vpop.f32.mrb[0].mxu0
  %v1595 = vpop.f32.mrb[0].mxu0
  %v1596 = vadd.f32 %v1188, %v1595
  %v1597 = vpop.f32.mrb[0].mxu0
  %1598 = vmatprep.mubr.bf16.mxu0 0
  %1599 = vmatmul.mubr.bf16.gmra.mrb[0].mxu0 %v1144
  %v1600 = vpop.f32.mrb[0].mxu0
  %v1601 = vadd.f32 %v1188, %v1600
  %v1602 = vpop.f32.mrb[0].mxu0
  %v1603 = vpop.f32.mrb[0].mxu0
  %v1604 = vadd.f32 %v1188, %v1603
  %v1605 = vpop.f32.mrb[0].mxu0
  %1606 = vmatprep.mubr.bf16.mxu0 0
  %1607 = vmatmul.mubr.bf16.gmra.mrb[0].mxu0 %v1145
  %v1608 = vpop.f32.mrb[0].mxu0
  %v1609 = vadd.f32 %v1188, %v1608
  %v1610 = vpop.f32.mrb[0].mxu0
  %v1611 = vpop.f32.mrb[0].mxu0
  %v1612 = vadd.f32 %v1188, %v1611
  %v1613 = vpop.f32.mrb[0].mxu0
  %1614 = vmatprep.mubr.bf16.mxu0 0
  %1615 = vmatmul.mubr.bf16.gmra.mrb[0].mxu0 %v1146
  %v1616 = vpop.f32.mrb[0].mxu0
  %v1617 = vadd.f32 %v1188, %v1616
  %v1618 = vpop.f32.mrb[0].mxu0
  %v1619 = vpop.f32.mrb[0].mxu0
  %v1620 = vadd.f32 %v1188, %v1619
  %v1621 = vpop.f32.mrb[0].mxu0
  %1622 = vmatprep.mubr.bf16.mxu0 0
  %1623 = vmatmul.mubr.bf16.gmra.mrb[0].mxu0 %v1147
  %v1624 = vpop.f32.mrb[0].mxu0
  %v1625 = vadd.f32 %v1188, %v1624
  %v1626 = vpop.f32.mrb[0].mxu0
  %v1627 = vpop.f32.mrb[0].mxu0
  %v1628 = vadd.f32 %v1188, %v1627
  %v1629 = vpop.f32.mrb[0].mxu0
  %1630 = vmatprep.mubr.bf16.mxu0 0
  %1631 = vmatmul.mubr.bf16.gmra.mrb[0].mxu0 %v1148
  %v1632 = vpop.f32.mrb[0].mxu0
  %v1633 = vadd.f32 %v1188, %v1632
  %v1634 = vpop.f32.mrb[0].mxu0
  %v1635 = vpop.f32.mrb[0].mxu0
  %v1636 = vadd.f32 %v1188, %v1635
  %v1637 = vpop.f32.mrb[0].mxu0
  %1638 = vmatprep.mubr.bf16.mxu0 0
  %1639 = vmatmul.mubr.bf16.gmra.mrb[0].mxu0 %v1149
  %v1640 = vpop.f32.mrb[0].mxu0
  %v1641 = vadd.f32 %v1188, %v1640
  %v1642 = vpop.f32.mrb[0].mxu0
  %v1643 = vpop.f32.mrb[0].mxu0
  %v1644 = vadd.f32 %v1188, %v1643
  %v1645 = vpop.f32.mrb[0].mxu0
  %1646 = vmatprep.mubr.bf16.mxu0 0
  %1647 = vmatmul.mubr.bf16.gmra.mrb[0].mxu0 %v1150
  %v1648 = vpop.f32.mrb[0].mxu0
  %v1649 = vadd.f32 %v1188, %v1648
  %v1650 = vpop.f32.mrb[0].mxu0
  %v1651 = vpop.f32.mrb[0].mxu0
  %v1652 = vadd.f32 %v1188, %v1651
  %v1653 = vpop.f32.mrb[0].mxu0
  %1654 = vmatprep.mubr.bf16.mxu0 0
  %1655 = vmatmul.mubr.bf16.gmra.mrb[0].mxu0 %v1151
  %v1656 = vpop.f32.mrb[0].mxu0
  %v1657 = vadd.f32 %v1188, %v1656
  %v1658 = vpop.f32.mrb[0].mxu0
  %v1659 = vpop.f32.mrb[0].mxu0
  %v1660 = vadd.f32 %v1188, %v1659
  %v1661 = vpop.f32.mrb[0].mxu0
  %1662 = vmatprep.mubr.bf16.mxu0 0
  %1663 = vmatmul.mubr.bf16.gmra.mrb[0].mxu0 %v1152
  %v1664 = vpop.f32.mrb[0].mxu0
  %v1665 = vadd.f32 %v1188, %v1664
  %v1666 = vpop.f32.mrb[0].mxu0
  %v1667 = vpop.f32.mrb[0].mxu0
  %v1668 = vadd.f32 %v1188, %v1667
  %v1669 = vpop.f32.mrb[0].mxu0
  %1670 = vmatprep.mubr.bf16.mxu0 0
  %1671 = vmatmul.mubr.bf16.gmra.mrb[0].mxu0 %v1153
  %v1672 = vpop.f32.mrb[0].mxu0
  %v1673 = vadd.f32 %v1188, %v1672
  %v1674 = vpop.f32.mrb[0].mxu0
  %v1675 = vpop.f32.mrb[0].mxu0
  %v1676 = vadd.f32 %v1188, %v1675
  %v1677 = vpop.f32.mrb[0].mxu0
  %1678 = vmatprep.mubr.bf16.mxu0 0
  %1679 = vmatmul.mubr.bf16.gmra.mrb[0].mxu0 %v1154
  %v1680 = vpop.f32.mrb[0].mxu0
  %v1681 = vadd.f32 %v1188, %v1680
  %v1682 = vpop.f32.mrb[0].mxu0
  %v1683 = vpop.f32.mrb[0].mxu0
  %v1684 = vadd.f32 %v1188, %v1683
  %v1685 = vpop.f32.mrb[0].mxu0
  %1686 = vmatprep.mubr.bf16.mxu0 0
  %1687 = vmatmul.mubr.bf16.gmra.mrb[0].mxu0 %v1155
  %v1688 = vpop.f32.mrb[0].mxu0
  %v1689 = vadd.f32 %v1188, %v1688
  %v1690 = vpop.f32.mrb[0].mxu0
  %v1691 = vpop.f32.mrb[0].mxu0
  %v1692 = vadd.f32 %v1188, %v1691
  %v1693 = vpop.f32.mrb[0].mxu0
  %1694 = vmatprep.mubr.bf16.mxu0 0
  %1695 = vmatmul.mubr.bf16.gmra.mrb[0].mxu0 %v1156
  %v1696 = vpop.f32.mrb[0].mxu0
  %v1697 = vadd.f32 %v1188, %v1696
  %v1698 = vpop.f32.mrb[0].mxu0
  %v1699 = vpop.f32.mrb[0].mxu0
  %v1700 = vadd.f32 %v1188, %v1699
  %v1701 = vpop.f32.mrb[0].mxu0
  %1702 = vmatprep.mubr.bf16.mxu0 0
  %1703 = vmatmul.mubr.bf16.gmra.mrb[0].mxu0 %v1157
  %v1704 = vpop.f32.mrb[0].mxu0
  %v1705 = vadd.f32 %v1188, %v1704
  %v1706 = vpop.f32.mrb[0].mxu0
  %v1707 = vpop.f32.mrb[0].mxu0
  %v1708 = vadd.f32 %v1188, %v1707
  %v1709 = vpop.f32.mrb[0].mxu0
  %1710 = vmatprep.mubr.bf16.mxu0 0
  %1711 = vmatmul.mubr.bf16.gmra.mrb[0].mxu0 %v1158
  %v1712 = vpop.f32.mrb[0].mxu0
  %v1713 = vadd.f32 %v1188, %v1712
  %v1714 = vpop.f32.mrb[0].mxu0
  %v1715 = vpop.f32.mrb[0].mxu0
  %v1716 = vadd.f32 %v1188, %v1715
  %v1717 = vpop.f32.mrb[0].mxu0
  %1718 = vmatprep.mubr.bf16.mxu0 0
  %1719 = vmatmul.mubr.bf16.gmra.mrb[0].mxu0 %v1159
  %v1720 = vpop.f32.mrb[0].mxu0
  %v1721 = vadd.f32 %v1188, %v1720
  %v1722 = vpop.f32.mrb[0].mxu0
  %v1723 = vpop.f32.mrb[0].mxu0
  %v1724 = vadd.f32 %v1188, %v1723
  %v1725 = vpop.f32.mrb[0].mxu0
  %1726 = vmatprep.mubr.bf16.mxu0 0
  %1727 = vmatmul.mubr.bf16.gmra.mrb[0].mxu0 %v1160
  %v1728 = vpop.f32.mrb[0].mxu0
  %v1729 = vadd.f32 %v1188, %v1728
  %v1730 = vpop.f32.mrb[0].mxu0
  %v1731 = vpop.f32.mrb[0].mxu0
  %v1732 = vadd.f32 %v1188, %v1731
  %v1733 = vpop.f32.mrb[0].mxu0
  %1734 = vmatprep.mubr.bf16.mxu0 0
  %1735 = vmatmul.mubr.bf16.gmra.mrb[0].mxu0 %v1161
  %v1736 = vpop.f32.mrb[0].mxu0
  %v1737 = vadd.f32 %v1188, %v1736
  %v1738 = vpop.f32.mrb[0].mxu0
  %v1739 = vpop.f32.mrb[0].mxu0
  %v1740 = vadd.f32 %v1188, %v1739
  %v1741 = vpop.f32.mrb[0].mxu0
  %1742 = vmatprep.mubr.bf16.mxu0 0
  %1743 = vmatmul.mubr.bf16.gmra.mrb[0].mxu0 %v1162
  %v1744 = vpop.f32.mrb[0].mxu0
  %v1745 = vadd.f32 %v1188, %v1744
  %v1746 = vpop.f32.mrb[0].mxu0
  %v1747 = vpop.f32.mrb[0].mxu0
  %v1748 = vadd.f32 %v1188, %v1747
  %v1749 = vpop.f32.mrb[0].mxu0
  %1750 = vmatprep.mubr.bf16.mxu0 0
  %1751 = vmatmul.mubr.bf16.gmra.mrb[0].mxu0 %v1163
  %v1752 = vpop.f32.mrb[0].mxu0
  %v1753 = vadd.f32 %v1188, %v1752
  %v1754 = vpop.f32.mrb[0].mxu0
  %v1755 = vpop.f32.mrb[0].mxu0
  %v1756 = vadd.f32 %v1188, %v1755
  %v1757 = vpop.f32.mrb[0].mxu0
  %1758 = vmatprep.mubr.bf16.mxu0 0
  %1759 = vmatmul.mubr.bf16.gmra.mrb[0].mxu0 %v1164
  %v1760 = vpop.f32.mrb[0].mxu0
  %v1761 = vadd.f32 %v1188, %v1760
  %v1762 = vpop.f32.mrb[0].mxu0
  %v1763 = vpop.f32.mrb[0].mxu0
  %v1764 = vadd.f32 %v1188, %v1763
  %v1765 = vpop.f32.mrb[0].mxu0
  %1766 = vmatprep.mubr.bf16.mxu0 0
  %1767 = vmatmul.mubr.bf16.gmra.mrb[0].mxu0 %v1165
  %v1768 = vpop.f32.mrb[0].mxu0
  %v1769 = vadd.f32 %v1188, %v1768
  %v1770 = vpop.f32.mrb[0].mxu0
  %v1771 = vpop.f32.mrb[0].mxu0
  %v1772 = vadd.f32 %v1188, %v1771
  %v1773 = vpop.f32.mrb[0].mxu0
  %1774 = vmatprep.mubr.bf16.mxu0 0
  %1775 = vmatmul.mubr.bf16.gmra.mrb[0].mxu0 %v1166
  %v1776 = vpop.f32.mrb[0].mxu0
  %v1777 = vadd.f32 %v1188, %v1776
  %v1778 = vpop.f32.mrb[0].mxu0
  %v1779 = vpop.f32.mrb[0].mxu0
  %v1780 = vadd.f32 %v1188, %v1779
  %v1781 = vpop.f32.mrb[0].mxu0
  %1782 = vdwg.mxu0
  %v1783 = vmax.f32 %v1273, 0.0
  %v1784 = vmax.f32 %v1276, 0.0
  %v1785 = vmax.f32 %v1281, 0.0
  %v1786 = vmax.f32 %v1284, 0.0
  %v1787 = vmax.f32 %v1289, 0.0
  %v1788 = vmax.f32 %v1292, 0.0
  %v1789 = vmax.f32 %v1297, 0.0
  %v1790 = vmax.f32 %v1300, 0.0
  %v1791 = vmax.f32 %v1305, 0.0
  %v1792 = vmax.f32 %v1308, 0.0
  %v1793 = vmax.f32 %v1313, 0.0
  %v1794 = vmax.f32 %v1316, 0.0
  %v1795 = vmax.f32 %v1321, 0.0
  %v1796 = vmax.f32 %v1324, 0.0
  %v1797 = vmax.f32 %v1329, 0.0
  %v1798 = vmax.f32 %v1332, 0.0
  %v1799 = vmax.f32 %v1337, 0.0
  %v1800 = vmax.f32 %v1340, 0.0
  %v1801 = vmax.f32 %v1345, 0.0
  %v1802 = vmax.f32 %v1348, 0.0
  %v1803 = vmax.f32 %v1353, 0.0
  %v1804 = vmax.f32 %v1356, 0.0
  %v1805 = vmax.f32 %v1361, 0.0
  %v1806 = vmax.f32 %v1364, 0.0
  %v1807 = vmax.f32 %v1369, 0.0
  %v1808 = vmax.f32 %v1372, 0.0
  %v1809 = vmax.f32 %v1377, 0.0
  %v1810 = vmax.f32 %v1380, 0.0
  %v1811 = vmax.f32 %v1385, 0.0
  %v1812 = vmax.f32 %v1388, 0.0
  %v1813 = vmax.f32 %v1393, 0.0
  %v1814 = vmax.f32 %v1396, 0.0
  %v1815 = vmax.f32 %v1401, 0.0
  %v1816 = vmax.f32 %v1404, 0.0
  %v1817 = vmax.f32 %v1409, 0.0
  %v1818 = vmax.f32 %v1412, 0.0
  %v1819 = vmax.f32 %v1417, 0.0
  %v1820 = vmax.f32 %v1420, 0.0
  %v1821 = vmax.f32 %v1425, 0.0
  %v1822 = vmax.f32 %v1428, 0.0
  %v1823 = vmax.f32 %v1433, 0.0
  %v1824 = vmax.f32 %v1436, 0.0
  %v1825 = vmax.f32 %v1441, 0.0
  %v1826 = vmax.f32 %v1444, 0.0
  %v1827 = vmax.f32 %v1449, 0.0
  %v1828 = vmax.f32 %v1452, 0.0
  %v1829 = vmax.f32 %v1457, 0.0
  %v1830 = vmax.f32 %v1460, 0.0
  %v1831 = vmax.f32 %v1465, 0.0
  %v1832 = vmax.f32 %v1468, 0.0
  %v1833 = vmax.f32 %v1473, 0.0
  %v1834 = vmax.f32 %v1476, 0.0
  %v1835 = vmax.f32 %v1481, 0.0
  %v1836 = vmax.f32 %v1484, 0.0
  %v1837 = vmax.f32 %v1489, 0.0
  %v1838 = vmax.f32 %v1492, 0.0
  %v1839 = vmax.f32 %v1497, 0.0
  %v1840 = vmax.f32 %v1500, 0.0
  %v1841 = vmax.f32 %v1505, 0.0
  %v1842 = vmax.f32 %v1508, 0.0
  %v1843 = vmax.f32 %v1513, 0.0
  %v1844 = vmax.f32 %v1516, 0.0
  %v1845 = vmax.f32 %v1521, 0.0
  %v1846 = vmax.f32 %v1524, 0.0
  %v1847 = vmax.f32 %v1529, 0.0
  %v1848 = vmax.f32 %v1532, 0.0
  %v1849 = vmax.f32 %v1537, 0.0
  %v1850 = vmax.f32 %v1540, 0.0
  %v1851 = vmax.f32 %v1545, 0.0
  %v1852 = vmax.f32 %v1548, 0.0
  %v1853 = vmax.f32 %v1553, 0.0
  %v1854 = vmax.f32 %v1556, 0.0
  %v1855 = vmax.f32 %v1561, 0.0
  %v1856 = vmax.f32 %v1564, 0.0
  %v1857 = vmax.f32 %v1569, 0.0
  %v1858 = vmax.f32 %v1572, 0.0
  %v1859 = vmax.f32 %v1577, 0.0
  %v1860 = vmax.f32 %v1580, 0.0
  %v1861 = vmax.f32 %v1585, 0.0
  %v1862 = vmax.f32 %v1588, 0.0
  %v1863 = vmax.f32 %v1593, 0.0
  %v1864 = vmax.f32 %v1596, 0.0
  %v1865 = vmax.f32 %v1601, 0.0
  %v1866 = vmax.f32 %v1604, 0.0
  %v1867 = vmax.f32 %v1609, 0.0
  %v1868 = vmax.f32 %v1612, 0.0
  %v1869 = vmax.f32 %v1617, 0.0
  %v1870 = vmax.f32 %v1620, 0.0
  %v1871 = vmax.f32 %v1625, 0.0
  %v1872 = vmax.f32 %v1628, 0.0
  %v1873 = vmax.f32 %v1633, 0.0
  %v1874 = vmax.f32 %v1636, 0.0
  %v1875 = vmax.f32 %v1641, 0.0
  %v1876 = vmax.f32 %v1644, 0.0
  %v1877 = vmax.f32 %v1649, 0.0
  %v1878 = vmax.f32 %v1652, 0.0
  %v1879 = vmax.f32 %v1657, 0.0
  %v1880 = vmax.f32 %v1660, 0.0
  %v1881 = vmax.f32 %v1665, 0.0
  %v1882 = vmax.f32 %v1668, 0.0
  %v1883 = vmax.f32 %v1673, 0.0
  %v1884 = vmax.f32 %v1676, 0.0
  %v1885 = vmax.f32 %v1681, 0.0
  %v1886 = vmax.f32 %v1684, 0.0
  %v1887 = vmax.f32 %v1689, 0.0
  %v1888 = vmax.f32 %v1692, 0.0
  %v1889 = vmax.f32 %v1697, 0.0
  %v1890 = vmax.f32 %v1700, 0.0
  %v1891 = vmax.f32 %v1705, 0.0
  %v1892 = vmax.f32 %v1708, 0.0
  %v1893 = vmax.f32 %v1713, 0.0
  %v1894 = vmax.f32 %v1716, 0.0
  %v1895 = vmax.f32 %v1721, 0.0
  %v1896 = vmax.f32 %v1724, 0.0
  %v1897 = vmax.f32 %v1729, 0.0
  %v1898 = vmax.f32 %v1732, 0.0
  %v1899 = vmax.f32 %v1737, 0.0
  %v1900 = vmax.f32 %v1740, 0.0
  %v1901 = vmax.f32 %v1745, 0.0
  %v1902 = vmax.f32 %v1748, 0.0
  %v1903 = vmax.f32 %v1753, 0.0
  %v1904 = vmax.f32 %v1756, 0.0
  %v1905 = vmax.f32 %v1761, 0.0
  %v1906 = vmax.f32 %v1764, 0.0
  %v1907 = vmax.f32 %v1769, 0.0
  %v1908 = vmax.f32 %v1772, 0.0
  %v1909 = vmax.f32 %v1777, 0.0
  %v1910 = vmax.f32 %v1780, 0.0
  %v1911 = vpack.c.bf16 %v1784, %v1783
  %v1912 = vpack.c.bf16 %v1786, %v1785
  %v1913 = vpack.c.bf16 %v1788, %v1787
  %v1914 = vpack.c.bf16 %v1790, %v1789
  %v1915 = vpack.c.bf16 %v1792, %v1791
  %v1916 = vpack.c.bf16 %v1794, %v1793
  %v1917 = vpack.c.bf16 %v1796, %v1795
  %v1918 = vpack.c.bf16 %v1798, %v1797
  %v1919 = vpack.c.bf16 %v1800, %v1799
  %v1920 = vpack.c.bf16 %v1802, %v1801
  %v1921 = vpack.c.bf16 %v1804, %v1803
  %v1922 = vpack.c.bf16 %v1806, %v1805
  %v1923 = vpack.c.bf16 %v1808, %v1807
  %v1924 = vpack.c.bf16 %v1810, %v1809
  %v1925 = vpack.c.bf16 %v1812, %v1811
  %v1926 = vpack.c.bf16 %v1814, %v1813
  %v1927 = vpack.c.bf16 %v1816, %v1815
  %v1928 = vpack.c.bf16 %v1818, %v1817
  %v1929 = vpack.c.bf16 %v1820, %v1819
  %v1930 = vpack.c.bf16 %v1822, %v1821
  %v1931 = vpack.c.bf16 %v1824, %v1823
  %v1932 = vpack.c.bf16 %v1826, %v1825
  %v1933 = vpack.c.bf16 %v1828, %v1827
  %v1934 = vpack.c.bf16 %v1830, %v1829
  %v1935 = vpack.c.bf16 %v1832, %v1831
  %v1936 = vpack.c.bf16 %v1834, %v1833
  %v1937 = vpack.c.bf16 %v1836, %v1835
  %v1938 = vpack.c.bf16 %v1838, %v1837
  %v1939 = vpack.c.bf16 %v1840, %v1839
  %v1940 = vpack.c.bf16 %v1842, %v1841
  %v1941 = vpack.c.bf16 %v1844, %v1843
  %v1942 = vpack.c.bf16 %v1846, %v1845
  %v1943 = vpack.c.bf16 %v1848, %v1847
  %v1944 = vpack.c.bf16 %v1850, %v1849
  %v1945 = vpack.c.bf16 %v1852, %v1851
  %v1946 = vpack.c.bf16 %v1854, %v1853
  %v1947 = vpack.c.bf16 %v1856, %v1855
  %v1948 = vpack.c.bf16 %v1858, %v1857
  %v1949 = vpack.c.bf16 %v1860, %v1859
  %v1950 = vpack.c.bf16 %v1862, %v1861
  %v1951 = vpack.c.bf16 %v1864, %v1863
  %v1952 = vpack.c.bf16 %v1866, %v1865
  %v1953 = vpack.c.bf16 %v1868, %v1867
  %v1954 = vpack.c.bf16 %v1870, %v1869
  %v1955 = vpack.c.bf16 %v1872, %v1871
  %v1956 = vpack.c.bf16 %v1874, %v1873
  %v1957 = vpack.c.bf16 %v1876, %v1875
  %v1958 = vpack.c.bf16 %v1878, %v1877
  %v1959 = vpack.c.bf16 %v1880, %v1879
  %v1960 = vpack.c.bf16 %v1882, %v1881
  %v1961 = vpack.c.bf16 %v1884, %v1883
  %v1962 = vpack.c.bf16 %v1886, %v1885
  %v1963 = vpack.c.bf16 %v1888, %v1887
  %v1964 = vpack.c.bf16 %v1890, %v1889
  %v1965 = vpack.c.bf16 %v1892, %v1891
  %v1966 = vpack.c.bf16 %v1894, %v1893
  %v1967 = vpack.c.bf16 %v1896, %v1895
  %v1968 = vpack.c.bf16 %v1898, %v1897
  %v1969 = vpack.c.bf16 %v1900, %v1899
  %v1970 = vpack.c.bf16 %v1902, %v1901
  %v1971 = vpack.c.bf16 %v1904, %v1903
  %v1972 = vpack.c.bf16 %v1906, %v1905
  %v1973 = vpack.c.bf16 %v1908, %v1907
  %v1974 = vpack.c.bf16 %v1910, %v1909
  %v1975 = vld [vmem:[%s5] sm:$0xf]
  %v1976 = vld [vmem:[%s5 + $0x4] sm:$0xf]
  %v1977 = vld [vmem:[%s5 + $0x8] sm:$0xf]
  %v1978 = vld [vmem:[%s5 + $0xc] sm:$0xf]
  %v1979 = vld [vmem:[%s5 + $0x10] sm:$0xf]
  %v1980 = vld [vmem:[%s5 + $0x14] sm:$0xf]
  %v1981 = vld [vmem:[%s5 + $0x18] sm:$0xf]
  %v1982 = vld [vmem:[%s5 + $0x1c] sm:$0xf]
  %v1983 = vld [vmem:[%s5 + $0x20] sm:$0xf]
  %v1984 = vld [vmem:[%s5 + $0x24] sm:$0xf]
  %v1985 = vld [vmem:[%s5 + $0x28] sm:$0xf]
  %v1986 = vld [vmem:[%s5 + $0x2c] sm:$0xf]
  %v1987 = vld [vmem:[%s5 + $0x30] sm:$0xf]
  %v1988 = vld [vmem:[%s5 + $0x34] sm:$0xf]
  %v1989 = vld [vmem:[%s5 + $0x38] sm:$0xf]
  %v1990 = vld [vmem:[%s5 + $0x3c] sm:$0xf]
  %v1991 = vld [vmem:[%s6] sm:$0x1]
  %v1993 = vlaneseq
  %v1994 = vshrl.u32 %v1993, 7
  %v1995 = vsub.s32 0, %v1994
  %v1996 = vrot.slane %v1991, %v1995
  %v2014 = vunpack.c.l.b16 %v1975
  %v2015 = vunpack.c.l.b16 %v1976
  %v2016 = vunpack.c.l.b16 %v1977
  %v2017 = vunpack.c.l.b16 %v1978
  %v2018 = vunpack.c.l.b16 %v1979
  %v2019 = vunpack.c.l.b16 %v1980
  %v2020 = vunpack.c.l.b16 %v1981
  %v2021 = vunpack.c.l.b16 %v1982
  %v2022 = vunpack.c.l.b16 %v1983
  %v2023 = vunpack.c.l.b16 %v1984
  %v2024 = vunpack.c.l.b16 %v1985
  %v2025 = vunpack.c.l.b16 %v1986
  %v2026 = vunpack.c.l.b16 %v1987
  %v2027 = vunpack.c.l.b16 %v1988
  %v2028 = vunpack.c.l.b16 %v1989
  %v2029 = vunpack.c.l.b16 %v1990
  %v2030 = vpack.c.b16 %v2015, %v2014
  %v2031 = vpack.c.b16 %v2017, %v2016
  %v2032 = vpack.c.b16 %v2019, %v2018
  %v2033 = vpack.c.b16 %v2021, %v2020
  %v2034 = vpack.c.b16 %v2023, %v2022
  %v2035 = vpack.c.b16 %v2025, %v2024
  %v2036 = vpack.c.b16 %v2027, %v2026
  %v2037 = vpack.c.b16 %v2029, %v2028
  %2046 = vmatprep.subr.bf16.mxu0 0
  %2047 = vmatpush1.bf16.msra.mxu0 %v2030
  %2048 = vmatprep.subr.bf16.mxu0 0
  %2049 = vmatpush1.bf16.msra.mxu0 %v2031
  %2050 = vmatprep.subr.bf16.mxu0 0
  %2051 = vmatpush1.bf16.msra.mxu0 %v2032
  %2052 = vmatprep.subr.bf16.mxu0 0
  %2053 = vmatpush1.bf16.msra.mxu0 %v2033
  %2054 = vmatprep.subr.bf16.mxu0 0
  %2055 = vmatpush1.bf16.msra.mxu0 %v2034
  %2056 = vmatprep.subr.bf16.mxu0 0
  %2057 = vmatpush1.bf16.msra.mxu0 %v2035
  %2058 = vmatprep.subr.bf16.mxu0 0
  %2059 = vmatpush1.bf16.msra.mxu0 %v2036
  %2060 = vmatprep.subr.bf16.mxu0 0
  %2061 = vmatpush1.bf16.msra.mxu0 %v2037
  %2062 = vmatprep.subr.bf16.mxu0 0
  %2063 = vmatpush1.bf16.msra.mxu0 0
  %2064 = vmatprep.subr.bf16.mxu0 0
  %2065 = vmatpush1.bf16.msra.mxu0 0
  %2066 = vmatprep.subr.bf16.mxu0 0
  %2067 = vmatpush1.bf16.msra.mxu0 0
  %2068 = vmatprep.subr.bf16.mxu0 0
  %2069 = vmatpush1.bf16.msra.mxu0 0
  %2070 = vmatprep.subr.bf16.mxu0 0
  %2071 = vmatpush1.bf16.msra.mxu0 0
  %2072 = vmatprep.subr.bf16.mxu0 0
  %2073 = vmatpush1.bf16.msra.mxu0 0
  %2074 = vmatprep.subr.bf16.mxu0 0
  %2075 = vmatpush1.bf16.msra.mxu0 0
  %2076 = vmatprep.subr.bf16.mxu0 0
  %2077 = vmatpush1.bf16.msra.mxu0 0
  %2078 = vmatprep.mubr.bf16.mxu0 0
  %2079 = vmatmul.mubr.bf16.gmra.mrb[0].mxu0 %v1911
  %v2080 = vpop.f32.mrb[0].mxu0
  %v2081 = vadd.f32 %v1996, %v2080
  %v2082 = vpop.f32.mrb[0].mxu0
  %v2083 = vpop.f32.mrb[0].mxu0
  %v2084 = vadd.f32 %v1996, %v2083
  %v2085 = vpop.f32.mrb[0].mxu0
  %2086 = vmatprep.mubr.bf16.mxu0 0
  %2087 = vmatmul.mubr.bf16.gmra.mrb[0].mxu0 %v1912
  %v2088 = vpop.f32.mrb[0].mxu0
  %v2089 = vadd.f32 %v1996, %v2088
  %v2090 = vpop.f32.mrb[0].mxu0
  %v2091 = vpop.f32.mrb[0].mxu0
  %v2092 = vadd.f32 %v1996, %v2091
  %v2093 = vpop.f32.mrb[0].mxu0
  %2094 = vmatprep.mubr.bf16.mxu0 0
  %2095 = vmatmul.mubr.bf16.gmra.mrb[0].mxu0 %v1913
  %v2096 = vpop.f32.mrb[0].mxu0
  %v2097 = vadd.f32 %v1996, %v2096
  %v2098 = vpop.f32.mrb[0].mxu0
  %v2099 = vpop.f32.mrb[0].mxu0
  %v2100 = vadd.f32 %v1996, %v2099
  %v2101 = vpop.f32.mrb[0].mxu0
  %2102 = vmatprep.mubr.bf16.mxu0 0
  %2103 = vmatmul.mubr.bf16.gmra.mrb[0].mxu0 %v1914
  %v2104 = vpop.f32.mrb[0].mxu0
  %v2105 = vadd.f32 %v1996, %v2104
  %v2106 = vpop.f32.mrb[0].mxu0
  %v2107 = vpop.f32.mrb[0].mxu0
  %v2108 = vadd.f32 %v1996, %v2107
  %v2109 = vpop.f32.mrb[0].mxu0
  %2110 = vmatprep.mubr.bf16.mxu0 0
  %2111 = vmatmul.mubr.bf16.gmra.mrb[0].mxu0 %v1915
  %v2112 = vpop.f32.mrb[0].mxu0
  %v2113 = vadd.f32 %v1996, %v2112
  %v2114 = vpop.f32.mrb[0].mxu0
  %v2115 = vpop.f32.mrb[0].mxu0
  %v2116 = vadd.f32 %v1996, %v2115
  %v2117 = vpop.f32.mrb[0].mxu0
  %2118 = vmatprep.mubr.bf16.mxu0 0
  %2119 = vmatmul.mubr.bf16.gmra.mrb[0].mxu0 %v1916
  %v2120 = vpop.f32.mrb[0].mxu0
  %v2121 = vadd.f32 %v1996, %v2120
  %v2122 = vpop.f32.mrb[0].mxu0
  %v2123 = vpop.f32.mrb[0].mxu0
  %v2124 = vadd.f32 %v1996, %v2123
  %v2125 = vpop.f32.mrb[0].mxu0
  %2126 = vmatprep.mubr.bf16.mxu0 0
  %2127 = vmatmul.mubr.bf16.gmra.mrb[0].mxu0 %v1917
  %v2128 = vpop.f32.mrb[0].mxu0
  %v2129 = vadd.f32 %v1996, %v2128
  %v2130 = vpop.f32.mrb[0].mxu0
  %v2131 = vpop.f32.mrb[0].mxu0
  %v2132 = vadd.f32 %v1996, %v2131
  %v2133 = vpop.f32.mrb[0].mxu0
  %2134 = vmatprep.mubr.bf16.mxu0 0
  %2135 = vmatmul.mubr.bf16.gmra.mrb[0].mxu0 %v1918
  %v2136 = vpop.f32.mrb[0].mxu0
  %v2137 = vadd.f32 %v1996, %v2136
  %v2138 = vpop.f32.mrb[0].mxu0
  %v2139 = vpop.f32.mrb[0].mxu0
  %v2140 = vadd.f32 %v1996, %v2139
  %v2141 = vpop.f32.mrb[0].mxu0
  %2142 = vmatprep.mubr.bf16.mxu0 0
  %2143 = vmatmul.mubr.bf16.gmra.mrb[0].mxu0 %v1919
  %v2144 = vpop.f32.mrb[0].mxu0
  %v2145 = vadd.f32 %v1996, %v2144
  %v2146 = vpop.f32.mrb[0].mxu0
  %v2147 = vpop.f32.mrb[0].mxu0
  %v2148 = vadd.f32 %v1996, %v2147
  %v2149 = vpop.f32.mrb[0].mxu0
  %2150 = vmatprep.mubr.bf16.mxu0 0
  %2151 = vmatmul.mubr.bf16.gmra.mrb[0].mxu0 %v1920
  %v2152 = vpop.f32.mrb[0].mxu0
  %v2153 = vadd.f32 %v1996, %v2152
  %v2154 = vpop.f32.mrb[0].mxu0
  %v2155 = vpop.f32.mrb[0].mxu0
  %v2156 = vadd.f32 %v1996, %v2155
  %v2157 = vpop.f32.mrb[0].mxu0
  %2158 = vmatprep.mubr.bf16.mxu0 0
  %2159 = vmatmul.mubr.bf16.gmra.mrb[0].mxu0 %v1921
  %v2160 = vpop.f32.mrb[0].mxu0
  %v2161 = vadd.f32 %v1996, %v2160
  %v2162 = vpop.f32.mrb[0].mxu0
  %v2163 = vpop.f32.mrb[0].mxu0
  %v2164 = vadd.f32 %v1996, %v2163
  %v2165 = vpop.f32.mrb[0].mxu0
  %2166 = vmatprep.mubr.bf16.mxu0 0
  %2167 = vmatmul.mubr.bf16.gmra.mrb[0].mxu0 %v1922
  %v2168 = vpop.f32.mrb[0].mxu0
  %v2169 = vadd.f32 %v1996, %v2168
  %v2170 = vpop.f32.mrb[0].mxu0
  %v2171 = vpop.f32.mrb[0].mxu0
  %v2172 = vadd.f32 %v1996, %v2171
  %v2173 = vpop.f32.mrb[0].mxu0
  %2174 = vmatprep.mubr.bf16.mxu0 0
  %2175 = vmatmul.mubr.bf16.gmra.mrb[0].mxu0 %v1923
  %v2176 = vpop.f32.mrb[0].mxu0
  %v2177 = vadd.f32 %v1996, %v2176
  %v2178 = vpop.f32.mrb[0].mxu0
  %v2179 = vpop.f32.mrb[0].mxu0
  %v2180 = vadd.f32 %v1996, %v2179
  %v2181 = vpop.f32.mrb[0].mxu0
  %2182 = vmatprep.mubr.bf16.mxu0 0
  %2183 = vmatmul.mubr.bf16.gmra.mrb[0].mxu0 %v1924
  %v2184 = vpop.f32.mrb[0].mxu0
  %v2185 = vadd.f32 %v1996, %v2184
  %v2186 = vpop.f32.mrb[0].mxu0
  %v2187 = vpop.f32.mrb[0].mxu0
  %v2188 = vadd.f32 %v1996, %v2187
  %v2189 = vpop.f32.mrb[0].mxu0
  %2190 = vmatprep.mubr.bf16.mxu0 0
  %2191 = vmatmul.mubr.bf16.gmra.mrb[0].mxu0 %v1925
  %v2192 = vpop.f32.mrb[0].mxu0
  %v2193 = vadd.f32 %v1996, %v2192
  %v2194 = vpop.f32.mrb[0].mxu0
  %v2195 = vpop.f32.mrb[0].mxu0
  %v2196 = vadd.f32 %v1996, %v2195
  %v2197 = vpop.f32.mrb[0].mxu0
  %2198 = vmatprep.mubr.bf16.mxu0 0
  %2199 = vmatmul.mubr.bf16.gmra.mrb[0].mxu0 %v1926
  %v2200 = vpop.f32.mrb[0].mxu0
  %v2201 = vadd.f32 %v1996, %v2200
  %v2202 = vpop.f32.mrb[0].mxu0
  %v2203 = vpop.f32.mrb[0].mxu0
  %v2204 = vadd.f32 %v1996, %v2203
  %v2205 = vpop.f32.mrb[0].mxu0
  %2206 = vmatprep.mubr.bf16.mxu0 0
  %2207 = vmatmul.mubr.bf16.gmra.mrb[0].mxu0 %v1927
  %v2208 = vpop.f32.mrb[0].mxu0
  %v2209 = vadd.f32 %v1996, %v2208
  %v2210 = vpop.f32.mrb[0].mxu0
  %v2211 = vpop.f32.mrb[0].mxu0
  %v2212 = vadd.f32 %v1996, %v2211
  %v2213 = vpop.f32.mrb[0].mxu0
  %2214 = vmatprep.mubr.bf16.mxu0 0
  %2215 = vmatmul.mubr.bf16.gmra.mrb[0].mxu0 %v1928
  %v2216 = vpop.f32.mrb[0].mxu0
  %v2217 = vadd.f32 %v1996, %v2216
  %v2218 = vpop.f32.mrb[0].mxu0
  %v2219 = vpop.f32.mrb[0].mxu0
  %v2220 = vadd.f32 %v1996, %v2219
  %v2221 = vpop.f32.mrb[0].mxu0
  %2222 = vmatprep.mubr.bf16.mxu0 0
  %2223 = vmatmul.mubr.bf16.gmra.mrb[0].mxu0 %v1929
  %v2224 = vpop.f32.mrb[0].mxu0
  %v2225 = vadd.f32 %v1996, %v2224
  %v2226 = vpop.f32.mrb[0].mxu0
  %v2227 = vpop.f32.mrb[0].mxu0
  %v2228 = vadd.f32 %v1996, %v2227
  %v2229 = vpop.f32.mrb[0].mxu0
  %2230 = vmatprep.mubr.bf16.mxu0 0
  %2231 = vmatmul.mubr.bf16.gmra.mrb[0].mxu0 %v1930
  %v2232 = vpop.f32.mrb[0].mxu0
  %v2233 = vadd.f32 %v1996, %v2232
  %v2234 = vpop.f32.mrb[0].mxu0
  %v2235 = vpop.f32.mrb[0].mxu0
  %v2236 = vadd.f32 %v1996, %v2235
  %v2237 = vpop.f32.mrb[0].mxu0
  %2238 = vmatprep.mubr.bf16.mxu0 0
  %2239 = vmatmul.mubr.bf16.gmra.mrb[0].mxu0 %v1931
  %v2240 = vpop.f32.mrb[0].mxu0
  %v2241 = vadd.f32 %v1996, %v2240
  %v2242 = vpop.f32.mrb[0].mxu0
  %v2243 = vpop.f32.mrb[0].mxu0
  %v2244 = vadd.f32 %v1996, %v2243
  %v2245 = vpop.f32.mrb[0].mxu0
  %2246 = vmatprep.mubr.bf16.mxu0 0
  %2247 = vmatmul.mubr.bf16.gmra.mrb[0].mxu0 %v1932
  %v2248 = vpop.f32.mrb[0].mxu0
  %v2249 = vadd.f32 %v1996, %v2248
  %v2250 = vpop.f32.mrb[0].mxu0
  %v2251 = vpop.f32.mrb[0].mxu0
  %v2252 = vadd.f32 %v1996, %v2251
  %v2253 = vpop.f32.mrb[0].mxu0
  %2254 = vmatprep.mubr.bf16.mxu0 0
  %2255 = vmatmul.mubr.bf16.gmra.mrb[0].mxu0 %v1933
  %v2256 = vpop.f32.mrb[0].mxu0
  %v2257 = vadd.f32 %v1996, %v2256
  %v2258 = vpop.f32.mrb[0].mxu0
  %v2259 = vpop.f32.mrb[0].mxu0
  %v2260 = vadd.f32 %v1996, %v2259
  %v2261 = vpop.f32.mrb[0].mxu0
  %2262 = vmatprep.mubr.bf16.mxu0 0
  %2263 = vmatmul.mubr.bf16.gmra.mrb[0].mxu0 %v1934
  %v2264 = vpop.f32.mrb[0].mxu0
  %v2265 = vadd.f32 %v1996, %v2264
  %v2266 = vpop.f32.mrb[0].mxu0
  %v2267 = vpop.f32.mrb[0].mxu0
  %v2268 = vadd.f32 %v1996, %v2267
  %v2269 = vpop.f32.mrb[0].mxu0
  %2270 = vmatprep.mubr.bf16.mxu0 0
  %2271 = vmatmul.mubr.bf16.gmra.mrb[0].mxu0 %v1935
  %v2272 = vpop.f32.mrb[0].mxu0
  %v2273 = vadd.f32 %v1996, %v2272
  %v2274 = vpop.f32.mrb[0].mxu0
  %v2275 = vpop.f32.mrb[0].mxu0
  %v2276 = vadd.f32 %v1996, %v2275
  %v2277 = vpop.f32.mrb[0].mxu0
  %2278 = vmatprep.mubr.bf16.mxu0 0
  %2279 = vmatmul.mubr.bf16.gmra.mrb[0].mxu0 %v1936
  %v2280 = vpop.f32.mrb[0].mxu0
  %v2281 = vadd.f32 %v1996, %v2280
  %v2282 = vpop.f32.mrb[0].mxu0
  %v2283 = vpop.f32.mrb[0].mxu0
  %v2284 = vadd.f32 %v1996, %v2283
  %v2285 = vpop.f32.mrb[0].mxu0
  %2286 = vmatprep.mubr.bf16.mxu0 0
  %2287 = vmatmul.mubr.bf16.gmra.mrb[0].mxu0 %v1937
  %v2288 = vpop.f32.mrb[0].mxu0
  %v2289 = vadd.f32 %v1996, %v2288
  %v2290 = vpop.f32.mrb[0].mxu0
  %v2291 = vpop.f32.mrb[0].mxu0
  %v2292 = vadd.f32 %v1996, %v2291
  %v2293 = vpop.f32.mrb[0].mxu0
  %2294 = vmatprep.mubr.bf16.mxu0 0
  %2295 = vmatmul.mubr.bf16.gmra.mrb[0].mxu0 %v1938
  %v2296 = vpop.f32.mrb[0].mxu0
  %v2297 = vadd.f32 %v1996, %v2296
  %v2298 = vpop.f32.mrb[0].mxu0
  %v2299 = vpop.f32.mrb[0].mxu0
  %v2300 = vadd.f32 %v1996, %v2299
  %v2301 = vpop.f32.mrb[0].mxu0
  %2302 = vmatprep.mubr.bf16.mxu0 0
  %2303 = vmatmul.mubr.bf16.gmra.mrb[0].mxu0 %v1939
  %v2304 = vpop.f32.mrb[0].mxu0
  %v2305 = vadd.f32 %v1996, %v2304
  %v2306 = vpop.f32.mrb[0].mxu0
  %v2307 = vpop.f32.mrb[0].mxu0
  %v2308 = vadd.f32 %v1996, %v2307
  %v2309 = vpop.f32.mrb[0].mxu0
  %2310 = vmatprep.mubr.bf16.mxu0 0
  %2311 = vmatmul.mubr.bf16.gmra.mrb[0].mxu0 %v1940
  %v2312 = vpop.f32.mrb[0].mxu0
  %v2313 = vadd.f32 %v1996, %v2312
  %v2314 = vpop.f32.mrb[0].mxu0
  %v2315 = vpop.f32.mrb[0].mxu0
  %v2316 = vadd.f32 %v1996, %v2315
  %v2317 = vpop.f32.mrb[0].mxu0
  %2318 = vmatprep.mubr.bf16.mxu0 0
  %2319 = vmatmul.mubr.bf16.gmra.mrb[0].mxu0 %v1941
  %v2320 = vpop.f32.mrb[0].mxu0
  %v2321 = vadd.f32 %v1996, %v2320
  %v2322 = vpop.f32.mrb[0].mxu0
  %v2323 = vpop.f32.mrb[0].mxu0
  %v2324 = vadd.f32 %v1996, %v2323
  %v2325 = vpop.f32.mrb[0].mxu0
  %2326 = vmatprep.mubr.bf16.mxu0 0
  %2327 = vmatmul.mubr.bf16.gmra.mrb[0].mxu0 %v1942
  %v2328 = vpop.f32.mrb[0].mxu0
  %v2329 = vadd.f32 %v1996, %v2328
  %v2330 = vpop.f32.mrb[0].mxu0
  %v2331 = vpop.f32.mrb[0].mxu0
  %v2332 = vadd.f32 %v1996, %v2331
  %v2333 = vpop.f32.mrb[0].mxu0
  %2334 = vmatprep.mubr.bf16.mxu0 0
  %2335 = vmatmul.mubr.bf16.gmra.mrb[0].mxu0 %v1943
  %v2336 = vpop.f32.mrb[0].mxu0
  %v2337 = vadd.f32 %v1996, %v2336
  %v2338 = vpop.f32.mrb[0].mxu0
  %v2339 = vpop.f32.mrb[0].mxu0
  %v2340 = vadd.f32 %v1996, %v2339
  %v2341 = vpop.f32.mrb[0].mxu0
  %2342 = vmatprep.mubr.bf16.mxu0 0
  %2343 = vmatmul.mubr.bf16.gmra.mrb[0].mxu0 %v1944
  %v2344 = vpop.f32.mrb[0].mxu0
  %v2345 = vadd.f32 %v1996, %v2344
  %v2346 = vpop.f32.mrb[0].mxu0
  %v2347 = vpop.f32.mrb[0].mxu0
  %v2348 = vadd.f32 %v1996, %v2347
  %v2349 = vpop.f32.mrb[0].mxu0
  %2350 = vmatprep.mubr.bf16.mxu0 0
  %2351 = vmatmul.mubr.bf16.gmra.mrb[0].mxu0 %v1945
  %v2352 = vpop.f32.mrb[0].mxu0
  %v2353 = vadd.f32 %v1996, %v2352
  %v2354 = vpop.f32.mrb[0].mxu0
  %v2355 = vpop.f32.mrb[0].mxu0
  %v2356 = vadd.f32 %v1996, %v2355
  %v2357 = vpop.f32.mrb[0].mxu0
  %2358 = vmatprep.mubr.bf16.mxu0 0
  %2359 = vmatmul.mubr.bf16.gmra.mrb[0].mxu0 %v1946
  %v2360 = vpop.f32.mrb[0].mxu0
  %v2361 = vadd.f32 %v1996, %v2360
  %v2362 = vpop.f32.mrb[0].mxu0
  %v2363 = vpop.f32.mrb[0].mxu0
  %v2364 = vadd.f32 %v1996, %v2363
  %v2365 = vpop.f32.mrb[0].mxu0
  %2366 = vmatprep.mubr.bf16.mxu0 0
  %2367 = vmatmul.mubr.bf16.gmra.mrb[0].mxu0 %v1947
  %v2368 = vpop.f32.mrb[0].mxu0
  %v2369 = vadd.f32 %v1996, %v2368
  %v2370 = vpop.f32.mrb[0].mxu0
  %v2371 = vpop.f32.mrb[0].mxu0
  %v2372 = vadd.f32 %v1996, %v2371
  %v2373 = vpop.f32.mrb[0].mxu0
  %2374 = vmatprep.mubr.bf16.mxu0 0
  %2375 = vmatmul.mubr.bf16.gmra.mrb[0].mxu0 %v1948
  %v2376 = vpop.f32.mrb[0].mxu0
  %v2377 = vadd.f32 %v1996, %v2376
  %v2378 = vpop.f32.mrb[0].mxu0
  %v2379 = vpop.f32.mrb[0].mxu0
  %v2380 = vadd.f32 %v1996, %v2379
  %v2381 = vpop.f32.mrb[0].mxu0
  %2382 = vmatprep.mubr.bf16.mxu0 0
  %2383 = vmatmul.mubr.bf16.gmra.mrb[0].mxu0 %v1949
  %v2384 = vpop.f32.mrb[0].mxu0
  %v2385 = vadd.f32 %v1996, %v2384
  %v2386 = vpop.f32.mrb[0].mxu0
  %v2387 = vpop.f32.mrb[0].mxu0
  %v2388 = vadd.f32 %v1996, %v2387
  %v2389 = vpop.f32.mrb[0].mxu0
  %2390 = vmatprep.mubr.bf16.mxu0 0
  %2391 = vmatmul.mubr.bf16.gmra.mrb[0].mxu0 %v1950
  %v2392 = vpop.f32.mrb[0].mxu0
  %v2393 = vadd.f32 %v1996, %v2392
  %v2394 = vpop.f32.mrb[0].mxu0
  %v2395 = vpop.f32.mrb[0].mxu0
  %v2396 = vadd.f32 %v1996, %v2395
  %v2397 = vpop.f32.mrb[0].mxu0
  %2398 = vmatprep.mubr.bf16.mxu0 0
  %2399 = vmatmul.mubr.bf16.gmra.mrb[0].mxu0 %v1951
  %v2400 = vpop.f32.mrb[0].mxu0
  %v2401 = vadd.f32 %v1996, %v2400
  %v2402 = vpop.f32.mrb[0].mxu0
  %v2403 = vpop.f32.mrb[0].mxu0
  %v2404 = vadd.f32 %v1996, %v2403
  %v2405 = vpop.f32.mrb[0].mxu0
  %2406 = vmatprep.mubr.bf16.mxu0 0
  %2407 = vmatmul.mubr.bf16.gmra.mrb[0].mxu0 %v1952
  %v2408 = vpop.f32.mrb[0].mxu0
  %v2409 = vadd.f32 %v1996, %v2408
  %v2410 = vpop.f32.mrb[0].mxu0
  %v2411 = vpop.f32.mrb[0].mxu0
  %v2412 = vadd.f32 %v1996, %v2411
  %v2413 = vpop.f32.mrb[0].mxu0
  %2414 = vmatprep.mubr.bf16.mxu0 0
  %2415 = vmatmul.mubr.bf16.gmra.mrb[0].mxu0 %v1953
  %v2416 = vpop.f32.mrb[0].mxu0
  %v2417 = vadd.f32 %v1996, %v2416
  %v2418 = vpop.f32.mrb[0].mxu0
  %v2419 = vpop.f32.mrb[0].mxu0
  %v2420 = vadd.f32 %v1996, %v2419
  %v2421 = vpop.f32.mrb[0].mxu0
  %2422 = vmatprep.mubr.bf16.mxu0 0
  %2423 = vmatmul.mubr.bf16.gmra.mrb[0].mxu0 %v1954
  %v2424 = vpop.f32.mrb[0].mxu0
  %v2425 = vadd.f32 %v1996, %v2424
  %v2426 = vpop.f32.mrb[0].mxu0
  %v2427 = vpop.f32.mrb[0].mxu0
  %v2428 = vadd.f32 %v1996, %v2427
  %v2429 = vpop.f32.mrb[0].mxu0
  %2430 = vmatprep.mubr.bf16.mxu0 0
  %2431 = vmatmul.mubr.bf16.gmra.mrb[0].mxu0 %v1955
  %v2432 = vpop.f32.mrb[0].mxu0
  %v2433 = vadd.f32 %v1996, %v2432
  %v2434 = vpop.f32.mrb[0].mxu0
  %v2435 = vpop.f32.mrb[0].mxu0
  %v2436 = vadd.f32 %v1996, %v2435
  %v2437 = vpop.f32.mrb[0].mxu0
  %2438 = vmatprep.mubr.bf16.mxu0 0
  %2439 = vmatmul.mubr.bf16.gmra.mrb[0].mxu0 %v1956
  %v2440 = vpop.f32.mrb[0].mxu0
  %v2441 = vadd.f32 %v1996, %v2440
  %v2442 = vpop.f32.mrb[0].mxu0
  %v2443 = vpop.f32.mrb[0].mxu0
  %v2444 = vadd.f32 %v1996, %v2443
  %v2445 = vpop.f32.mrb[0].mxu0
  %2446 = vmatprep.mubr.bf16.mxu0 0
  %2447 = vmatmul.mubr.bf16.gmra.mrb[0].mxu0 %v1957
  %v2448 = vpop.f32.mrb[0].mxu0
  %v2449 = vadd.f32 %v1996, %v2448
  %v2450 = vpop.f32.mrb[0].mxu0
  %v2451 = vpop.f32.mrb[0].mxu0
  %v2452 = vadd.f32 %v1996, %v2451
  %v2453 = vpop.f32.mrb[0].mxu0
  %2454 = vmatprep.mubr.bf16.mxu0 0
  %2455 = vmatmul.mubr.bf16.gmra.mrb[0].mxu0 %v1958
  %v2456 = vpop.f32.mrb[0].mxu0
  %v2457 = vadd.f32 %v1996, %v2456
  %v2458 = vpop.f32.mrb[0].mxu0
  %v2459 = vpop.f32.mrb[0].mxu0
  %v2460 = vadd.f32 %v1996, %v2459
  %v2461 = vpop.f32.mrb[0].mxu0
  %2462 = vmatprep.mubr.bf16.mxu0 0
  %2463 = vmatmul.mubr.bf16.gmra.mrb[0].mxu0 %v1959
  %v2464 = vpop.f32.mrb[0].mxu0
  %v2465 = vadd.f32 %v1996, %v2464
  %v2466 = vpop.f32.mrb[0].mxu0
  %v2467 = vpop.f32.mrb[0].mxu0
  %v2468 = vadd.f32 %v1996, %v2467
  %v2469 = vpop.f32.mrb[0].mxu0
  %2470 = vmatprep.mubr.bf16.mxu0 0
  %2471 = vmatmul.mubr.bf16.gmra.mrb[0].mxu0 %v1960
  %v2472 = vpop.f32.mrb[0].mxu0
  %v2473 = vadd.f32 %v1996, %v2472
  %v2474 = vpop.f32.mrb[0].mxu0
  %v2475 = vpop.f32.mrb[0].mxu0
  %v2476 = vadd.f32 %v1996, %v2475
  %v2477 = vpop.f32.mrb[0].mxu0
  %2478 = vmatprep.mubr.bf16.mxu0 0
  %2479 = vmatmul.mubr.bf16.gmra.mrb[0].mxu0 %v1961
  %v2480 = vpop.f32.mrb[0].mxu0
  %v2481 = vadd.f32 %v1996, %v2480
  %v2482 = vpop.f32.mrb[0].mxu0
  %v2483 = vpop.f32.mrb[0].mxu0
  %v2484 = vadd.f32 %v1996, %v2483
  %v2485 = vpop.f32.mrb[0].mxu0
  %2486 = vmatprep.mubr.bf16.mxu0 0
  %2487 = vmatmul.mubr.bf16.gmra.mrb[0].mxu0 %v1962
  %v2488 = vpop.f32.mrb[0].mxu0
  %v2489 = vadd.f32 %v1996, %v2488
  %v2490 = vpop.f32.mrb[0].mxu0
  %v2491 = vpop.f32.mrb[0].mxu0
  %v2492 = vadd.f32 %v1996, %v2491
  %v2493 = vpop.f32.mrb[0].mxu0
  %2494 = vmatprep.mubr.bf16.mxu0 0
  %2495 = vmatmul.mubr.bf16.gmra.mrb[0].mxu0 %v1963
  %v2496 = vpop.f32.mrb[0].mxu0
  %v2497 = vadd.f32 %v1996, %v2496
  %v2498 = vpop.f32.mrb[0].mxu0
  %v2499 = vpop.f32.mrb[0].mxu0
  %v2500 = vadd.f32 %v1996, %v2499
  %v2501 = vpop.f32.mrb[0].mxu0
  %2502 = vmatprep.mubr.bf16.mxu0 0
  %2503 = vmatmul.mubr.bf16.gmra.mrb[0].mxu0 %v1964
  %v2504 = vpop.f32.mrb[0].mxu0
  %v2505 = vadd.f32 %v1996, %v2504
  %v2506 = vpop.f32.mrb[0].mxu0
  %v2507 = vpop.f32.mrb[0].mxu0
  %v2508 = vadd.f32 %v1996, %v2507
  %v2509 = vpop.f32.mrb[0].mxu0
  %2510 = vmatprep.mubr.bf16.mxu0 0
  %2511 = vmatmul.mubr.bf16.gmra.mrb[0].mxu0 %v1965
  %v2512 = vpop.f32.mrb[0].mxu0
  %v2513 = vadd.f32 %v1996, %v2512
  %v2514 = vpop.f32.mrb[0].mxu0
  %v2515 = vpop.f32.mrb[0].mxu0
  %v2516 = vadd.f32 %v1996, %v2515
  %v2517 = vpop.f32.mrb[0].mxu0
  %2518 = vmatprep.mubr.bf16.mxu0 0
  %2519 = vmatmul.mubr.bf16.gmra.mrb[0].mxu0 %v1966
  %v2520 = vpop.f32.mrb[0].mxu0
  %v2521 = vadd.f32 %v1996, %v2520
  %v2522 = vpop.f32.mrb[0].mxu0
  %v2523 = vpop.f32.mrb[0].mxu0
  %v2524 = vadd.f32 %v1996, %v2523
  %v2525 = vpop.f32.mrb[0].mxu0
  %2526 = vmatprep.mubr.bf16.mxu0 0
  %2527 = vmatmul.mubr.bf16.gmra.mrb[0].mxu0 %v1967
  %v2528 = vpop.f32.mrb[0].mxu0
  %v2529 = vadd.f32 %v1996, %v2528
  %v2530 = vpop.f32.mrb[0].mxu0
  %v2531 = vpop.f32.mrb[0].mxu0
  %v2532 = vadd.f32 %v1996, %v2531
  %v2533 = vpop.f32.mrb[0].mxu0
  %2534 = vmatprep.mubr.bf16.mxu0 0
  %2535 = vmatmul.mubr.bf16.gmra.mrb[0].mxu0 %v1968
  %v2536 = vpop.f32.mrb[0].mxu0
  %v2537 = vadd.f32 %v1996, %v2536
  %v2538 = vpop.f32.mrb[0].mxu0
  %v2539 = vpop.f32.mrb[0].mxu0
  %v2540 = vadd.f32 %v1996, %v2539
  %v2541 = vpop.f32.mrb[0].mxu0
  %2542 = vmatprep.mubr.bf16.mxu0 0
  %2543 = vmatmul.mubr.bf16.gmra.mrb[0].mxu0 %v1969
  %v2544 = vpop.f32.mrb[0].mxu0
  %v2545 = vadd.f32 %v1996, %v2544
  %v2546 = vpop.f32.mrb[0].mxu0
  %v2547 = vpop.f32.mrb[0].mxu0
  %v2548 = vadd.f32 %v1996, %v2547
  %v2549 = vpop.f32.mrb[0].mxu0
  %2550 = vmatprep.mubr.bf16.mxu0 0
  %2551 = vmatmul.mubr.bf16.gmra.mrb[0].mxu0 %v1970
  %v2552 = vpop.f32.mrb[0].mxu0
  %v2553 = vadd.f32 %v1996, %v2552
  %v2554 = vpop.f32.mrb[0].mxu0
  %v2555 = vpop.f32.mrb[0].mxu0
  %v2556 = vadd.f32 %v1996, %v2555
  %v2557 = vpop.f32.mrb[0].mxu0
  %2558 = vmatprep.mubr.bf16.mxu0 0
  %2559 = vmatmul.mubr.bf16.gmra.mrb[0].mxu0 %v1971
  %v2560 = vpop.f32.mrb[0].mxu0
  %v2561 = vadd.f32 %v1996, %v2560
  %v2562 = vpop.f32.mrb[0].mxu0
  %v2563 = vpop.f32.mrb[0].mxu0
  %v2564 = vadd.f32 %v1996, %v2563
  %v2565 = vpop.f32.mrb[0].mxu0
  %2566 = vmatprep.mubr.bf16.mxu0 0
  %2567 = vmatmul.mubr.bf16.gmra.mrb[0].mxu0 %v1972
  %v2568 = vpop.f32.mrb[0].mxu0
  %v2569 = vadd.f32 %v1996, %v2568
  %v2570 = vpop.f32.mrb[0].mxu0
  %v2571 = vpop.f32.mrb[0].mxu0
  %v2572 = vadd.f32 %v1996, %v2571
  %v2573 = vpop.f32.mrb[0].mxu0
  %2574 = vmatprep.mubr.bf16.mxu0 0
  %2575 = vmatmul.mubr.bf16.gmra.mrb[0].mxu0 %v1973
  %v2576 = vpop.f32.mrb[0].mxu0
  %v2577 = vadd.f32 %v1996, %v2576
  %v2578 = vpop.f32.mrb[0].mxu0
  %v2579 = vpop.f32.mrb[0].mxu0
  %v2580 = vadd.f32 %v1996, %v2579
  %v2581 = vpop.f32.mrb[0].mxu0
  %2582 = vmatprep.mubr.bf16.mxu0 0
  %2583 = vmatmul.mubr.bf16.gmra.mrb[0].mxu0 %v1974
  %v2584 = vpop.f32.mrb[0].mxu0
  %v2585 = vadd.f32 %v1996, %v2584
  %v2586 = vpop.f32.mrb[0].mxu0
  %v2587 = vpop.f32.mrb[0].mxu0
  %v2588 = vadd.f32 %v1996, %v2587
  %v2589 = vpop.f32.mrb[0].mxu0
  %2590 = vdwg.mxu0
  %v2591 = vmax.f32 %v2081, 0.0
  %v2592 = vmax.f32 %v2084, 0.0
  %v2593 = vmax.f32 %v2089, 0.0
  %v2594 = vmax.f32 %v2092, 0.0
  %v2595 = vmax.f32 %v2097, 0.0
  %v2596 = vmax.f32 %v2100, 0.0
  %v2597 = vmax.f32 %v2105, 0.0
  %v2598 = vmax.f32 %v2108, 0.0
  %v2599 = vmax.f32 %v2113, 0.0
  %v2600 = vmax.f32 %v2116, 0.0
  %v2601 = vmax.f32 %v2121, 0.0
  %v2602 = vmax.f32 %v2124, 0.0
  %v2603 = vmax.f32 %v2129, 0.0
  %v2604 = vmax.f32 %v2132, 0.0
  %v2605 = vmax.f32 %v2137, 0.0
  %v2606 = vmax.f32 %v2140, 0.0
  %v2607 = vmax.f32 %v2145, 0.0
  %v2608 = vmax.f32 %v2148, 0.0
  %v2609 = vmax.f32 %v2153, 0.0
  %v2610 = vmax.f32 %v2156, 0.0
  %v2611 = vmax.f32 %v2161, 0.0
  %v2612 = vmax.f32 %v2164, 0.0
  %v2613 = vmax.f32 %v2169, 0.0
  %v2614 = vmax.f32 %v2172, 0.0
  %v2615 = vmax.f32 %v2177, 0.0
  %v2616 = vmax.f32 %v2180, 0.0
  %v2617 = vmax.f32 %v2185, 0.0
  %v2618 = vmax.f32 %v2188, 0.0
  %v2619 = vmax.f32 %v2193, 0.0
  %v2620 = vmax.f32 %v2196, 0.0
  %v2621 = vmax.f32 %v2201, 0.0
  %v2622 = vmax.f32 %v2204, 0.0
  %v2623 = vmax.f32 %v2209, 0.0
  %v2624 = vmax.f32 %v2212, 0.0
  %v2625 = vmax.f32 %v2217, 0.0
  %v2626 = vmax.f32 %v2220, 0.0
  %v2627 = vmax.f32 %v2225, 0.0
  %v2628 = vmax.f32 %v2228, 0.0
  %v2629 = vmax.f32 %v2233, 0.0
  %v2630 = vmax.f32 %v2236, 0.0
  %v2631 = vmax.f32 %v2241, 0.0
  %v2632 = vmax.f32 %v2244, 0.0
  %v2633 = vmax.f32 %v2249, 0.0
  %v2634 = vmax.f32 %v2252, 0.0
  %v2635 = vmax.f32 %v2257, 0.0
  %v2636 = vmax.f32 %v2260, 0.0
  %v2637 = vmax.f32 %v2265, 0.0
  %v2638 = vmax.f32 %v2268, 0.0
  %v2639 = vmax.f32 %v2273, 0.0
  %v2640 = vmax.f32 %v2276, 0.0
  %v2641 = vmax.f32 %v2281, 0.0
  %v2642 = vmax.f32 %v2284, 0.0
  %v2643 = vmax.f32 %v2289, 0.0
  %v2644 = vmax.f32 %v2292, 0.0
  %v2645 = vmax.f32 %v2297, 0.0
  %v2646 = vmax.f32 %v2300, 0.0
  %v2647 = vmax.f32 %v2305, 0.0
  %v2648 = vmax.f32 %v2308, 0.0
  %v2649 = vmax.f32 %v2313, 0.0
  %v2650 = vmax.f32 %v2316, 0.0
  %v2651 = vmax.f32 %v2321, 0.0
  %v2652 = vmax.f32 %v2324, 0.0
  %v2653 = vmax.f32 %v2329, 0.0
  %v2654 = vmax.f32 %v2332, 0.0
  %v2655 = vmax.f32 %v2337, 0.0
  %v2656 = vmax.f32 %v2340, 0.0
  %v2657 = vmax.f32 %v2345, 0.0
  %v2658 = vmax.f32 %v2348, 0.0
  %v2659 = vmax.f32 %v2353, 0.0
  %v2660 = vmax.f32 %v2356, 0.0
  %v2661 = vmax.f32 %v2361, 0.0
  %v2662 = vmax.f32 %v2364, 0.0
  %v2663 = vmax.f32 %v2369, 0.0
  %v2664 = vmax.f32 %v2372, 0.0
  %v2665 = vmax.f32 %v2377, 0.0
  %v2666 = vmax.f32 %v2380, 0.0
  %v2667 = vmax.f32 %v2385, 0.0
  %v2668 = vmax.f32 %v2388, 0.0
  %v2669 = vmax.f32 %v2393, 0.0
  %v2670 = vmax.f32 %v2396, 0.0
  %v2671 = vmax.f32 %v2401, 0.0
  %v2672 = vmax.f32 %v2404, 0.0
  %v2673 = vmax.f32 %v2409, 0.0
  %v2674 = vmax.f32 %v2412, 0.0
  %v2675 = vmax.f32 %v2417, 0.0
  %v2676 = vmax.f32 %v2420, 0.0
  %v2677 = vmax.f32 %v2425, 0.0
  %v2678 = vmax.f32 %v2428, 0.0
  %v2679 = vmax.f32 %v2433, 0.0
  %v2680 = vmax.f32 %v2436, 0.0
  %v2681 = vmax.f32 %v2441, 0.0
  %v2682 = vmax.f32 %v2444, 0.0
  %v2683 = vmax.f32 %v2449, 0.0
  %v2684 = vmax.f32 %v2452, 0.0
  %v2685 = vmax.f32 %v2457, 0.0
  %v2686 = vmax.f32 %v2460, 0.0
  %v2687 = vmax.f32 %v2465, 0.0
  %v2688 = vmax.f32 %v2468, 0.0
  %v2689 = vmax.f32 %v2473, 0.0
  %v2690 = vmax.f32 %v2476, 0.0
  %v2691 = vmax.f32 %v2481, 0.0
  %v2692 = vmax.f32 %v2484, 0.0
  %v2693 = vmax.f32 %v2489, 0.0
  %v2694 = vmax.f32 %v2492, 0.0
  %v2695 = vmax.f32 %v2497, 0.0
  %v2696 = vmax.f32 %v2500, 0.0
  %v2697 = vmax.f32 %v2505, 0.0
  %v2698 = vmax.f32 %v2508, 0.0
  %v2699 = vmax.f32 %v2513, 0.0
  %v2700 = vmax.f32 %v2516, 0.0
  %v2701 = vmax.f32 %v2521, 0.0
  %v2702 = vmax.f32 %v2524, 0.0
  %v2703 = vmax.f32 %v2529, 0.0
  %v2704 = vmax.f32 %v2532, 0.0
  %v2705 = vmax.f32 %v2537, 0.0
  %v2706 = vmax.f32 %v2540, 0.0
  %v2707 = vmax.f32 %v2545, 0.0
  %v2708 = vmax.f32 %v2548, 0.0
  %v2709 = vmax.f32 %v2553, 0.0
  %v2710 = vmax.f32 %v2556, 0.0
  %v2711 = vmax.f32 %v2561, 0.0
  %v2712 = vmax.f32 %v2564, 0.0
  %v2713 = vmax.f32 %v2569, 0.0
  %v2714 = vmax.f32 %v2572, 0.0
  %v2715 = vmax.f32 %v2577, 0.0
  %v2716 = vmax.f32 %v2580, 0.0
  %v2717 = vmax.f32 %v2585, 0.0
  %v2718 = vmax.f32 %v2588, 0.0
  %v2719 = vpack.c.bf16 %v2592, %v2591
  %v2720 = vpack.c.bf16 %v2594, %v2593
  %v2721 = vpack.c.bf16 %v2596, %v2595
  %v2722 = vpack.c.bf16 %v2598, %v2597
  %v2723 = vpack.c.bf16 %v2600, %v2599
  %v2724 = vpack.c.bf16 %v2602, %v2601
  %v2725 = vpack.c.bf16 %v2604, %v2603
  %v2726 = vpack.c.bf16 %v2606, %v2605
  %v2727 = vpack.c.bf16 %v2608, %v2607
  %v2728 = vpack.c.bf16 %v2610, %v2609
  %v2729 = vpack.c.bf16 %v2612, %v2611
  %v2730 = vpack.c.bf16 %v2614, %v2613
  %v2731 = vpack.c.bf16 %v2616, %v2615
  %v2732 = vpack.c.bf16 %v2618, %v2617
  %v2733 = vpack.c.bf16 %v2620, %v2619
  %v2734 = vpack.c.bf16 %v2622, %v2621
  %v2735 = vpack.c.bf16 %v2624, %v2623
  %v2736 = vpack.c.bf16 %v2626, %v2625
  %v2737 = vpack.c.bf16 %v2628, %v2627
  %v2738 = vpack.c.bf16 %v2630, %v2629
  %v2739 = vpack.c.bf16 %v2632, %v2631
  %v2740 = vpack.c.bf16 %v2634, %v2633
  %v2741 = vpack.c.bf16 %v2636, %v2635
  %v2742 = vpack.c.bf16 %v2638, %v2637
  %v2743 = vpack.c.bf16 %v2640, %v2639
  %v2744 = vpack.c.bf16 %v2642, %v2641
  %v2745 = vpack.c.bf16 %v2644, %v2643
  %v2746 = vpack.c.bf16 %v2646, %v2645
  %v2747 = vpack.c.bf16 %v2648, %v2647
  %v2748 = vpack.c.bf16 %v2650, %v2649
  %v2749 = vpack.c.bf16 %v2652, %v2651
  %v2750 = vpack.c.bf16 %v2654, %v2653
  %v2751 = vpack.c.bf16 %v2656, %v2655
  %v2752 = vpack.c.bf16 %v2658, %v2657
  %v2753 = vpack.c.bf16 %v2660, %v2659
  %v2754 = vpack.c.bf16 %v2662, %v2661
  %v2755 = vpack.c.bf16 %v2664, %v2663
  %v2756 = vpack.c.bf16 %v2666, %v2665
  %v2757 = vpack.c.bf16 %v2668, %v2667
  %v2758 = vpack.c.bf16 %v2670, %v2669
  %v2759 = vpack.c.bf16 %v2672, %v2671
  %v2760 = vpack.c.bf16 %v2674, %v2673
  %v2761 = vpack.c.bf16 %v2676, %v2675
  %v2762 = vpack.c.bf16 %v2678, %v2677
  %v2763 = vpack.c.bf16 %v2680, %v2679
  %v2764 = vpack.c.bf16 %v2682, %v2681
  %v2765 = vpack.c.bf16 %v2684, %v2683
  %v2766 = vpack.c.bf16 %v2686, %v2685
  %v2767 = vpack.c.bf16 %v2688, %v2687
  %v2768 = vpack.c.bf16 %v2690, %v2689
  %v2769 = vpack.c.bf16 %v2692, %v2691
  %v2770 = vpack.c.bf16 %v2694, %v2693
  %v2771 = vpack.c.bf16 %v2696, %v2695
  %v2772 = vpack.c.bf16 %v2698, %v2697
  %v2773 = vpack.c.bf16 %v2700, %v2699
  %v2774 = vpack.c.bf16 %v2702, %v2701
  %v2775 = vpack.c.bf16 %v2704, %v2703
  %v2776 = vpack.c.bf16 %v2706, %v2705
  %v2777 = vpack.c.bf16 %v2708, %v2707
  %v2778 = vpack.c.bf16 %v2710, %v2709
  %v2779 = vpack.c.bf16 %v2712, %v2711
  %v2780 = vpack.c.bf16 %v2714, %v2713
  %v2781 = vpack.c.bf16 %v2716, %v2715
  %v2782 = vpack.c.bf16 %v2718, %v2717
  %v2783 = vld [vmem:[%s7] sm:$0xf]
  %v2784 = vld [vmem:[%s7 + $0x4] sm:$0xf]
  %v2785 = vld [vmem:[%s7 + $0x8] sm:$0xf]
  %v2786 = vld [vmem:[%s7 + $0xc] sm:$0xf]
  %v2787 = vld [vmem:[%s7 + $0x10] sm:$0xf]
  %v2788 = vld [vmem:[%s7 + $0x14] sm:$0xf]
  %v2789 = vld [vmem:[%s7 + $0x18] sm:$0xf]
  %v2790 = vld [vmem:[%s7 + $0x1c] sm:$0xf]
  %v2791 = vld [vmem:[%s7 + $0x20] sm:$0xf]
  %v2792 = vld [vmem:[%s7 + $0x24] sm:$0xf]
  %v2793 = vld [vmem:[%s7 + $0x28] sm:$0xf]
  %v2794 = vld [vmem:[%s7 + $0x2c] sm:$0xf]
  %v2795 = vld [vmem:[%s7 + $0x30] sm:$0xf]
  %v2796 = vld [vmem:[%s7 + $0x34] sm:$0xf]
  %v2797 = vld [vmem:[%s7 + $0x38] sm:$0xf]
  %v2798 = vld [vmem:[%s7 + $0x3c] sm:$0xf]
  %v2799 = vld [vmem:[%s8] sm:$0x1]
  %v2801 = vlaneseq
  %v2802 = vshrl.u32 %v2801, 7
  %v2803 = vsub.s32 0, %v2802
  %v2804 = vrot.slane %v2799, %v2803
  %v2822 = vunpack.c.l.b16 %v2783
  %v2823 = vunpack.c.l.b16 %v2784
  %v2824 = vunpack.c.l.b16 %v2785
  %v2825 = vunpack.c.l.b16 %v2786
  %v2826 = vunpack.c.l.b16 %v2787
  %v2827 = vunpack.c.l.b16 %v2788
  %v2828 = vunpack.c.l.b16 %v2789
  %v2829 = vunpack.c.l.b16 %v2790
  %v2830 = vunpack.c.l.b16 %v2791
  %v2831 = vunpack.c.l.b16 %v2792
  %v2832 = vunpack.c.l.b16 %v2793
  %v2833 = vunpack.c.l.b16 %v2794
  %v2834 = vunpack.c.l.b16 %v2795
  %v2835 = vunpack.c.l.b16 %v2796
  %v2836 = vunpack.c.l.b16 %v2797
  %v2837 = vunpack.c.l.b16 %v2798
  %v2838 = vpack.c.b16 %v2823, %v2822
  %v2839 = vpack.c.b16 %v2825, %v2824
  %v2840 = vpack.c.b16 %v2827, %v2826
  %v2841 = vpack.c.b16 %v2829, %v2828
  %v2842 = vpack.c.b16 %v2831, %v2830
  %v2843 = vpack.c.b16 %v2833, %v2832
  %v2844 = vpack.c.b16 %v2835, %v2834
  %v2845 = vpack.c.b16 %v2837, %v2836
  %2854 = vmatprep.subr.bf16.mxu0 0
  %2855 = vmatpush1.bf16.msra.mxu0 %v2838
  %2856 = vmatprep.subr.bf16.mxu0 0
  %2857 = vmatpush1.bf16.msra.mxu0 %v2839
  %2858 = vmatprep.subr.bf16.mxu0 0
  %2859 = vmatpush1.bf16.msra.mxu0 %v2840
  %2860 = vmatprep.subr.bf16.mxu0 0
  %2861 = vmatpush1.bf16.msra.mxu0 %v2841
  %2862 = vmatprep.subr.bf16.mxu0 0
  %2863 = vmatpush1.bf16.msra.mxu0 %v2842
  %2864 = vmatprep.subr.bf16.mxu0 0
  %2865 = vmatpush1.bf16.msra.mxu0 %v2843
  %2866 = vmatprep.subr.bf16.mxu0 0
  %2867 = vmatpush1.bf16.msra.mxu0 %v2844
  %2868 = vmatprep.subr.bf16.mxu0 0
  %2869 = vmatpush1.bf16.msra.mxu0 %v2845
  %2870 = vmatprep.subr.bf16.mxu0 0
  %2871 = vmatpush1.bf16.msra.mxu0 0
  %2872 = vmatprep.subr.bf16.mxu0 0
  %2873 = vmatpush1.bf16.msra.mxu0 0
  %2874 = vmatprep.subr.bf16.mxu0 0
  %2875 = vmatpush1.bf16.msra.mxu0 0
  %2876 = vmatprep.subr.bf16.mxu0 0
  %2877 = vmatpush1.bf16.msra.mxu0 0
  %2878 = vmatprep.subr.bf16.mxu0 0
  %2879 = vmatpush1.bf16.msra.mxu0 0
  %2880 = vmatprep.subr.bf16.mxu0 0
  %2881 = vmatpush1.bf16.msra.mxu0 0
  %2882 = vmatprep.subr.bf16.mxu0 0
  %2883 = vmatpush1.bf16.msra.mxu0 0
  %2884 = vmatprep.subr.bf16.mxu0 0
  %2885 = vmatpush1.bf16.msra.mxu0 0
  %2886 = vmatprep.mubr.bf16.mxu0 0
  %2887 = vmatmul.mubr.bf16.gmra.mrb[0].mxu0 %v2719
  %v2888 = vpop.f32.mrb[0].mxu0
  %v2889 = vadd.f32 %v2804, %v2888
  %v2890 = vpop.f32.mrb[0].mxu0
  %v2891 = vpop.f32.mrb[0].mxu0
  %v2892 = vadd.f32 %v2804, %v2891
  %v2893 = vpop.f32.mrb[0].mxu0
  %2894 = vmatprep.mubr.bf16.mxu0 0
  %2895 = vmatmul.mubr.bf16.gmra.mrb[0].mxu0 %v2720
  %v2896 = vpop.f32.mrb[0].mxu0
  %v2897 = vadd.f32 %v2804, %v2896
  %v2898 = vpop.f32.mrb[0].mxu0
  %v2899 = vpop.f32.mrb[0].mxu0
  %v2900 = vadd.f32 %v2804, %v2899
  %v2901 = vpop.f32.mrb[0].mxu0
  %2902 = vmatprep.mubr.bf16.mxu0 0
  %2903 = vmatmul.mubr.bf16.gmra.mrb[0].mxu0 %v2721
  %v2904 = vpop.f32.mrb[0].mxu0
  %v2905 = vadd.f32 %v2804, %v2904
  %v2906 = vpop.f32.mrb[0].mxu0
  %v2907 = vpop.f32.mrb[0].mxu0
  %v2908 = vadd.f32 %v2804, %v2907
  %v2909 = vpop.f32.mrb[0].mxu0
  %2910 = vmatprep.mubr.bf16.mxu0 0
  %2911 = vmatmul.mubr.bf16.gmra.mrb[0].mxu0 %v2722
  %v2912 = vpop.f32.mrb[0].mxu0
  %v2913 = vadd.f32 %v2804, %v2912
  %v2914 = vpop.f32.mrb[0].mxu0
  %v2915 = vpop.f32.mrb[0].mxu0
  %v2916 = vadd.f32 %v2804, %v2915
  %v2917 = vpop.f32.mrb[0].mxu0
  %2918 = vmatprep.mubr.bf16.mxu0 0
  %2919 = vmatmul.mubr.bf16.gmra.mrb[0].mxu0 %v2723
  %v2920 = vpop.f32.mrb[0].mxu0
  %v2921 = vadd.f32 %v2804, %v2920
  %v2922 = vpop.f32.mrb[0].mxu0
  %v2923 = vpop.f32.mrb[0].mxu0
  %v2924 = vadd.f32 %v2804, %v2923
  %v2925 = vpop.f32.mrb[0].mxu0
  %2926 = vmatprep.mubr.bf16.mxu0 0
  %2927 = vmatmul.mubr.bf16.gmra.mrb[0].mxu0 %v2724
  %v2928 = vpop.f32.mrb[0].mxu0
  %v2929 = vadd.f32 %v2804, %v2928
  %v2930 = vpop.f32.mrb[0].mxu0
  %v2931 = vpop.f32.mrb[0].mxu0
  %v2932 = vadd.f32 %v2804, %v2931
  %v2933 = vpop.f32.mrb[0].mxu0
  %2934 = vmatprep.mubr.bf16.mxu0 0
  %2935 = vmatmul.mubr.bf16.gmra.mrb[0].mxu0 %v2725
  %v2936 = vpop.f32.mrb[0].mxu0
  %v2937 = vadd.f32 %v2804, %v2936
  %v2938 = vpop.f32.mrb[0].mxu0
  %v2939 = vpop.f32.mrb[0].mxu0
  %v2940 = vadd.f32 %v2804, %v2939
  %v2941 = vpop.f32.mrb[0].mxu0
  %2942 = vmatprep.mubr.bf16.mxu0 0
  %2943 = vmatmul.mubr.bf16.gmra.mrb[0].mxu0 %v2726
  %v2944 = vpop.f32.mrb[0].mxu0
  %v2945 = vadd.f32 %v2804, %v2944
  %v2946 = vpop.f32.mrb[0].mxu0
  %v2947 = vpop.f32.mrb[0].mxu0
  %v2948 = vadd.f32 %v2804, %v2947
  %v2949 = vpop.f32.mrb[0].mxu0
  %2950 = vmatprep.mubr.bf16.mxu0 0
  %2951 = vmatmul.mubr.bf16.gmra.mrb[0].mxu0 %v2727
  %v2952 = vpop.f32.mrb[0].mxu0
  %v2953 = vadd.f32 %v2804, %v2952
  %v2954 = vpop.f32.mrb[0].mxu0
  %v2955 = vpop.f32.mrb[0].mxu0
  %v2956 = vadd.f32 %v2804, %v2955
  %v2957 = vpop.f32.mrb[0].mxu0
  %2958 = vmatprep.mubr.bf16.mxu0 0
  %2959 = vmatmul.mubr.bf16.gmra.mrb[0].mxu0 %v2728
  %v2960 = vpop.f32.mrb[0].mxu0
  %v2961 = vadd.f32 %v2804, %v2960
  %v2962 = vpop.f32.mrb[0].mxu0
  %v2963 = vpop.f32.mrb[0].mxu0
  %v2964 = vadd.f32 %v2804, %v2963
  %v2965 = vpop.f32.mrb[0].mxu0
  %2966 = vmatprep.mubr.bf16.mxu0 0
  %2967 = vmatmul.mubr.bf16.gmra.mrb[0].mxu0 %v2729
  %v2968 = vpop.f32.mrb[0].mxu0
  %v2969 = vadd.f32 %v2804, %v2968
  %v2970 = vpop.f32.mrb[0].mxu0
  %v2971 = vpop.f32.mrb[0].mxu0
  %v2972 = vadd.f32 %v2804, %v2971
  %v2973 = vpop.f32.mrb[0].mxu0
  %2974 = vmatprep.mubr.bf16.mxu0 0
  %2975 = vmatmul.mubr.bf16.gmra.mrb[0].mxu0 %v2730
  %v2976 = vpop.f32.mrb[0].mxu0
  %v2977 = vadd.f32 %v2804, %v2976
  %v2978 = vpop.f32.mrb[0].mxu0
  %v2979 = vpop.f32.mrb[0].mxu0
  %v2980 = vadd.f32 %v2804, %v2979
  %v2981 = vpop.f32.mrb[0].mxu0
  %2982 = vmatprep.mubr.bf16.mxu0 0
  %2983 = vmatmul.mubr.bf16.gmra.mrb[0].mxu0 %v2731
  %v2984 = vpop.f32.mrb[0].mxu0
  %v2985 = vadd.f32 %v2804, %v2984
  %v2986 = vpop.f32.mrb[0].mxu0
  %v2987 = vpop.f32.mrb[0].mxu0
  %v2988 = vadd.f32 %v2804, %v2987
  %v2989 = vpop.f32.mrb[0].mxu0
  %2990 = vmatprep.mubr.bf16.mxu0 0
  %2991 = vmatmul.mubr.bf16.gmra.mrb[0].mxu0 %v2732
  %v2992 = vpop.f32.mrb[0].mxu0
  %v2993 = vadd.f32 %v2804, %v2992
  %v2994 = vpop.f32.mrb[0].mxu0
  %v2995 = vpop.f32.mrb[0].mxu0
  %v2996 = vadd.f32 %v2804, %v2995
  %v2997 = vpop.f32.mrb[0].mxu0
  %2998 = vmatprep.mubr.bf16.mxu0 0
  %2999 = vmatmul.mubr.bf16.gmra.mrb[0].mxu0 %v2733
  %v3000 = vpop.f32.mrb[0].mxu0
  %v3001 = vadd.f32 %v2804, %v3000
  %v3002 = vpop.f32.mrb[0].mxu0
  %v3003 = vpop.f32.mrb[0].mxu0
  %v3004 = vadd.f32 %v2804, %v3003
  %v3005 = vpop.f32.mrb[0].mxu0
  %3006 = vmatprep.mubr.bf16.mxu0 0
  %3007 = vmatmul.mubr.bf16.gmra.mrb[0].mxu0 %v2734
  %v3008 = vpop.f32.mrb[0].mxu0
  %v3009 = vadd.f32 %v2804, %v3008
  %v3010 = vpop.f32.mrb[0].mxu0
  %v3011 = vpop.f32.mrb[0].mxu0
  %v3012 = vadd.f32 %v2804, %v3011
  %v3013 = vpop.f32.mrb[0].mxu0
  %3014 = vmatprep.mubr.bf16.mxu0 0
  %3015 = vmatmul.mubr.bf16.gmra.mrb[0].mxu0 %v2735
  %v3016 = vpop.f32.mrb[0].mxu0
  %v3017 = vadd.f32 %v2804, %v3016
  %v3018 = vpop.f32.mrb[0].mxu0
  %v3019 = vpop.f32.mrb[0].mxu0
  %v3020 = vadd.f32 %v2804, %v3019
  %v3021 = vpop.f32.mrb[0].mxu0
  %3022 = vmatprep.mubr.bf16.mxu0 0
  %3023 = vmatmul.mubr.bf16.gmra.mrb[0].mxu0 %v2736
  %v3024 = vpop.f32.mrb[0].mxu0
  %v3025 = vadd.f32 %v2804, %v3024
  %v3026 = vpop.f32.mrb[0].mxu0
  %v3027 = vpop.f32.mrb[0].mxu0
  %v3028 = vadd.f32 %v2804, %v3027
  %v3029 = vpop.f32.mrb[0].mxu0
  %3030 = vmatprep.mubr.bf16.mxu0 0
  %3031 = vmatmul.mubr.bf16.gmra.mrb[0].mxu0 %v2737
  %v3032 = vpop.f32.mrb[0].mxu0
  %v3033 = vadd.f32 %v2804, %v3032
  %v3034 = vpop.f32.mrb[0].mxu0
  %v3035 = vpop.f32.mrb[0].mxu0
  %v3036 = vadd.f32 %v2804, %v3035
  %v3037 = vpop.f32.mrb[0].mxu0
  %3038 = vmatprep.mubr.bf16.mxu0 0
  %3039 = vmatmul.mubr.bf16.gmra.mrb[0].mxu0 %v2738
  %v3040 = vpop.f32.mrb[0].mxu0
  %v3041 = vadd.f32 %v2804, %v3040
  %v3042 = vpop.f32.mrb[0].mxu0
  %v3043 = vpop.f32.mrb[0].mxu0
  %v3044 = vadd.f32 %v2804, %v3043
  %v3045 = vpop.f32.mrb[0].mxu0
  %3046 = vmatprep.mubr.bf16.mxu0 0
  %3047 = vmatmul.mubr.bf16.gmra.mrb[0].mxu0 %v2739
  %v3048 = vpop.f32.mrb[0].mxu0
  %v3049 = vadd.f32 %v2804, %v3048
  %v3050 = vpop.f32.mrb[0].mxu0
  %v3051 = vpop.f32.mrb[0].mxu0
  %v3052 = vadd.f32 %v2804, %v3051
  %v3053 = vpop.f32.mrb[0].mxu0
  %3054 = vmatprep.mubr.bf16.mxu0 0
  %3055 = vmatmul.mubr.bf16.gmra.mrb[0].mxu0 %v2740
  %v3056 = vpop.f32.mrb[0].mxu0
  %v3057 = vadd.f32 %v2804, %v3056
  %v3058 = vpop.f32.mrb[0].mxu0
  %v3059 = vpop.f32.mrb[0].mxu0
  %v3060 = vadd.f32 %v2804, %v3059
  %v3061 = vpop.f32.mrb[0].mxu0
  %3062 = vmatprep.mubr.bf16.mxu0 0
  %3063 = vmatmul.mubr.bf16.gmra.mrb[0].mxu0 %v2741
  %v3064 = vpop.f32.mrb[0].mxu0
  %v3065 = vadd.f32 %v2804, %v3064
  %v3066 = vpop.f32.mrb[0].mxu0
  %v3067 = vpop.f32.mrb[0].mxu0
  %v3068 = vadd.f32 %v2804, %v3067
  %v3069 = vpop.f32.mrb[0].mxu0
  %3070 = vmatprep.mubr.bf16.mxu0 0
  %3071 = vmatmul.mubr.bf16.gmra.mrb[0].mxu0 %v2742
  %v3072 = vpop.f32.mrb[0].mxu0
  %v3073 = vadd.f32 %v2804, %v3072
  %v3074 = vpop.f32.mrb[0].mxu0
  %v3075 = vpop.f32.mrb[0].mxu0
  %v3076 = vadd.f32 %v2804, %v3075
  %v3077 = vpop.f32.mrb[0].mxu0
  %3078 = vmatprep.mubr.bf16.mxu0 0
  %3079 = vmatmul.mubr.bf16.gmra.mrb[0].mxu0 %v2743
  %v3080 = vpop.f32.mrb[0].mxu0
  %v3081 = vadd.f32 %v2804, %v3080
  %v3082 = vpop.f32.mrb[0].mxu0
  %v3083 = vpop.f32.mrb[0].mxu0
  %v3084 = vadd.f32 %v2804, %v3083
  %v3085 = vpop.f32.mrb[0].mxu0
  %3086 = vmatprep.mubr.bf16.mxu0 0
  %3087 = vmatmul.mubr.bf16.gmra.mrb[0].mxu0 %v2744
  %v3088 = vpop.f32.mrb[0].mxu0
  %v3089 = vadd.f32 %v2804, %v3088
  %v3090 = vpop.f32.mrb[0].mxu0
  %v3091 = vpop.f32.mrb[0].mxu0
  %v3092 = vadd.f32 %v2804, %v3091
  %v3093 = vpop.f32.mrb[0].mxu0
  %3094 = vmatprep.mubr.bf16.mxu0 0
  %3095 = vmatmul.mubr.bf16.gmra.mrb[0].mxu0 %v2745
  %v3096 = vpop.f32.mrb[0].mxu0
  %v3097 = vadd.f32 %v2804, %v3096
  %v3098 = vpop.f32.mrb[0].mxu0
  %v3099 = vpop.f32.mrb[0].mxu0
  %v3100 = vadd.f32 %v2804, %v3099
  %v3101 = vpop.f32.mrb[0].mxu0
  %3102 = vmatprep.mubr.bf16.mxu0 0
  %3103 = vmatmul.mubr.bf16.gmra.mrb[0].mxu0 %v2746
  %v3104 = vpop.f32.mrb[0].mxu0
  %v3105 = vadd.f32 %v2804, %v3104
  %v3106 = vpop.f32.mrb[0].mxu0
  %v3107 = vpop.f32.mrb[0].mxu0
  %v3108 = vadd.f32 %v2804, %v3107
  %v3109 = vpop.f32.mrb[0].mxu0
  %3110 = vmatprep.mubr.bf16.mxu0 0
  %3111 = vmatmul.mubr.bf16.gmra.mrb[0].mxu0 %v2747
  %v3112 = vpop.f32.mrb[0].mxu0
  %v3113 = vadd.f32 %v2804, %v3112
  %v3114 = vpop.f32.mrb[0].mxu0
  %v3115 = vpop.f32.mrb[0].mxu0
  %v3116 = vadd.f32 %v2804, %v3115
  %v3117 = vpop.f32.mrb[0].mxu0
  %3118 = vmatprep.mubr.bf16.mxu0 0
  %3119 = vmatmul.mubr.bf16.gmra.mrb[0].mxu0 %v2748
  %v3120 = vpop.f32.mrb[0].mxu0
  %v3121 = vadd.f32 %v2804, %v3120
  %v3122 = vpop.f32.mrb[0].mxu0
  %v3123 = vpop.f32.mrb[0].mxu0
  %v3124 = vadd.f32 %v2804, %v3123
  %v3125 = vpop.f32.mrb[0].mxu0
  %3126 = vmatprep.mubr.bf16.mxu0 0
  %3127 = vmatmul.mubr.bf16.gmra.mrb[0].mxu0 %v2749
  %v3128 = vpop.f32.mrb[0].mxu0
  %v3129 = vadd.f32 %v2804, %v3128
  %v3130 = vpop.f32.mrb[0].mxu0
  %v3131 = vpop.f32.mrb[0].mxu0
  %v3132 = vadd.f32 %v2804, %v3131
  %v3133 = vpop.f32.mrb[0].mxu0
  %3134 = vmatprep.mubr.bf16.mxu0 0
  %3135 = vmatmul.mubr.bf16.gmra.mrb[0].mxu0 %v2750
  %v3136 = vpop.f32.mrb[0].mxu0
  %v3137 = vadd.f32 %v2804, %v3136
  %v3138 = vpop.f32.mrb[0].mxu0
  %v3139 = vpop.f32.mrb[0].mxu0
  %v3140 = vadd.f32 %v2804, %v3139
  %v3141 = vpop.f32.mrb[0].mxu0
  %3142 = vmatprep.mubr.bf16.mxu0 0
  %3143 = vmatmul.mubr.bf16.gmra.mrb[0].mxu0 %v2751
  %v3144 = vpop.f32.mrb[0].mxu0
  %v3145 = vadd.f32 %v2804, %v3144
  %v3146 = vpop.f32.mrb[0].mxu0
  %v3147 = vpop.f32.mrb[0].mxu0
  %v3148 = vadd.f32 %v2804, %v3147
  %v3149 = vpop.f32.mrb[0].mxu0
  %3150 = vmatprep.mubr.bf16.mxu0 0
  %3151 = vmatmul.mubr.bf16.gmra.mrb[0].mxu0 %v2752
  %v3152 = vpop.f32.mrb[0].mxu0
  %v3153 = vadd.f32 %v2804, %v3152
  %v3154 = vpop.f32.mrb[0].mxu0
  %v3155 = vpop.f32.mrb[0].mxu0
  %v3156 = vadd.f32 %v2804, %v3155
  %v3157 = vpop.f32.mrb[0].mxu0
  %3158 = vmatprep.mubr.bf16.mxu0 0
  %3159 = vmatmul.mubr.bf16.gmra.mrb[0].mxu0 %v2753
  %v3160 = vpop.f32.mrb[0].mxu0
  %v3161 = vadd.f32 %v2804, %v3160
  %v3162 = vpop.f32.mrb[0].mxu0
  %v3163 = vpop.f32.mrb[0].mxu0
  %v3164 = vadd.f32 %v2804, %v3163
  %v3165 = vpop.f32.mrb[0].mxu0
  %3166 = vmatprep.mubr.bf16.mxu0 0
  %3167 = vmatmul.mubr.bf16.gmra.mrb[0].mxu0 %v2754
  %v3168 = vpop.f32.mrb[0].mxu0
  %v3169 = vadd.f32 %v2804, %v3168
  %v3170 = vpop.f32.mrb[0].mxu0
  %v3171 = vpop.f32.mrb[0].mxu0
  %v3172 = vadd.f32 %v2804, %v3171
  %v3173 = vpop.f32.mrb[0].mxu0
  %3174 = vmatprep.mubr.bf16.mxu0 0
  %3175 = vmatmul.mubr.bf16.gmra.mrb[0].mxu0 %v2755
  %v3176 = vpop.f32.mrb[0].mxu0
  %v3177 = vadd.f32 %v2804, %v3176
  %v3178 = vpop.f32.mrb[0].mxu0
  %v3179 = vpop.f32.mrb[0].mxu0
  %v3180 = vadd.f32 %v2804, %v3179
  %v3181 = vpop.f32.mrb[0].mxu0
  %3182 = vmatprep.mubr.bf16.mxu0 0
  %3183 = vmatmul.mubr.bf16.gmra.mrb[0].mxu0 %v2756
  %v3184 = vpop.f32.mrb[0].mxu0
  %v3185 = vadd.f32 %v2804, %v3184
  %v3186 = vpop.f32.mrb[0].mxu0
  %v3187 = vpop.f32.mrb[0].mxu0
  %v3188 = vadd.f32 %v2804, %v3187
  %v3189 = vpop.f32.mrb[0].mxu0
  %3190 = vmatprep.mubr.bf16.mxu0 0
  %3191 = vmatmul.mubr.bf16.gmra.mrb[0].mxu0 %v2757
  %v3192 = vpop.f32.mrb[0].mxu0
  %v3193 = vadd.f32 %v2804, %v3192
  %v3194 = vpop.f32.mrb[0].mxu0
  %v3195 = vpop.f32.mrb[0].mxu0
  %v3196 = vadd.f32 %v2804, %v3195
  %v3197 = vpop.f32.mrb[0].mxu0
  %3198 = vmatprep.mubr.bf16.mxu0 0
  %3199 = vmatmul.mubr.bf16.gmra.mrb[0].mxu0 %v2758
  %v3200 = vpop.f32.mrb[0].mxu0
  %v3201 = vadd.f32 %v2804, %v3200
  %v3202 = vpop.f32.mrb[0].mxu0
  %v3203 = vpop.f32.mrb[0].mxu0
  %v3204 = vadd.f32 %v2804, %v3203
  %v3205 = vpop.f32.mrb[0].mxu0
  %3206 = vmatprep.mubr.bf16.mxu0 0
  %3207 = vmatmul.mubr.bf16.gmra.mrb[0].mxu0 %v2759
  %v3208 = vpop.f32.mrb[0].mxu0
  %v3209 = vadd.f32 %v2804, %v3208
  %v3210 = vpop.f32.mrb[0].mxu0
  %v3211 = vpop.f32.mrb[0].mxu0
  %v3212 = vadd.f32 %v2804, %v3211
  %v3213 = vpop.f32.mrb[0].mxu0
  %3214 = vmatprep.mubr.bf16.mxu0 0
  %3215 = vmatmul.mubr.bf16.gmra.mrb[0].mxu0 %v2760
  %v3216 = vpop.f32.mrb[0].mxu0
  %v3217 = vadd.f32 %v2804, %v3216
  %v3218 = vpop.f32.mrb[0].mxu0
  %v3219 = vpop.f32.mrb[0].mxu0
  %v3220 = vadd.f32 %v2804, %v3219
  %v3221 = vpop.f32.mrb[0].mxu0
  %3222 = vmatprep.mubr.bf16.mxu0 0
  %3223 = vmatmul.mubr.bf16.gmra.mrb[0].mxu0 %v2761
  %v3224 = vpop.f32.mrb[0].mxu0
  %v3225 = vadd.f32 %v2804, %v3224
  %v3226 = vpop.f32.mrb[0].mxu0
  %v3227 = vpop.f32.mrb[0].mxu0
  %v3228 = vadd.f32 %v2804, %v3227
  %v3229 = vpop.f32.mrb[0].mxu0
  %3230 = vmatprep.mubr.bf16.mxu0 0
  %3231 = vmatmul.mubr.bf16.gmra.mrb[0].mxu0 %v2762
  %v3232 = vpop.f32.mrb[0].mxu0
  %v3233 = vadd.f32 %v2804, %v3232
  %v3234 = vpop.f32.mrb[0].mxu0
  %v3235 = vpop.f32.mrb[0].mxu0
  %v3236 = vadd.f32 %v2804, %v3235
  %v3237 = vpop.f32.mrb[0].mxu0
  %3238 = vmatprep.mubr.bf16.mxu0 0
  %3239 = vmatmul.mubr.bf16.gmra.mrb[0].mxu0 %v2763
  %v3240 = vpop.f32.mrb[0].mxu0
  %v3241 = vadd.f32 %v2804, %v3240
  %v3242 = vpop.f32.mrb[0].mxu0
  %v3243 = vpop.f32.mrb[0].mxu0
  %v3244 = vadd.f32 %v2804, %v3243
  %v3245 = vpop.f32.mrb[0].mxu0
  %3246 = vmatprep.mubr.bf16.mxu0 0
  %3247 = vmatmul.mubr.bf16.gmra.mrb[0].mxu0 %v2764
  %v3248 = vpop.f32.mrb[0].mxu0
  %v3249 = vadd.f32 %v2804, %v3248
  %v3250 = vpop.f32.mrb[0].mxu0
  %v3251 = vpop.f32.mrb[0].mxu0
  %v3252 = vadd.f32 %v2804, %v3251
  %v3253 = vpop.f32.mrb[0].mxu0
  %3254 = vmatprep.mubr.bf16.mxu0 0
  %3255 = vmatmul.mubr.bf16.gmra.mrb[0].mxu0 %v2765
  %v3256 = vpop.f32.mrb[0].mxu0
  %v3257 = vadd.f32 %v2804, %v3256
  %v3258 = vpop.f32.mrb[0].mxu0
  %v3259 = vpop.f32.mrb[0].mxu0
  %v3260 = vadd.f32 %v2804, %v3259
  %v3261 = vpop.f32.mrb[0].mxu0
  %3262 = vmatprep.mubr.bf16.mxu0 0
  %3263 = vmatmul.mubr.bf16.gmra.mrb[0].mxu0 %v2766
  %v3264 = vpop.f32.mrb[0].mxu0
  %v3265 = vadd.f32 %v2804, %v3264
  %v3266 = vpop.f32.mrb[0].mxu0
  %v3267 = vpop.f32.mrb[0].mxu0
  %v3268 = vadd.f32 %v2804, %v3267
  %v3269 = vpop.f32.mrb[0].mxu0
  %3270 = vmatprep.mubr.bf16.mxu0 0
  %3271 = vmatmul.mubr.bf16.gmra.mrb[0].mxu0 %v2767
  %v3272 = vpop.f32.mrb[0].mxu0
  %v3273 = vadd.f32 %v2804, %v3272
  %v3274 = vpop.f32.mrb[0].mxu0
  %v3275 = vpop.f32.mrb[0].mxu0
  %v3276 = vadd.f32 %v2804, %v3275
  %v3277 = vpop.f32.mrb[0].mxu0
  %3278 = vmatprep.mubr.bf16.mxu0 0
  %3279 = vmatmul.mubr.bf16.gmra.mrb[0].mxu0 %v2768
  %v3280 = vpop.f32.mrb[0].mxu0
  %v3281 = vadd.f32 %v2804, %v3280
  %v3282 = vpop.f32.mrb[0].mxu0
  %v3283 = vpop.f32.mrb[0].mxu0
  %v3284 = vadd.f32 %v2804, %v3283
  %v3285 = vpop.f32.mrb[0].mxu0
  %3286 = vmatprep.mubr.bf16.mxu0 0
  %3287 = vmatmul.mubr.bf16.gmra.mrb[0].mxu0 %v2769
  %v3288 = vpop.f32.mrb[0].mxu0
  %v3289 = vadd.f32 %v2804, %v3288
  %v3290 = vpop.f32.mrb[0].mxu0
  %v3291 = vpop.f32.mrb[0].mxu0
  %v3292 = vadd.f32 %v2804, %v3291
  %v3293 = vpop.f32.mrb[0].mxu0
  %3294 = vmatprep.mubr.bf16.mxu0 0
  %3295 = vmatmul.mubr.bf16.gmra.mrb[0].mxu0 %v2770
  %v3296 = vpop.f32.mrb[0].mxu0
  %v3297 = vadd.f32 %v2804, %v3296
  %v3298 = vpop.f32.mrb[0].mxu0
  %v3299 = vpop.f32.mrb[0].mxu0
  %v3300 = vadd.f32 %v2804, %v3299
  %v3301 = vpop.f32.mrb[0].mxu0
  %3302 = vmatprep.mubr.bf16.mxu0 0
  %3303 = vmatmul.mubr.bf16.gmra.mrb[0].mxu0 %v2771
  %v3304 = vpop.f32.mrb[0].mxu0
  %v3305 = vadd.f32 %v2804, %v3304
  %v3306 = vpop.f32.mrb[0].mxu0
  %v3307 = vpop.f32.mrb[0].mxu0
  %v3308 = vadd.f32 %v2804, %v3307
  %v3309 = vpop.f32.mrb[0].mxu0
  %3310 = vmatprep.mubr.bf16.mxu0 0
  %3311 = vmatmul.mubr.bf16.gmra.mrb[0].mxu0 %v2772
  %v3312 = vpop.f32.mrb[0].mxu0
  %v3313 = vadd.f32 %v2804, %v3312
  %v3314 = vpop.f32.mrb[0].mxu0
  %v3315 = vpop.f32.mrb[0].mxu0
  %v3316 = vadd.f32 %v2804, %v3315
  %v3317 = vpop.f32.mrb[0].mxu0
  %3318 = vmatprep.mubr.bf16.mxu0 0
  %3319 = vmatmul.mubr.bf16.gmra.mrb[0].mxu0 %v2773
  %v3320 = vpop.f32.mrb[0].mxu0
  %v3321 = vadd.f32 %v2804, %v3320
  %v3322 = vpop.f32.mrb[0].mxu0
  %v3323 = vpop.f32.mrb[0].mxu0
  %v3324 = vadd.f32 %v2804, %v3323
  %v3325 = vpop.f32.mrb[0].mxu0
  %3326 = vmatprep.mubr.bf16.mxu0 0
  %3327 = vmatmul.mubr.bf16.gmra.mrb[0].mxu0 %v2774
  %v3328 = vpop.f32.mrb[0].mxu0
  %v3329 = vadd.f32 %v2804, %v3328
  %v3330 = vpop.f32.mrb[0].mxu0
  %v3331 = vpop.f32.mrb[0].mxu0
  %v3332 = vadd.f32 %v2804, %v3331
  %v3333 = vpop.f32.mrb[0].mxu0
  %3334 = vmatprep.mubr.bf16.mxu0 0
  %3335 = vmatmul.mubr.bf16.gmra.mrb[0].mxu0 %v2775
  %v3336 = vpop.f32.mrb[0].mxu0
  %v3337 = vadd.f32 %v2804, %v3336
  %v3338 = vpop.f32.mrb[0].mxu0
  %v3339 = vpop.f32.mrb[0].mxu0
  %v3340 = vadd.f32 %v2804, %v3339
  %v3341 = vpop.f32.mrb[0].mxu0
  %3342 = vmatprep.mubr.bf16.mxu0 0
  %3343 = vmatmul.mubr.bf16.gmra.mrb[0].mxu0 %v2776
  %v3344 = vpop.f32.mrb[0].mxu0
  %v3345 = vadd.f32 %v2804, %v3344
  %v3346 = vpop.f32.mrb[0].mxu0
  %v3347 = vpop.f32.mrb[0].mxu0
  %v3348 = vadd.f32 %v2804, %v3347
  %v3349 = vpop.f32.mrb[0].mxu0
  %3350 = vmatprep.mubr.bf16.mxu0 0
  %3351 = vmatmul.mubr.bf16.gmra.mrb[0].mxu0 %v2777
  %v3352 = vpop.f32.mrb[0].mxu0
  %v3353 = vadd.f32 %v2804, %v3352
  %v3354 = vpop.f32.mrb[0].mxu0
  %v3355 = vpop.f32.mrb[0].mxu0
  %v3356 = vadd.f32 %v2804, %v3355
  %v3357 = vpop.f32.mrb[0].mxu0
  %3358 = vmatprep.mubr.bf16.mxu0 0
  %3359 = vmatmul.mubr.bf16.gmra.mrb[0].mxu0 %v2778
  %v3360 = vpop.f32.mrb[0].mxu0
  %v3361 = vadd.f32 %v2804, %v3360
  %v3362 = vpop.f32.mrb[0].mxu0
  %v3363 = vpop.f32.mrb[0].mxu0
  %v3364 = vadd.f32 %v2804, %v3363
  %v3365 = vpop.f32.mrb[0].mxu0
  %3366 = vmatprep.mubr.bf16.mxu0 0
  %3367 = vmatmul.mubr.bf16.gmra.mrb[0].mxu0 %v2779
  %v3368 = vpop.f32.mrb[0].mxu0
  %v3369 = vadd.f32 %v2804, %v3368
  %v3370 = vpop.f32.mrb[0].mxu0
  %v3371 = vpop.f32.mrb[0].mxu0
  %v3372 = vadd.f32 %v2804, %v3371
  %v3373 = vpop.f32.mrb[0].mxu0
  %3374 = vmatprep.mubr.bf16.mxu0 0
  %3375 = vmatmul.mubr.bf16.gmra.mrb[0].mxu0 %v2780
  %v3376 = vpop.f32.mrb[0].mxu0
  %v3377 = vadd.f32 %v2804, %v3376
  %v3378 = vpop.f32.mrb[0].mxu0
  %v3379 = vpop.f32.mrb[0].mxu0
  %v3380 = vadd.f32 %v2804, %v3379
  %v3381 = vpop.f32.mrb[0].mxu0
  %3382 = vmatprep.mubr.bf16.mxu0 0
  %3383 = vmatmul.mubr.bf16.gmra.mrb[0].mxu0 %v2781
  %v3384 = vpop.f32.mrb[0].mxu0
  %v3385 = vadd.f32 %v2804, %v3384
  %v3386 = vpop.f32.mrb[0].mxu0
  %v3387 = vpop.f32.mrb[0].mxu0
  %v3388 = vadd.f32 %v2804, %v3387
  %v3389 = vpop.f32.mrb[0].mxu0
  %3390 = vmatprep.mubr.bf16.mxu0 0
  %3391 = vmatmul.mubr.bf16.gmra.mrb[0].mxu0 %v2782
  %v3392 = vpop.f32.mrb[0].mxu0
  %v3393 = vadd.f32 %v2804, %v3392
  %v3394 = vpop.f32.mrb[0].mxu0
  %v3395 = vpop.f32.mrb[0].mxu0
  %v3396 = vadd.f32 %v2804, %v3395
  %v3397 = vpop.f32.mrb[0].mxu0
  %3398 = vdwg.mxu0
  %v3399 = vpack.c.bf16 %v2892, %v2889
  %v3400 = vpack.c.bf16 %v2900, %v2897
  %v3401 = vpack.c.bf16 %v2908, %v2905
  %v3402 = vpack.c.bf16 %v2916, %v2913
  %v3403 = vpack.c.bf16 %v2924, %v2921
  %v3404 = vpack.c.bf16 %v2932, %v2929
  %v3405 = vpack.c.bf16 %v2940, %v2937
  %v3406 = vpack.c.bf16 %v2948, %v2945
  %v3407 = vpack.c.bf16 %v2956, %v2953
  %v3408 = vpack.c.bf16 %v2964, %v2961
  %v3409 = vpack.c.bf16 %v2972, %v2969
  %v3410 = vpack.c.bf16 %v2980, %v2977
  %v3411 = vpack.c.bf16 %v2988, %v2985
  %v3412 = vpack.c.bf16 %v2996, %v2993
  %v3413 = vpack.c.bf16 %v3004, %v3001
  %v3414 = vpack.c.bf16 %v3012, %v3009
  %v3415 = vpack.c.bf16 %v3020, %v3017
  %v3416 = vpack.c.bf16 %v3028, %v3025
  %v3417 = vpack.c.bf16 %v3036, %v3033
  %v3418 = vpack.c.bf16 %v3044, %v3041
  %v3419 = vpack.c.bf16 %v3052, %v3049
  %v3420 = vpack.c.bf16 %v3060, %v3057
  %v3421 = vpack.c.bf16 %v3068, %v3065
  %v3422 = vpack.c.bf16 %v3076, %v3073
  %v3423 = vpack.c.bf16 %v3084, %v3081
  %v3424 = vpack.c.bf16 %v3092, %v3089
  %v3425 = vpack.c.bf16 %v3100, %v3097
  %v3426 = vpack.c.bf16 %v3108, %v3105
  %v3427 = vpack.c.bf16 %v3116, %v3113
  %v3428 = vpack.c.bf16 %v3124, %v3121
  %v3429 = vpack.c.bf16 %v3132, %v3129
  %v3430 = vpack.c.bf16 %v3140, %v3137
  %v3431 = vpack.c.bf16 %v3148, %v3145
  %v3432 = vpack.c.bf16 %v3156, %v3153
  %v3433 = vpack.c.bf16 %v3164, %v3161
  %v3434 = vpack.c.bf16 %v3172, %v3169
  %v3435 = vpack.c.bf16 %v3180, %v3177
  %v3436 = vpack.c.bf16 %v3188, %v3185
  %v3437 = vpack.c.bf16 %v3196, %v3193
  %v3438 = vpack.c.bf16 %v3204, %v3201
  %v3439 = vpack.c.bf16 %v3212, %v3209
  %v3440 = vpack.c.bf16 %v3220, %v3217
  %v3441 = vpack.c.bf16 %v3228, %v3225
  %v3442 = vpack.c.bf16 %v3236, %v3233
  %v3443 = vpack.c.bf16 %v3244, %v3241
  %v3444 = vpack.c.bf16 %v3252, %v3249
  %v3445 = vpack.c.bf16 %v3260, %v3257
  %v3446 = vpack.c.bf16 %v3268, %v3265
  %v3447 = vpack.c.bf16 %v3276, %v3273
  %v3448 = vpack.c.bf16 %v3284, %v3281
  %v3449 = vpack.c.bf16 %v3292, %v3289
  %v3450 = vpack.c.bf16 %v3300, %v3297
  %v3451 = vpack.c.bf16 %v3308, %v3305
  %v3452 = vpack.c.bf16 %v3316, %v3313
  %v3453 = vpack.c.bf16 %v3324, %v3321
  %v3454 = vpack.c.bf16 %v3332, %v3329
  %v3455 = vpack.c.bf16 %v3340, %v3337
  %v3456 = vpack.c.bf16 %v3348, %v3345
  %v3457 = vpack.c.bf16 %v3356, %v3353
  %v3458 = vpack.c.bf16 %v3364, %v3361
  %v3459 = vpack.c.bf16 %v3372, %v3369
  %v3460 = vpack.c.bf16 %v3380, %v3377
  %v3461 = vpack.c.bf16 %v3388, %v3385
  %v3462 = vpack.c.bf16 %v3396, %v3393
  %v3527 = vunpack.c.l.b16 %v3399
  %v3528 = vunpack.c.h.b16 %v3399
  %v3529 = vunpack.c.l.b16 %v3400
  %v3530 = vunpack.c.h.b16 %v3400
  %v3531 = vunpack.c.l.b16 %v3401
  %v3532 = vunpack.c.h.b16 %v3401
  %v3533 = vunpack.c.l.b16 %v3402
  %v3534 = vunpack.c.h.b16 %v3402
  %v3535 = vunpack.c.l.b16 %v3403
  %v3536 = vunpack.c.h.b16 %v3403
  %v3537 = vunpack.c.l.b16 %v3404
  %v3538 = vunpack.c.h.b16 %v3404
  %v3539 = vunpack.c.l.b16 %v3405
  %v3540 = vunpack.c.h.b16 %v3405
  %v3541 = vunpack.c.l.b16 %v3406
  %v3542 = vunpack.c.h.b16 %v3406
  %v3543 = vunpack.c.l.b16 %v3407
  %v3544 = vunpack.c.h.b16 %v3407
  %v3545 = vunpack.c.l.b16 %v3408
  %v3546 = vunpack.c.h.b16 %v3408
  %v3547 = vunpack.c.l.b16 %v3409
  %v3548 = vunpack.c.h.b16 %v3409
  %v3549 = vunpack.c.l.b16 %v3410
  %v3550 = vunpack.c.h.b16 %v3410
  %v3551 = vunpack.c.l.b16 %v3411
  %v3552 = vunpack.c.h.b16 %v3411
  %v3553 = vunpack.c.l.b16 %v3412
  %v3554 = vunpack.c.h.b16 %v3412
  %v3555 = vunpack.c.l.b16 %v3413
  %v3556 = vunpack.c.h.b16 %v3413
  %v3557 = vunpack.c.l.b16 %v3414
  %v3558 = vunpack.c.h.b16 %v3414
  %v3559 = vunpack.c.l.b16 %v3415
  %v3560 = vunpack.c.h.b16 %v3415
  %v3561 = vunpack.c.l.b16 %v3416
  %v3562 = vunpack.c.h.b16 %v3416
  %v3563 = vunpack.c.l.b16 %v3417
  %v3564 = vunpack.c.h.b16 %v3417
  %v3565 = vunpack.c.l.b16 %v3418
  %v3566 = vunpack.c.h.b16 %v3418
  %v3567 = vunpack.c.l.b16 %v3419
  %v3568 = vunpack.c.h.b16 %v3419
  %v3569 = vunpack.c.l.b16 %v3420
  %v3570 = vunpack.c.h.b16 %v3420
  %v3571 = vunpack.c.l.b16 %v3421
  %v3572 = vunpack.c.h.b16 %v3421
  %v3573 = vunpack.c.l.b16 %v3422
  %v3574 = vunpack.c.h.b16 %v3422
  %v3575 = vunpack.c.l.b16 %v3423
  %v3576 = vunpack.c.h.b16 %v3423
  %v3577 = vunpack.c.l.b16 %v3424
  %v3578 = vunpack.c.h.b16 %v3424
  %v3579 = vunpack.c.l.b16 %v3425
  %v3580 = vunpack.c.h.b16 %v3425
  %v3581 = vunpack.c.l.b16 %v3426
  %v3582 = vunpack.c.h.b16 %v3426
  %v3583 = vunpack.c.l.b16 %v3427
  %v3584 = vunpack.c.h.b16 %v3427
  %v3585 = vunpack.c.l.b16 %v3428
  %v3586 = vunpack.c.h.b16 %v3428
  %v3587 = vunpack.c.l.b16 %v3429
  %v3588 = vunpack.c.h.b16 %v3429
  %v3589 = vunpack.c.l.b16 %v3430
  %v3590 = vunpack.c.h.b16 %v3430
  %v3591 = vunpack.c.l.b16 %v3431
  %v3592 = vunpack.c.h.b16 %v3431
  %v3593 = vunpack.c.l.b16 %v3432
  %v3594 = vunpack.c.h.b16 %v3432
  %v3595 = vunpack.c.l.b16 %v3433
  %v3596 = vunpack.c.h.b16 %v3433
  %v3597 = vunpack.c.l.b16 %v3434
  %v3598 = vunpack.c.h.b16 %v3434
  %v3599 = vunpack.c.l.b16 %v3435
  %v3600 = vunpack.c.h.b16 %v3435
  %v3601 = vunpack.c.l.b16 %v3436
  %v3602 = vunpack.c.h.b16 %v3436
  %v3603 = vunpack.c.l.b16 %v3437
  %v3604 = vunpack.c.h.b16 %v3437
  %v3605 = vunpack.c.l.b16 %v3438
  %v3606 = vunpack.c.h.b16 %v3438
  %v3607 = vunpack.c.l.b16 %v3439
  %v3608 = vunpack.c.h.b16 %v3439
  %v3609 = vunpack.c.l.b16 %v3440
  %v3610 = vunpack.c.h.b16 %v3440
  %v3611 = vunpack.c.l.b16 %v3441
  %v3612 = vunpack.c.h.b16 %v3441
  %v3613 = vunpack.c.l.b16 %v3442
  %v3614 = vunpack.c.h.b16 %v3442
  %v3615 = vunpack.c.l.b16 %v3443
  %v3616 = vunpack.c.h.b16 %v3443
  %v3617 = vunpack.c.l.b16 %v3444
  %v3618 = vunpack.c.h.b16 %v3444
  %v3619 = vunpack.c.l.b16 %v3445
  %v3620 = vunpack.c.h.b16 %v3445
  %v3621 = vunpack.c.l.b16 %v3446
  %v3622 = vunpack.c.h.b16 %v3446
  %v3623 = vunpack.c.l.b16 %v3447
  %v3624 = vunpack.c.h.b16 %v3447
  %v3625 = vunpack.c.l.b16 %v3448
  %v3626 = vunpack.c.h.b16 %v3448
  %v3627 = vunpack.c.l.b16 %v3449
  %v3628 = vunpack.c.h.b16 %v3449
  %v3629 = vunpack.c.l.b16 %v3450
  %v3630 = vunpack.c.h.b16 %v3450
  %v3631 = vunpack.c.l.b16 %v3451
  %v3632 = vunpack.c.h.b16 %v3451
  %v3633 = vunpack.c.l.b16 %v3452
  %v3634 = vunpack.c.h.b16 %v3452
  %v3635 = vunpack.c.l.b16 %v3453
  %v3636 = vunpack.c.h.b16 %v3453
  %v3637 = vunpack.c.l.b16 %v3454
  %v3638 = vunpack.c.h.b16 %v3454
  %v3639 = vunpack.c.l.b16 %v3455
  %v3640 = vunpack.c.h.b16 %v3455
  %v3641 = vunpack.c.l.b16 %v3456
  %v3642 = vunpack.c.h.b16 %v3456
  %v3643 = vunpack.c.l.b16 %v3457
  %v3644 = vunpack.c.h.b16 %v3457
  %v3645 = vunpack.c.l.b16 %v3458
  %v3646 = vunpack.c.h.b16 %v3458
  %v3647 = vunpack.c.l.b16 %v3459
  %v3648 = vunpack.c.h.b16 %v3459
  %v3649 = vunpack.c.l.b16 %v3460
  %v3650 = vunpack.c.h.b16 %v3460
  %v3651 = vunpack.c.l.b16 %v3461
  %v3652 = vunpack.c.h.b16 %v3461
  %v3653 = vunpack.c.l.b16 %v3462
  %v3654 = vunpack.c.h.b16 %v3462
  %v3655 = vpack.c.b16 %v3527, %v3527
  %v3656 = vpack.c.b16 %v3528, %v3528
  %v3657 = vpack.c.b16 %v3529, %v3529
  %v3658 = vpack.c.b16 %v3530, %v3530
  %v3659 = vpack.c.b16 %v3531, %v3531
  %v3660 = vpack.c.b16 %v3532, %v3532
  %v3661 = vpack.c.b16 %v3533, %v3533
  %v3662 = vpack.c.b16 %v3534, %v3534
  %v3663 = vpack.c.b16 %v3535, %v3535
  %v3664 = vpack.c.b16 %v3536, %v3536
  %v3665 = vpack.c.b16 %v3537, %v3537
  %v3666 = vpack.c.b16 %v3538, %v3538
  %v3667 = vpack.c.b16 %v3539, %v3539
  %v3668 = vpack.c.b16 %v3540, %v3540
  %v3669 = vpack.c.b16 %v3541, %v3541
  %v3670 = vpack.c.b16 %v3542, %v3542
  %v3671 = vpack.c.b16 %v3543, %v3543
  %v3672 = vpack.c.b16 %v3544, %v3544
  %v3673 = vpack.c.b16 %v3545, %v3545
  %v3674 = vpack.c.b16 %v3546, %v3546
  %v3675 = vpack.c.b16 %v3547, %v3547
  %v3676 = vpack.c.b16 %v3548, %v3548
  %v3677 = vpack.c.b16 %v3549, %v3549
  %v3678 = vpack.c.b16 %v3550, %v3550
  %v3679 = vpack.c.b16 %v3551, %v3551
  %v3680 = vpack.c.b16 %v3552, %v3552
  %v3681 = vpack.c.b16 %v3553, %v3553
  %v3682 = vpack.c.b16 %v3554, %v3554
  %v3683 = vpack.c.b16 %v3555, %v3555
  %v3684 = vpack.c.b16 %v3556, %v3556
  %v3685 = vpack.c.b16 %v3557, %v3557
  %v3686 = vpack.c.b16 %v3558, %v3558
  %v3687 = vpack.c.b16 %v3559, %v3559
  %v3688 = vpack.c.b16 %v3560, %v3560
  %v3689 = vpack.c.b16 %v3561, %v3561
  %v3690 = vpack.c.b16 %v3562, %v3562
  %v3691 = vpack.c.b16 %v3563, %v3563
  %v3692 = vpack.c.b16 %v3564, %v3564
  %v3693 = vpack.c.b16 %v3565, %v3565
  %v3694 = vpack.c.b16 %v3566, %v3566
  %v3695 = vpack.c.b16 %v3567, %v3567
  %v3696 = vpack.c.b16 %v3568, %v3568
  %v3697 = vpack.c.b16 %v3569, %v3569
  %v3698 = vpack.c.b16 %v3570, %v3570
  %v3699 = vpack.c.b16 %v3571, %v3571
  %v3700 = vpack.c.b16 %v3572, %v3572
  %v3701 = vpack.c.b16 %v3573, %v3573
  %v3702 = vpack.c.b16 %v3574, %v3574
  %v3703 = vpack.c.b16 %v3575, %v3575
  %v3704 = vpack.c.b16 %v3576, %v3576
  %v3705 = vpack.c.b16 %v3577, %v3577
  %v3706 = vpack.c.b16 %v3578, %v3578
  %v3707 = vpack.c.b16 %v3579, %v3579
  %v3708 = vpack.c.b16 %v3580, %v3580
  %v3709 = vpack.c.b16 %v3581, %v3581
  %v3710 = vpack.c.b16 %v3582, %v3582
  %v3711 = vpack.c.b16 %v3583, %v3583
  %v3712 = vpack.c.b16 %v3584, %v3584
  %v3713 = vpack.c.b16 %v3585, %v3585
  %v3714 = vpack.c.b16 %v3586, %v3586
  %v3715 = vpack.c.b16 %v3587, %v3587
  %v3716 = vpack.c.b16 %v3588, %v3588
  %v3717 = vpack.c.b16 %v3589, %v3589
  %v3718 = vpack.c.b16 %v3590, %v3590
  %v3719 = vpack.c.b16 %v3591, %v3591
  %v3720 = vpack.c.b16 %v3592, %v3592
  %v3721 = vpack.c.b16 %v3593, %v3593
  %v3722 = vpack.c.b16 %v3594, %v3594
  %v3723 = vpack.c.b16 %v3595, %v3595
  %v3724 = vpack.c.b16 %v3596, %v3596
  %v3725 = vpack.c.b16 %v3597, %v3597
  %v3726 = vpack.c.b16 %v3598, %v3598
  %v3727 = vpack.c.b16 %v3599, %v3599
  %v3728 = vpack.c.b16 %v3600, %v3600
  %v3729 = vpack.c.b16 %v3601, %v3601
  %v3730 = vpack.c.b16 %v3602, %v3602
  %v3731 = vpack.c.b16 %v3603, %v3603
  %v3732 = vpack.c.b16 %v3604, %v3604
  %v3733 = vpack.c.b16 %v3605, %v3605
  %v3734 = vpack.c.b16 %v3606, %v3606
  %v3735 = vpack.c.b16 %v3607, %v3607
  %v3736 = vpack.c.b16 %v3608, %v3608
  %v3737 = vpack.c.b16 %v3609, %v3609
  %v3738 = vpack.c.b16 %v3610, %v3610
  %v3739 = vpack.c.b16 %v3611, %v3611
  %v3740 = vpack.c.b16 %v3612, %v3612
  %v3741 = vpack.c.b16 %v3613, %v3613
  %v3742 = vpack.c.b16 %v3614, %v3614
  %v3743 = vpack.c.b16 %v3615, %v3615
  %v3744 = vpack.c.b16 %v3616, %v3616
  %v3745 = vpack.c.b16 %v3617, %v3617
  %v3746 = vpack.c.b16 %v3618, %v3618
  %v3747 = vpack.c.b16 %v3619, %v3619
  %v3748 = vpack.c.b16 %v3620, %v3620
  %v3749 = vpack.c.b16 %v3621, %v3621
  %v3750 = vpack.c.b16 %v3622, %v3622
  %v3751 = vpack.c.b16 %v3623, %v3623
  %v3752 = vpack.c.b16 %v3624, %v3624
  %v3753 = vpack.c.b16 %v3625, %v3625
  %v3754 = vpack.c.b16 %v3626, %v3626
  %v3755 = vpack.c.b16 %v3627, %v3627
  %v3756 = vpack.c.b16 %v3628, %v3628
  %v3757 = vpack.c.b16 %v3629, %v3629
  %v3758 = vpack.c.b16 %v3630, %v3630
  %v3759 = vpack.c.b16 %v3631, %v3631
  %v3760 = vpack.c.b16 %v3632, %v3632
  %v3761 = vpack.c.b16 %v3633, %v3633
  %v3762 = vpack.c.b16 %v3634, %v3634
  %v3763 = vpack.c.b16 %v3635, %v3635
  %v3764 = vpack.c.b16 %v3636, %v3636
  %v3765 = vpack.c.b16 %v3637, %v3637
  %v3766 = vpack.c.b16 %v3638, %v3638
  %v3767 = vpack.c.b16 %v3639, %v3639
  %v3768 = vpack.c.b16 %v3640, %v3640
  %v3769 = vpack.c.b16 %v3641, %v3641
  %v3770 = vpack.c.b16 %v3642, %v3642
  %v3771 = vpack.c.b16 %v3643, %v3643
  %v3772 = vpack.c.b16 %v3644, %v3644
  %v3773 = vpack.c.b16 %v3645, %v3645
  %v3774 = vpack.c.b16 %v3646, %v3646
  %v3775 = vpack.c.b16 %v3647, %v3647
  %v3776 = vpack.c.b16 %v3648, %v3648
  %v3777 = vpack.c.b16 %v3649, %v3649
  %v3778 = vpack.c.b16 %v3650, %v3650
  %v3779 = vpack.c.b16 %v3651, %v3651
  %v3780 = vpack.c.b16 %v3652, %v3652
  %v3781 = vpack.c.b16 %v3653, %v3653
  %v3782 = vpack.c.b16 %v3654, %v3654
  %3911 = vst [vmem:[%s9] sm:$0xf] %v3655
  %3912 = vst [vmem:[%s9 + $0x4] sm:$0xf] %v3656
  %3913 = vst [vmem:[%s9 + $0x8] sm:$0xf] %v3657
  %3914 = vst [vmem:[%s9 + $0xc] sm:$0xf] %v3658
  %3915 = vst [vmem:[%s9 + $0x10] sm:$0xf] %v3659
  %3916 = vst [vmem:[%s9 + $0x14] sm:$0xf] %v3660
  %3917 = vst [vmem:[%s9 + $0x18] sm:$0xf] %v3661
  %3918 = vst [vmem:[%s9 + $0x1c] sm:$0xf] %v3662
  %3919 = vst [vmem:[%s9 + $0x20] sm:$0xf] %v3663
  %3920 = vst [vmem:[%s9 + $0x24] sm:$0xf] %v3664
  %3921 = vst [vmem:[%s9 + $0x28] sm:$0xf] %v3665
  %3922 = vst [vmem:[%s9 + $0x2c] sm:$0xf] %v3666
  %3923 = vst [vmem:[%s9 + $0x30] sm:$0xf] %v3667
  %3924 = vst [vmem:[%s9 + $0x34] sm:$0xf] %v3668
  %3925 = vst [vmem:[%s9 + $0x38] sm:$0xf] %v3669
  %3926 = vst [vmem:[%s9 + $0x3c] sm:$0xf] %v3670
  %3927 = vst [vmem:[%s9 + $0x40] sm:$0xf] %v3671
  %3928 = vst [vmem:[%s9 + $0x44] sm:$0xf] %v3672
  %3929 = vst [vmem:[%s9 + $0x48] sm:$0xf] %v3673
  %3930 = vst [vmem:[%s9 + $0x4c] sm:$0xf] %v3674
  %3931 = vst [vmem:[%s9 + $0x50] sm:$0xf] %v3675
  %3932 = vst [vmem:[%s9 + $0x54] sm:$0xf] %v3676
  %3933 = vst [vmem:[%s9 + $0x58] sm:$0xf] %v3677
  %3934 = vst [vmem:[%s9 + $0x5c] sm:$0xf] %v3678
  %3935 = vst [vmem:[%s9 + $0x60] sm:$0xf] %v3679
  %3936 = vst [vmem:[%s9 + $0x64] sm:$0xf] %v3680
  %3937 = vst [vmem:[%s9 + $0x68] sm:$0xf] %v3681
  %3938 = vst [vmem:[%s9 + $0x6c] sm:$0xf] %v3682
  %3939 = vst [vmem:[%s9 + $0x70] sm:$0xf] %v3683
  %3940 = vst [vmem:[%s9 + $0x74] sm:$0xf] %v3684
  %3941 = vst [vmem:[%s9 + $0x78] sm:$0xf] %v3685
  %3942 = vst [vmem:[%s9 + $0x7c] sm:$0xf] %v3686
  %3943 = vst [vmem:[%s9 + $0x80] sm:$0xf] %v3687
  %3944 = vst [vmem:[%s9 + $0x84] sm:$0xf] %v3688
  %3945 = vst [vmem:[%s9 + $0x88] sm:$0xf] %v3689
  %3946 = vst [vmem:[%s9 + $0x8c] sm:$0xf] %v3690
  %3947 = vst [vmem:[%s9 + $0x90] sm:$0xf] %v3691
  %3948 = vst [vmem:[%s9 + $0x94] sm:$0xf] %v3692
  %3949 = vst [vmem:[%s9 + $0x98] sm:$0xf] %v3693
  %3950 = vst [vmem:[%s9 + $0x9c] sm:$0xf] %v3694
  %3951 = vst [vmem:[%s9 + $0xa0] sm:$0xf] %v3695
  %3952 = vst [vmem:[%s9 + $0xa4] sm:$0xf] %v3696
  %3953 = vst [vmem:[%s9 + $0xa8] sm:$0xf] %v3697
  %3954 = vst [vmem:[%s9 + $0xac] sm:$0xf] %v3698
  %3955 = vst [vmem:[%s9 + $0xb0] sm:$0xf] %v3699
  %3956 = vst [vmem:[%s9 + $0xb4] sm:$0xf] %v3700
  %3957 = vst [vmem:[%s9 + $0xb8] sm:$0xf] %v3701
  %3958 = vst [vmem:[%s9 + $0xbc] sm:$0xf] %v3702
  %3959 = vst [vmem:[%s9 + $0xc0] sm:$0xf] %v3703
  %3960 = vst [vmem:[%s9 + $0xc4] sm:$0xf] %v3704
  %3961 = vst [vmem:[%s9 + $0xc8] sm:$0xf] %v3705
  %3962 = vst [vmem:[%s9 + $0xcc] sm:$0xf] %v3706
  %3963 = vst [vmem:[%s9 + $0xd0] sm:$0xf] %v3707
  %3964 = vst [vmem:[%s9 + $0xd4] sm:$0xf] %v3708
  %3965 = vst [vmem:[%s9 + $0xd8] sm:$0xf] %v3709
  %3966 = vst [vmem:[%s9 + $0xdc] sm:$0xf] %v3710
  %3967 = vst [vmem:[%s9 + $0xe0] sm:$0xf] %v3711
  %3968 = vst [vmem:[%s9 + $0xe4] sm:$0xf] %v3712
  %3969 = vst [vmem:[%s9 + $0xe8] sm:$0xf] %v3713
  %3970 = vst [vmem:[%s9 + $0xec] sm:$0xf] %v3714
  %3971 = vst [vmem:[%s9 + $0xf0] sm:$0xf] %v3715
  %3972 = vst [vmem:[%s9 + $0xf4] sm:$0xf] %v3716
  %3973 = vst [vmem:[%s9 + $0xf8] sm:$0xf] %v3717
  %3974 = vst [vmem:[%s9 + $0xfc] sm:$0xf] %v3718
  %3975 = vst [vmem:[%s9 + $0x100] sm:$0xf] %v3719
  %3976 = vst [vmem:[%s9 + $0x104] sm:$0xf] %v3720
  %3977 = vst [vmem:[%s9 + $0x108] sm:$0xf] %v3721
  %3978 = vst [vmem:[%s9 + $0x10c] sm:$0xf] %v3722
  %3979 = vst [vmem:[%s9 + $0x110] sm:$0xf] %v3723
  %3980 = vst [vmem:[%s9 + $0x114] sm:$0xf] %v3724
  %3981 = vst [vmem:[%s9 + $0x118] sm:$0xf] %v3725
  %3982 = vst [vmem:[%s9 + $0x11c] sm:$0xf] %v3726
  %3983 = vst [vmem:[%s9 + $0x120] sm:$0xf] %v3727
  %3984 = vst [vmem:[%s9 + $0x124] sm:$0xf] %v3728
  %3985 = vst [vmem:[%s9 + $0x128] sm:$0xf] %v3729
  %3986 = vst [vmem:[%s9 + $0x12c] sm:$0xf] %v3730
  %3987 = vst [vmem:[%s9 + $0x130] sm:$0xf] %v3731
  %3988 = vst [vmem:[%s9 + $0x134] sm:$0xf] %v3732
  %3989 = vst [vmem:[%s9 + $0x138] sm:$0xf] %v3733
  %3990 = vst [vmem:[%s9 + $0x13c] sm:$0xf] %v3734
  %3991 = vst [vmem:[%s9 + $0x140] sm:$0xf] %v3735
  %3992 = vst [vmem:[%s9 + $0x144] sm:$0xf] %v3736
  %3993 = vst [vmem:[%s9 + $0x148] sm:$0xf] %v3737
  %3994 = vst [vmem:[%s9 + $0x14c] sm:$0xf] %v3738
  %3995 = vst [vmem:[%s9 + $0x150] sm:$0xf] %v3739
  %3996 = vst [vmem:[%s9 + $0x154] sm:$0xf] %v3740
  %3997 = vst [vmem:[%s9 + $0x158] sm:$0xf] %v3741
  %3998 = vst [vmem:[%s9 + $0x15c] sm:$0xf] %v3742
  %3999 = vst [vmem:[%s9 + $0x160] sm:$0xf] %v3743
  %4000 = vst [vmem:[%s9 + $0x164] sm:$0xf] %v3744
  %4001 = vst [vmem:[%s9 + $0x168] sm:$0xf] %v3745
  %4002 = vst [vmem:[%s9 + $0x16c] sm:$0xf] %v3746
  %4003 = vst [vmem:[%s9 + $0x170] sm:$0xf] %v3747
  %4004 = vst [vmem:[%s9 + $0x174] sm:$0xf] %v3748
  %4005 = vst [vmem:[%s9 + $0x178] sm:$0xf] %v3749
  %4006 = vst [vmem:[%s9 + $0x17c] sm:$0xf] %v3750
  %4007 = vst [vmem:[%s9 + $0x180] sm:$0xf] %v3751
  %4008 = vst [vmem:[%s9 + $0x184] sm:$0xf] %v3752
  %4009 = vst [vmem:[%s9 + $0x188] sm:$0xf] %v3753
  %4010 = vst [vmem:[%s9 + $0x18c] sm:$0xf] %v3754
  %4011 = vst [vmem:[%s9 + $0x190] sm:$0xf] %v3755
  %4012 = vst [vmem:[%s9 + $0x194] sm:$0xf] %v3756
  %4013 = vst [vmem:[%s9 + $0x198] sm:$0xf] %v3757
  %4014 = vst [vmem:[%s9 + $0x19c] sm:$0xf] %v3758
  %4015 = vst [vmem:[%s9 + $0x1a0] sm:$0xf] %v3759
  %4016 = vst [vmem:[%s9 + $0x1a4] sm:$0xf] %v3760
  %4017 = vst [vmem:[%s9 + $0x1a8] sm:$0xf] %v3761
  %4018 = vst [vmem:[%s9 + $0x1ac] sm:$0xf] %v3762
  %4019 = vst [vmem:[%s9 + $0x1b0] sm:$0xf] %v3763
  %4020 = vst [vmem:[%s9 + $0x1b4] sm:$0xf] %v3764
  %4021 = vst [vmem:[%s9 + $0x1b8] sm:$0xf] %v3765
  %4022 = vst [vmem:[%s9 + $0x1bc] sm:$0xf] %v3766
  %4023 = vst [vmem:[%s9 + $0x1c0] sm:$0xf] %v3767
  %4024 = vst [vmem:[%s9 + $0x1c4] sm:$0xf] %v3768
  %4025 = vst [vmem:[%s9 + $0x1c8] sm:$0xf] %v3769
  %4026 = vst [vmem:[%s9 + $0x1cc] sm:$0xf] %v3770
  %4027 = vst [vmem:[%s9 + $0x1d0] sm:$0xf] %v3771
  %4028 = vst [vmem:[%s9 + $0x1d4] sm:$0xf] %v3772
  %4029 = vst [vmem:[%s9 + $0x1d8] sm:$0xf] %v3773
  %4030 = vst [vmem:[%s9 + $0x1dc] sm:$0xf] %v3774
  %4031 = vst [vmem:[%s9 + $0x1e0] sm:$0xf] %v3775
  %4032 = vst [vmem:[%s9 + $0x1e4] sm:$0xf] %v3776
  %4033 = vst [vmem:[%s9 + $0x1e8] sm:$0xf] %v3777
  %4034 = vst [vmem:[%s9 + $0x1ec] sm:$0xf] %v3778
  %4035 = vst [vmem:[%s9 + $0x1f0] sm:$0xf] %v3779
  %4036 = vst [vmem:[%s9 + $0x1f4] sm:$0xf] %v3780
  %4037 = vst [vmem:[%s9 + $0x1f8] sm:$0xf] %v3781
  %4038 = vst [vmem:[%s9 + $0x1fc] sm:$0xf] %v3782
  // Predicated region
  $region38: #{_mlp_forward_impl.1} parent=0 // pred_check
    _
  $region39: #{_mlp_forward_impl.1} parent=0 // pred_check_branch
    %4040 = sbr.rel (0) target = $region41
  $region40: #{_mlp_forward_impl.1} parent=0 // pred_region
    _
  $region41: #{_mlp_forward_impl.1} parent=0 // pred_fallthru
    _
  // Predicated region
  $region42: #{_mlp_forward_impl.1} parent=0 // pred_check
    _
  $region43: #{_mlp_forward_impl.1} parent=0 // pred_check_branch
    %4042 = sbr.rel (0) target = $region45
  $region44: #{_mlp_forward_impl.1} parent=0 // pred_region
    _
  $region45: #{_mlp_forward_impl.1} parent=0 // pred_fallthru
    _

</llo_original>
